<compile_context>
chip_gen: v7x
topology: tpu7x:2x2x1
jax: 0.10.0
libtpu: 0.0.40
codegen_flags: <defaults>
</compile_context>

<pallas_src>
import jax
import jax.numpy as jnp
from jax.experimental import pallas as pl
from jax.experimental.pallas import tpu as pltpu

K = 5           # Conv1d kernel_size for both conv layers
C1 = 128        # conv1 out channels
C2 = 128        # conv2 out channels
H = 512         # hidden width of each dueling head
KC1_PAD = 128   # conv1 contraction (K*C_in) padded to one lane tile
OUT_PAD = 128   # lane-dense output width (Q-values live at columns 1..A)
BATCH_TILE = 128  # batch rows per grid step once the batch is large


def _make_kernel(l2, num_actions):
    inv_a = 1.0 / float(num_actions)

    def kernel(xc_ref, w1_ref, b1_ref, w2_ref, b2_ref,
               wh1_ref, bh1_ref, wh2_ref, bh2_ref, out_ref):
        nt, l1p, kc1p = xc_ref.shape
        c1 = w1_ref.shape[-1]
        c2 = w2_ref.shape[-1]
        k_taps = w2_ref.shape[0]

        # ---- conv1: one whole-tile matmul over the padded im2col taps (bf16 in, f32 acc) ----
        xc = xc_ref[...].reshape(nt * l1p, kc1p)
        h1 = jnp.dot(xc, w1_ref[...], preferred_element_type=jnp.float32)
        h1 = jnp.maximum(h1 + b1_ref[...], 0.0).reshape(nt, l1p, c1)

        # ---- conv2: accumulated sum of K shifted matmuls (no lane concat / 640-wide reshape) ----
        h2 = None
        for k in range(k_taps):
            seg = h1[:, k:k + l2, :].reshape(nt * l2, c1).astype(w2_ref.dtype)
            part = jnp.dot(seg, w2_ref[k], preferred_element_type=jnp.float32)
            h2 = part if h2 is None else h2 + part
        h2 = jnp.maximum(h2 + b2_ref[...], 0.0).reshape(nt, l2, c2)

        # ---- fused dueling head 1: channel-major flatten folded into the MXU contraction ----
        hh = None
        for l in range(l2):
            part = jnp.dot(h2[:, l, :].astype(wh1_ref.dtype), wh1_ref[l],
                           preferred_element_type=jnp.float32)
            hh = part if hh is None else hh + part
        hh = jnp.maximum(hh + bh1_ref[...], 0.0)          # (NT, 2H) = [val_hidden | adv_hidden]

        # ---- fused dueling head 2: block-diag (val | adv) weight, lane-dense 128-wide output ----
        z = jnp.dot(hh.astype(wh2_ref.dtype), wh2_ref[...],
                    preferred_element_type=jnp.float32) + bh2_ref[...]
        val = z[:, 0:1]
        col = jax.lax.broadcasted_iota(jnp.int32, z.shape, 1)
        adv_mask = jnp.logical_and(col >= 1, col <= num_actions)
        adv_mean = jnp.sum(jnp.where(adv_mask, z, 0.0), axis=1, keepdims=True) * inv_a
        # Columns 1..num_actions hold  adv + val - mean(adv); column 0 / padding columns are
        # NOT valid Q-values — the wrapper slices [:, 1:1+A].
        out_ref[...] = z + (val - adv_mean)

    return kernel


def make_params(key, c_in, L, num_actions, dtype=jnp.float32):
    """Deterministic synthetic params (PyTorch-style uniform fan-in init), torch layouts."""
    L2 = L - 2 * (K - 1)
    F = C2 * L2
    ks = jax.random.split(key, 12)

    def init(k, shape, fan_in):
        bound = 1.0 / (fan_in ** 0.5)
        return jax.random.uniform(k, shape, dtype, -bound, bound)

    return {
        "w1": init(ks[0], (K, c_in, C1), c_in * K),      # conv1 weight (K, Cin, Cout)
        "b1": init(ks[1], (1, C1), c_in * K),
        "w2": init(ks[2], (K, C1, C2), C1 * K),          # conv2 weight
        "b2": init(ks[3], (1, C2), C1 * K),
        "wv1": init(ks[4], (F, H), F),                   # fc_val[0] (in, out)
        "bv1": init(ks[5], (1, H), F),
        "wv2": init(ks[6], (H, 1), H),                   # fc_val[2]
        "bv2": init(ks[7], (1, 1), H),
        "wa1": init(ks[8], (F, H), F),                   # fc_adv[0]
        "ba1": init(ks[9], (1, H), F),
        "wa2": init(ks[10], (H, num_actions), H),        # fc_adv[2]
        "ba2": init(ks[11], (1, num_actions), H),
    }


def prepare_params(params, c_in, L, num_actions):
    """One-time weight prep (re-layout + fusion + bf16 cast). Hoisted out of the per-call path."""
    L1 = L - (K - 1)
    L2 = L1 - (K - 1)
    KC1 = K * c_in
    A = num_actions

    # conv1 packed weight: (K*C_in, C1) zero-padded to a full 128-lane contraction, bf16
    w1_col = jnp.zeros((KC1_PAD, C1), jnp.float32)
    w1_col = w1_col.at[:KC1, :].set(params["w1"].reshape(KC1, C1)).astype(jnp.bfloat16)

    # conv2 weight kept as (K, C1, C2) for the accumulated-matmul conv, bf16
    w2_k = params["w2"].astype(jnp.bfloat16)

    # fused head-1 weight: torch flatten index f = c*L2 + l  ->  (l, c, :); concat (val|adv)
    wv1_r = params["wv1"].reshape(C2, L2, H).transpose(1, 0, 2)     # (L2, C2, H)
    wa1_r = params["wa1"].reshape(C2, L2, H).transpose(1, 0, 2)
    wh1 = jnp.concatenate([wv1_r, wa1_r], axis=2).astype(jnp.bfloat16)   # (L2, C2, 2H)
    bh1 = jnp.concatenate([params["bv1"], params["ba1"]], axis=1)        # (1, 2H) f32

    # fused head-2 weight: block-diagonal (val | adv), lane-dense padded to 128 output columns
    wh2 = jnp.zeros((2 * H, OUT_PAD), jnp.float32)
    wh2 = wh2.at[:H, 0:1].set(params["wv2"]).at[H:, 1:1 + A].set(params["wa2"])
    wh2 = wh2.astype(jnp.bfloat16)
    bh2 = jnp.zeros((1, OUT_PAD), jnp.float32)
    bh2 = bh2.at[:, 0:1].set(params["bv2"]).at[:, 1:1 + A].set(params["ba2"])

    return {"w1": w1_col, "b1": params["b1"], "w2": w2_k, "b2": params["b2"],
            "wh1": wh1, "bh1": bh1, "wh2": wh2, "bh2": bh2}


def dqn_forward(x_ncl, prep, num_actions):
    """x_ncl: (N, C_in, L) float32, PyTorch Conv1d input layout. prep: prepare_params() output."""
    N, c_in, L = x_ncl.shape
    L1 = L - (K - 1)
    L2 = L1 - (K - 1)
    L1_PAD = ((L1 + 7) // 8) * 8
    KC1 = K * c_in
    A = num_actions

    # batch tiling: keep tiny batches tiny, tile big batches at BATCH_TILE rows/grid step
    n8 = max(8, ((N + 7) // 8) * 8)
    if n8 >= BATCH_TILE:
        nt = BATCH_TILE
        n_pad = ((N + nt - 1) // nt) * nt
    else:
        nt = n8
        n_pad = n8
    nb = n_pad // nt

    # ---- per-call work: only the (tiny) conv1 im2col + zero padding ----
    x_nlc = jnp.transpose(x_ncl, (0, 2, 1))                                      # (N, L, C_in)
    taps = jnp.concatenate([x_nlc[:, k:k + L1, :] for k in range(K)], axis=-1)   # (N, L1, K*C_in)
    x_col = jnp.zeros((n_pad, L1_PAD, KC1_PAD), jnp.bfloat16)
    x_col = x_col.at[:N, :L1, :KC1].set(taps.astype(jnp.bfloat16))

    in_specs = [
        pl.BlockSpec((nt, L1_PAD, KC1_PAD), lambda i: (i, 0, 0)),   # activations: tiled over batch
        pl.BlockSpec((KC1_PAD, C1), lambda i: (0, 0)),              # weights: resident (const index)
        pl.BlockSpec((1, C1), lambda i: (0, 0)),
        pl.BlockSpec((K, C1, C2), lambda i: (0, 0, 0)),
        pl.BlockSpec((1, C2), lambda i: (0, 0)),
        pl.BlockSpec((L2, C2, 2 * H), lambda i: (0, 0, 0)),
        pl.BlockSpec((1, 2 * H), lambda i: (0, 0)),
        pl.BlockSpec((2 * H, OUT_PAD), lambda i: (0, 0)),
        pl.BlockSpec((1, OUT_PAD), lambda i: (0, 0)),
    ]
    out_specs = pl.BlockSpec((nt, OUT_PAD), lambda i: (i, 0))

    z = pl.pallas_call(
        _make_kernel(L2, A),
        out_shape=jax.ShapeDtypeStruct((n_pad, OUT_PAD), jnp.float32),
        grid_spec=pltpu.PrefetchScalarGridSpec(
            num_scalar_prefetch=0,
            grid=(nb,),
            in_specs=in_specs,
            out_specs=out_specs,
        ),
        compiler_params=pltpu.CompilerParams(dimension_semantics=("parallel",)),
    )(x_col, prep["w1"], prep["b1"], prep["w2"], prep["b2"],
      prep["wh1"], prep["bh1"], prep["wh2"], prep["bh2"])

    return z[:N, 1:1 + A]


def reference(x_ncl, params):
    """Pure-JAX f32 reference mirroring the PyTorch forward exactly."""
    w1_t = jnp.transpose(params["w1"], (2, 1, 0))        # (O, I, K) torch layout
    h = jax.lax.conv_general_dilated(x_ncl, w1_t, (1,), "VALID",
                                     dimension_numbers=("NCH", "OIH", "NCH"))
    h = jax.nn.relu(h + params["b1"].reshape(1, C1, 1))
    w2_t = jnp.transpose(params["w2"], (2, 1, 0))
    h = jax.lax.conv_general_dilated(h, w2_t, (1,), "VALID",
                                     dimension_numbers=("NCH", "OIH", "NCH"))
    h = jax.nn.relu(h + params["b2"].reshape(1, C2, 1))
    xf = h.reshape(h.shape[0], -1)                       # channel-major flatten == torch .view
    vh = jax.nn.relu(xf @ params["wv1"] + params["bv1"])
    val = vh @ params["wv2"] + params["bv2"]
    ah = jax.nn.relu(xf @ params["wa1"] + params["ba1"])
    adv = ah @ params["wa2"] + params["ba2"]
    return val + adv - adv.mean(axis=1, keepdims=True)


if __name__ == "__main__":
    C_IN, L, NUM_ACTIONS = 4, 16, 6                      # input_size = (4, 16)
    key = jax.random.PRNGKey(0)
    k_x, k_p, k_xb = jax.random.split(key, 3)

    params = make_params(k_p, C_IN, L, NUM_ACTIONS)
    prep = jax.block_until_ready(prepare_params(params, C_IN, L, NUM_ACTIONS))  # one-time prep

    fwd = jax.jit(dqn_forward, static_argnums=(2,))

    # small-batch check (module's nominal tiny input)
    x = jax.random.normal(k_x, (2, C_IN, L), jnp.float32)
    out = jax.block_until_ready(fwd(x, prep, NUM_ACTIONS))
    ref = reference(x, params)
    assert out.shape == (2, NUM_ACTIONS), out.shape
    err = jnp.max(jnp.abs(out - ref))
    # all-bf16 weights + bf16 MXU operands (f32 accumulation) -> relaxed tolerance vs f32 ref
    assert jnp.allclose(out, ref, rtol=3e-2, atol=3e-2), f"small-batch mismatch: max err {err}"

    # batched check: fills MXU rows, amortizes the weight DMA, grid=(2,) -> both TCs on v7x
    xb = jax.random.normal(k_xb, (256, C_IN, L), jnp.float32)
    outb = jax.block_until_ready(fwd(xb, prep, NUM_ACTIONS))
    refb = reference(xb, params)
    assert outb.shape == (256, NUM_ACTIONS), outb.shape
    errb = jnp.max(jnp.abs(outb - refb))
    assert jnp.allclose(outb, refb, rtol=3e-2, atol=3e-2), f"batched mismatch: max err {errb}"

    print("KERNEL_OK")
</pallas_src>

<mosaic_0001>
module attributes {stable_mosaic.version = 11 : i64} {
  func.func @kernel(%arg0: i32, %arg1: memref<8x16x128xbf16, #tpu.memory_space<vmem>>, %arg2: memref<128x128xbf16, #tpu.memory_space<vmem>>, %arg3: memref<1x128xf32, #tpu.memory_space<vmem>>, %arg4: memref<5x128x128xbf16, #tpu.memory_space<vmem>>, %arg5: memref<1x128xf32, #tpu.memory_space<vmem>>, %arg6: memref<8x128x1024xbf16, #tpu.memory_space<vmem>>, %arg7: memref<1x1024xf32, #tpu.memory_space<vmem>>, %arg8: memref<1024x128xbf16, #tpu.memory_space<vmem>>, %arg9: memref<1x128xf32, #tpu.memory_space<vmem>>, %arg10: memref<8x128xf32, #tpu.memory_space<vmem>>) attributes {dimension_semantics = [#tpu.dimension_semantics<parallel>], iteration_bounds = array<i64: 1>, scalar_prefetch = 0 : i64, scratch_operands = 0 : i64, tpu.core_type = #tpu.core_type<tc>, window_params = [{transform_indices = @transform_0, window_bounds = array<i64: 8, 16, 128>}, {pipeline_mode = #tpu.pipeline_mode<synchronous>, transform_indices = @transform_1, window_bounds = array<i64: 128, 128>}, {pipeline_mode = #tpu.pipeline_mode<synchronous>, transform_indices = @transform_2, window_bounds = array<i64: 1, 128>}, {pipeline_mode = #tpu.pipeline_mode<synchronous>, transform_indices = @transform_3, window_bounds = array<i64: 5, 128, 128>}, {pipeline_mode = #tpu.pipeline_mode<synchronous>, transform_indices = @transform_4, window_bounds = array<i64: 1, 128>}, {pipeline_mode = #tpu.pipeline_mode<synchronous>, transform_indices = @transform_5, window_bounds = array<i64: 8, 128, 1024>}, {pipeline_mode = #tpu.pipeline_mode<synchronous>, transform_indices = @transform_6, window_bounds = array<i64: 1, 1024>}, {pipeline_mode = #tpu.pipeline_mode<synchronous>, transform_indices = @transform_7, window_bounds = array<i64: 1024, 128>}, {pipeline_mode = #tpu.pipeline_mode<synchronous>, transform_indices = @transform_8, window_bounds = array<i64: 1, 128>}, {transform_indices = @transform_9, window_bounds = array<i64: 8, 128>}]} {
    %c0 = arith.constant 0 : index
    %c0_0 = arith.constant 0 : index
    %c0_1 = arith.constant 0 : index
    %0 = vector.load %arg1[%c0, %c0_0, %c0_1] : memref<8x16x128xbf16, #tpu.memory_space<vmem>>, vector<8x16x128xbf16>
    %1 = vector.shape_cast %0 : vector<8x16x128xbf16> to vector<128x128xbf16>
    %c0_2 = arith.constant 0 : index
    %c0_3 = arith.constant 0 : index
    %2 = vector.load %arg2[%c0_2, %c0_3] : memref<128x128xbf16, #tpu.memory_space<vmem>>, vector<128x128xbf16>
    %cst = arith.constant dense<0.000000e+00> : vector<128x128xf32>
    %3 = tpu.matmul %1, %2, %cst {dimension_numbers = #tpu.dot_dimension_numbers<[1], [0], [0], [1], [0, 0, 1, 1], [], []>} : vector<128x128xbf16>, vector<128x128xbf16>, vector<128x128xf32> -> vector<128x128xf32>
    %c0_4 = arith.constant 0 : index
    %c0_5 = arith.constant 0 : index
    %4 = vector.load %arg3[%c0_4, %c0_5] : memref<1x128xf32, #tpu.memory_space<vmem>>, vector<1x128xf32>
    %5 = vector.broadcast %4 : vector<1x128xf32> to vector<128x128xf32>
    %6 = arith.addf %3, %5 : vector<128x128xf32>
    %cst_6 = arith.constant 0.000000e+00 : f32
    %7 = vector.broadcast %cst_6 : f32 to vector<128x128xf32>
    %8 = arith.maximumf %6, %7 : vector<128x128xf32>
    %9 = vector.shape_cast %8 : vector<128x128xf32> to vector<8x16x128xf32>
    %10 = vector.extract_strided_slice %9 {offsets = [0, 0, 0], sizes = [8, 8, 128], strides = [1, 1, 1]} : vector<8x16x128xf32> to vector<8x8x128xf32>
    %11 = vector.shape_cast %10 : vector<8x8x128xf32> to vector<64x128xf32>
    %12 = arith.truncf %11 : vector<64x128xf32> to vector<64x128xbf16>
    %c0_7 = arith.constant 0 : index
    %c0_8 = arith.constant 0 : index
    %c0_9 = arith.constant 0 : index
    %13 = vector.load %arg4[%c0_7, %c0_8, %c0_9] : memref<5x128x128xbf16, #tpu.memory_space<vmem>>, vector<1x128x128xbf16>
    %14 = vector.shape_cast %13 : vector<1x128x128xbf16> to vector<128x128xbf16>
    %cst_10 = arith.constant dense<0.000000e+00> : vector<64x128xf32>
    %15 = tpu.matmul %12, %14, %cst_10 {dimension_numbers = #tpu.dot_dimension_numbers<[1], [0], [0], [1], [0, 0, 1, 1], [], []>} : vector<64x128xbf16>, vector<128x128xbf16>, vector<64x128xf32> -> vector<64x128xf32>
    %16 = vector.extract_strided_slice %9 {offsets = [0, 1, 0], sizes = [8, 8, 128], strides = [1, 1, 1]} : vector<8x16x128xf32> to vector<8x8x128xf32>
    %17 = vector.shape_cast %16 : vector<8x8x128xf32> to vector<64x128xf32>
    %18 = arith.truncf %17 : vector<64x128xf32> to vector<64x128xbf16>
    %c1 = arith.constant 1 : index
    %c0_11 = arith.constant 0 : index
    %c0_12 = arith.constant 0 : index
    %19 = vector.load %arg4[%c1, %c0_11, %c0_12] : memref<5x128x128xbf16, #tpu.memory_space<vmem>>, vector<1x128x128xbf16>
    %20 = vector.shape_cast %19 : vector<1x128x128xbf16> to vector<128x128xbf16>
    %cst_13 = arith.constant dense<0.000000e+00> : vector<64x128xf32>
    %21 = tpu.matmul %18, %20, %cst_13 {dimension_numbers = #tpu.dot_dimension_numbers<[1], [0], [0], [1], [0, 0, 1, 1], [], []>} : vector<64x128xbf16>, vector<128x128xbf16>, vector<64x128xf32> -> vector<64x128xf32>
    %22 = arith.addf %15, %21 : vector<64x128xf32>
    %23 = vector.extract_strided_slice %9 {offsets = [0, 2, 0], sizes = [8, 8, 128], strides = [1, 1, 1]} : vector<8x16x128xf32> to vector<8x8x128xf32>
    %24 = vector.shape_cast %23 : vector<8x8x128xf32> to vector<64x128xf32>
    %25 = arith.truncf %24 : vector<64x128xf32> to vector<64x128xbf16>
    %c2 = arith.constant 2 : index
    %c0_14 = arith.constant 0 : index
    %c0_15 = arith.constant 0 : index
    %26 = vector.load %arg4[%c2, %c0_14, %c0_15] : memref<5x128x128xbf16, #tpu.memory_space<vmem>>, vector<1x128x128xbf16>
    %27 = vector.shape_cast %26 : vector<1x128x128xbf16> to vector<128x128xbf16>
    %cst_16 = arith.constant dense<0.000000e+00> : vector<64x128xf32>
    %28 = tpu.matmul %25, %27, %cst_16 {dimension_numbers = #tpu.dot_dimension_numbers<[1], [0], [0], [1], [0, 0, 1, 1], [], []>} : vector<64x128xbf16>, vector<128x128xbf16>, vector<64x128xf32> -> vector<64x128xf32>
    %29 = arith.addf %22, %28 : vector<64x128xf32>
    %30 = vector.extract_strided_slice %9 {offsets = [0, 3, 0], sizes = [8, 8, 128], strides = [1, 1, 1]} : vector<8x16x128xf32> to vector<8x8x128xf32>
    %31 = vector.shape_cast %30 : vector<8x8x128xf32> to vector<64x128xf32>
    %32 = arith.truncf %31 : vector<64x128xf32> to vector<64x128xbf16>
    %c3 = arith.constant 3 : index
    %c0_17 = arith.constant 0 : index
    %c0_18 = arith.constant 0 : index
    %33 = vector.load %arg4[%c3, %c0_17, %c0_18] : memref<5x128x128xbf16, #tpu.memory_space<vmem>>, vector<1x128x128xbf16>
    %34 = vector.shape_cast %33 : vector<1x128x128xbf16> to vector<128x128xbf16>
    %cst_19 = arith.constant dense<0.000000e+00> : vector<64x128xf32>
    %35 = tpu.matmul %32, %34, %cst_19 {dimension_numbers = #tpu.dot_dimension_numbers<[1], [0], [0], [1], [0, 0, 1, 1], [], []>} : vector<64x128xbf16>, vector<128x128xbf16>, vector<64x128xf32> -> vector<64x128xf32>
    %36 = arith.addf %29, %35 : vector<64x128xf32>
    %37 = vector.extract_strided_slice %9 {offsets = [0, 4, 0], sizes = [8, 8, 128], strides = [1, 1, 1]} : vector<8x16x128xf32> to vector<8x8x128xf32>
    %38 = vector.shape_cast %37 : vector<8x8x128xf32> to vector<64x128xf32>
    %39 = arith.truncf %38 : vector<64x128xf32> to vector<64x128xbf16>
    %c4 = arith.constant 4 : index
    %c0_20 = arith.constant 0 : index
    %c0_21 = arith.constant 0 : index
    %40 = vector.load %arg4[%c4, %c0_20, %c0_21] : memref<5x128x128xbf16, #tpu.memory_space<vmem>>, vector<1x128x128xbf16>
    %41 = vector.shape_cast %40 : vector<1x128x128xbf16> to vector<128x128xbf16>
    %cst_22 = arith.constant dense<0.000000e+00> : vector<64x128xf32>
    %42 = tpu.matmul %39, %41, %cst_22 {dimension_numbers = #tpu.dot_dimension_numbers<[1], [0], [0], [1], [0, 0, 1, 1], [], []>} : vector<64x128xbf16>, vector<128x128xbf16>, vector<64x128xf32> -> vector<64x128xf32>
    %43 = arith.addf %36, %42 : vector<64x128xf32>
    %c0_23 = arith.constant 0 : index
    %c0_24 = arith.constant 0 : index
    %44 = vector.load %arg5[%c0_23, %c0_24] : memref<1x128xf32, #tpu.memory_space<vmem>>, vector<1x128xf32>
    %45 = vector.broadcast %44 : vector<1x128xf32> to vector<64x128xf32>
    %46 = arith.addf %43, %45 : vector<64x128xf32>
    %cst_25 = arith.constant 0.000000e+00 : f32
    %47 = vector.broadcast %cst_25 : f32 to vector<64x128xf32>
    %48 = arith.maximumf %46, %47 : vector<64x128xf32>
    %49 = vector.shape_cast %48 : vector<64x128xf32> to vector<8x8x128xf32>
    %50 = vector.extract_strided_slice %49 {offsets = [0, 0, 0], sizes = [8, 1, 128], strides = [1, 1, 1]} : vector<8x8x128xf32> to vector<8x1x128xf32>
    %51 = vector.shape_cast %50 : vector<8x1x128xf32> to vector<8x128xf32>
    %52 = arith.truncf %51 : vector<8x128xf32> to vector<8x128xbf16>
    %c0_26 = arith.constant 0 : index
    %c0_27 = arith.constant 0 : index
    %c0_28 = arith.constant 0 : index
    %53 = vector.load %arg6[%c0_26, %c0_27, %c0_28] : memref<8x128x1024xbf16, #tpu.memory_space<vmem>>, vector<1x128x1024xbf16>
    %54 = vector.shape_cast %53 : vector<1x128x1024xbf16> to vector<128x1024xbf16>
    %cst_29 = arith.constant dense<0.000000e+00> : vector<8x1024xf32>
    %55 = tpu.matmul %52, %54, %cst_29 {dimension_numbers = #tpu.dot_dimension_numbers<[1], [0], [0], [1], [0, 0, 1, 1], [], []>} : vector<8x128xbf16>, vector<128x1024xbf16>, vector<8x1024xf32> -> vector<8x1024xf32>
    %56 = vector.extract_strided_slice %49 {offsets = [0, 1, 0], sizes = [8, 1, 128], strides = [1, 1, 1]} : vector<8x8x128xf32> to vector<8x1x128xf32>
    %57 = vector.shape_cast %56 : vector<8x1x128xf32> to vector<8x128xf32>
    %58 = arith.truncf %57 : vector<8x128xf32> to vector<8x128xbf16>
    %c1_30 = arith.constant 1 : index
    %c0_31 = arith.constant 0 : index
    %c0_32 = arith.constant 0 : index
    %59 = vector.load %arg6[%c1_30, %c0_31, %c0_32] : memref<8x128x1024xbf16, #tpu.memory_space<vmem>>, vector<1x128x1024xbf16>
    %60 = vector.shape_cast %59 : vector<1x128x1024xbf16> to vector<128x1024xbf16>
    %cst_33 = arith.constant dense<0.000000e+00> : vector<8x1024xf32>
    %61 = tpu.matmul %58, %60, %cst_33 {dimension_numbers = #tpu.dot_dimension_numbers<[1], [0], [0], [1], [0, 0, 1, 1], [], []>} : vector<8x128xbf16>, vector<128x1024xbf16>, vector<8x1024xf32> -> vector<8x1024xf32>
    %62 = arith.addf %55, %61 : vector<8x1024xf32>
    %63 = vector.extract_strided_slice %49 {offsets = [0, 2, 0], sizes = [8, 1, 128], strides = [1, 1, 1]} : vector<8x8x128xf32> to vector<8x1x128xf32>
    %64 = vector.shape_cast %63 : vector<8x1x128xf32> to vector<8x128xf32>
    %65 = arith.truncf %64 : vector<8x128xf32> to vector<8x128xbf16>
    %c2_34 = arith.constant 2 : index
    %c0_35 = arith.constant 0 : index
    %c0_36 = arith.constant 0 : index
    %66 = vector.load %arg6[%c2_34, %c0_35, %c0_36] : memref<8x128x1024xbf16, #tpu.memory_space<vmem>>, vector<1x128x1024xbf16>
    %67 = vector.shape_cast %66 : vector<1x128x1024xbf16> to vector<128x1024xbf16>
    %cst_37 = arith.constant dense<0.000000e+00> : vector<8x1024xf32>
    %68 = tpu.matmul %65, %67, %cst_37 {dimension_numbers = #tpu.dot_dimension_numbers<[1], [0], [0], [1], [0, 0, 1, 1], [], []>} : vector<8x128xbf16>, vector<128x1024xbf16>, vector<8x1024xf32> -> vector<8x1024xf32>
    %69 = arith.addf %62, %68 : vector<8x1024xf32>
    %70 = vector.extract_strided_slice %49 {offsets = [0, 3, 0], sizes = [8, 1, 128], strides = [1, 1, 1]} : vector<8x8x128xf32> to vector<8x1x128xf32>
    %71 = vector.shape_cast %70 : vector<8x1x128xf32> to vector<8x128xf32>
    %72 = arith.truncf %71 : vector<8x128xf32> to vector<8x128xbf16>
    %c3_38 = arith.constant 3 : index
    %c0_39 = arith.constant 0 : index
    %c0_40 = arith.constant 0 : index
    %73 = vector.load %arg6[%c3_38, %c0_39, %c0_40] : memref<8x128x1024xbf16, #tpu.memory_space<vmem>>, vector<1x128x1024xbf16>
    %74 = vector.shape_cast %73 : vector<1x128x1024xbf16> to vector<128x1024xbf16>
    %cst_41 = arith.constant dense<0.000000e+00> : vector<8x1024xf32>
    %75 = tpu.matmul %72, %74, %cst_41 {dimension_numbers = #tpu.dot_dimension_numbers<[1], [0], [0], [1], [0, 0, 1, 1], [], []>} : vector<8x128xbf16>, vector<128x1024xbf16>, vector<8x1024xf32> -> vector<8x1024xf32>
    %76 = arith.addf %69, %75 : vector<8x1024xf32>
    %77 = vector.extract_strided_slice %49 {offsets = [0, 4, 0], sizes = [8, 1, 128], strides = [1, 1, 1]} : vector<8x8x128xf32> to vector<8x1x128xf32>
    %78 = vector.shape_cast %77 : vector<8x1x128xf32> to vector<8x128xf32>
    %79 = arith.truncf %78 : vector<8x128xf32> to vector<8x128xbf16>
    %c4_42 = arith.constant 4 : index
    %c0_43 = arith.constant 0 : index
    %c0_44 = arith.constant 0 : index
    %80 = vector.load %arg6[%c4_42, %c0_43, %c0_44] : memref<8x128x1024xbf16, #tpu.memory_space<vmem>>, vector<1x128x1024xbf16>
    %81 = vector.shape_cast %80 : vector<1x128x1024xbf16> to vector<128x1024xbf16>
    %cst_45 = arith.constant dense<0.000000e+00> : vector<8x1024xf32>
    %82 = tpu.matmul %79, %81, %cst_45 {dimension_numbers = #tpu.dot_dimension_numbers<[1], [0], [0], [1], [0, 0, 1, 1], [], []>} : vector<8x128xbf16>, vector<128x1024xbf16>, vector<8x1024xf32> -> vector<8x1024xf32>
    %83 = arith.addf %76, %82 : vector<8x1024xf32>
    %84 = vector.extract_strided_slice %49 {offsets = [0, 5, 0], sizes = [8, 1, 128], strides = [1, 1, 1]} : vector<8x8x128xf32> to vector<8x1x128xf32>
    %85 = vector.shape_cast %84 : vector<8x1x128xf32> to vector<8x128xf32>
    %86 = arith.truncf %85 : vector<8x128xf32> to vector<8x128xbf16>
    %c5 = arith.constant 5 : index
    %c0_46 = arith.constant 0 : index
    %c0_47 = arith.constant 0 : index
    %87 = vector.load %arg6[%c5, %c0_46, %c0_47] : memref<8x128x1024xbf16, #tpu.memory_space<vmem>>, vector<1x128x1024xbf16>
    %88 = vector.shape_cast %87 : vector<1x128x1024xbf16> to vector<128x1024xbf16>
    %cst_48 = arith.constant dense<0.000000e+00> : vector<8x1024xf32>
    %89 = tpu.matmul %86, %88, %cst_48 {dimension_numbers = #tpu.dot_dimension_numbers<[1], [0], [0], [1], [0, 0, 1, 1], [], []>} : vector<8x128xbf16>, vector<128x1024xbf16>, vector<8x1024xf32> -> vector<8x1024xf32>
    %90 = arith.addf %83, %89 : vector<8x1024xf32>
    %91 = vector.extract_strided_slice %49 {offsets = [0, 6, 0], sizes = [8, 1, 128], strides = [1, 1, 1]} : vector<8x8x128xf32> to vector<8x1x128xf32>
    %92 = vector.shape_cast %91 : vector<8x1x128xf32> to vector<8x128xf32>
    %93 = arith.truncf %92 : vector<8x128xf32> to vector<8x128xbf16>
    %c6 = arith.constant 6 : index
    %c0_49 = arith.constant 0 : index
    %c0_50 = arith.constant 0 : index
    %94 = vector.load %arg6[%c6, %c0_49, %c0_50] : memref<8x128x1024xbf16, #tpu.memory_space<vmem>>, vector<1x128x1024xbf16>
    %95 = vector.shape_cast %94 : vector<1x128x1024xbf16> to vector<128x1024xbf16>
    %cst_51 = arith.constant dense<0.000000e+00> : vector<8x1024xf32>
    %96 = tpu.matmul %93, %95, %cst_51 {dimension_numbers = #tpu.dot_dimension_numbers<[1], [0], [0], [1], [0, 0, 1, 1], [], []>} : vector<8x128xbf16>, vector<128x1024xbf16>, vector<8x1024xf32> -> vector<8x1024xf32>
    %97 = arith.addf %90, %96 : vector<8x1024xf32>
    %98 = vector.extract_strided_slice %49 {offsets = [0, 7, 0], sizes = [8, 1, 128], strides = [1, 1, 1]} : vector<8x8x128xf32> to vector<8x1x128xf32>
    %99 = vector.shape_cast %98 : vector<8x1x128xf32> to vector<8x128xf32>
    %100 = arith.truncf %99 : vector<8x128xf32> to vector<8x128xbf16>
    %c7 = arith.constant 7 : index
    %c0_52 = arith.constant 0 : index
    %c0_53 = arith.constant 0 : index
    %101 = vector.load %arg6[%c7, %c0_52, %c0_53] : memref<8x128x1024xbf16, #tpu.memory_space<vmem>>, vector<1x128x1024xbf16>
    %102 = vector.shape_cast %101 : vector<1x128x1024xbf16> to vector<128x1024xbf16>
    %cst_54 = arith.constant dense<0.000000e+00> : vector<8x1024xf32>
    %103 = tpu.matmul %100, %102, %cst_54 {dimension_numbers = #tpu.dot_dimension_numbers<[1], [0], [0], [1], [0, 0, 1, 1], [], []>} : vector<8x128xbf16>, vector<128x1024xbf16>, vector<8x1024xf32> -> vector<8x1024xf32>
    %104 = arith.addf %97, %103 : vector<8x1024xf32>
    %c0_55 = arith.constant 0 : index
    %c0_56 = arith.constant 0 : index
    %105 = vector.load %arg7[%c0_55, %c0_56] : memref<1x1024xf32, #tpu.memory_space<vmem>>, vector<1x1024xf32>
    %106 = vector.broadcast %105 : vector<1x1024xf32> to vector<8x1024xf32>
    %107 = arith.addf %104, %106 : vector<8x1024xf32>
    %cst_57 = arith.constant 0.000000e+00 : f32
    %108 = vector.broadcast %cst_57 : f32 to vector<8x1024xf32>
    %109 = arith.maximumf %107, %108 : vector<8x1024xf32>
    %110 = arith.truncf %109 : vector<8x1024xf32> to vector<8x1024xbf16>
    %c0_58 = arith.constant 0 : index
    %c0_59 = arith.constant 0 : index
    %111 = vector.load %arg8[%c0_58, %c0_59] : memref<1024x128xbf16, #tpu.memory_space<vmem>>, vector<1024x128xbf16>
    %cst_60 = arith.constant dense<0.000000e+00> : vector<8x128xf32>
    %112 = tpu.matmul %110, %111, %cst_60 {dimension_numbers = #tpu.dot_dimension_numbers<[1], [0], [0], [1], [0, 0, 1, 1], [], []>} : vector<8x1024xbf16>, vector<1024x128xbf16>, vector<8x128xf32> -> vector<8x128xf32>
    %c0_61 = arith.constant 0 : index
    %c0_62 = arith.constant 0 : index
    %113 = vector.load %arg9[%c0_61, %c0_62] : memref<1x128xf32, #tpu.memory_space<vmem>>, vector<1x128xf32>
    %114 = vector.broadcast %113 : vector<1x128xf32> to vector<8x128xf32>
    %115 = arith.addf %112, %114 : vector<8x128xf32>
    %116 = vector.extract_strided_slice %115 {offsets = [0, 0], sizes = [8, 1], strides = [1, 1]} : vector<8x128xf32> to vector<8x1xf32>
    %117 = tpu.iota {dimensions = array<i32: 1>} : vector<8x128xi32>
    %c1_i32 = arith.constant 1 : i32
    %118 = vector.broadcast %c1_i32 : i32 to vector<8x128xi32>
    %119 = arith.cmpi sge, %117, %118 : vector<8x128xi32>
    %c6_i32 = arith.constant 6 : i32
    %120 = vector.broadcast %c6_i32 : i32 to vector<8x128xi32>
    %121 = arith.cmpi sle, %117, %120 : vector<8x128xi32>
    %122 = arith.andi %119, %121 : vector<8x128xi1>
    %cst_63 = arith.constant 0.000000e+00 : f32
    %123 = vector.broadcast %cst_63 : f32 to vector<8x128xf32>
    %124 = arith.select %122, %115, %123 : vector<8x128xi1>, vector<8x128xf32>
    %cst_64 = arith.constant dense<0.000000e+00> : vector<8xf32>
    %125 = vector.multi_reduction <add>, %124, %cst_64 [1] : vector<8x128xf32> to vector<8xf32>
    %126 = vector.shape_cast %125 : vector<8xf32> to vector<8x1xf32>
    %cst_65 = arith.constant 0.166666672 : f32
    %127 = vector.broadcast %cst_65 : f32 to vector<8x1xf32>
    %128 = arith.mulf %126, %127 : vector<8x1xf32>
    %129 = arith.subf %116, %128 : vector<8x1xf32>
    %130 = vector.broadcast %129 : vector<8x1xf32> to vector<8x128xf32>
    %131 = arith.addf %115, %130 : vector<8x128xf32>
    %c0_66 = arith.constant 0 : index
    %c0_67 = arith.constant 0 : index
    %132 = vector.load %arg10[%c0_66, %c0_67] : memref<8x128xf32, #tpu.memory_space<vmem>>, vector<8x128xf32>
    tpu.vector_store %arg10[%c0_66, %c0_67], %131 {strides = array<i32>} : memref<8x128xf32, #tpu.memory_space<vmem>>, vector<8x128xf32>,
    return
  }
  func.func @transform_0(%arg0: i32) -> (i32, i32, i32) {
    %c0_i32 = arith.constant 0 : i32
    %c0_i32_0 = arith.constant 0 : i32
    %c0_i32_1 = arith.constant 0 : i32
    return %arg0, %c0_i32, %c0_i32_0 : i32, i32, i32
  }
  func.func @transform_1(%arg0: i32) -> (i32, i32) {
    %c0_i32 = arith.constant 0 : i32
    %c0_i32_0 = arith.constant 0 : i32
    %c0_i32_1 = arith.constant 0 : i32
    return %c0_i32, %c0_i32_0 : i32, i32
  }
  func.func @transform_2(%arg0: i32) -> (i32, i32) {
    %c0_i32 = arith.constant 0 : i32
    %c0_i32_0 = arith.constant 0 : i32
    %c0_i32_1 = arith.constant 0 : i32
    return %c0_i32, %c0_i32_0 : i32, i32
  }
  func.func @transform_3(%arg0: i32) -> (i32, i32, i32) {
    %c0_i32 = arith.constant 0 : i32
    %c0_i32_0 = arith.constant 0 : i32
    %c0_i32_1 = arith.constant 0 : i32
    %c0_i32_2 = arith.constant 0 : i32
    return %c0_i32, %c0_i32_0, %c0_i32_1 : i32, i32, i32
  }
  func.func @transform_4(%arg0: i32) -> (i32, i32) {
    %c0_i32 = arith.constant 0 : i32
    %c0_i32_0 = arith.constant 0 : i32
    %c0_i32_1 = arith.constant 0 : i32
    return %c0_i32, %c0_i32_0 : i32, i32
  }
  func.func @transform_5(%arg0: i32) -> (i32, i32, i32) {
    %c0_i32 = arith.constant 0 : i32
    %c0_i32_0 = arith.constant 0 : i32
    %c0_i32_1 = arith.constant 0 : i32
    %c0_i32_2 = arith.constant 0 : i32
    return %c0_i32, %c0_i32_0, %c0_i32_1 : i32, i32, i32
  }
  func.func @transform_6(%arg0: i32) -> (i32, i32) {
    %c0_i32 = arith.constant 0 : i32
    %c0_i32_0 = arith.constant 0 : i32
    %c0_i32_1 = arith.constant 0 : i32
    return %c0_i32, %c0_i32_0 : i32, i32
  }
  func.func @transform_7(%arg0: i32) -> (i32, i32) {
    %c0_i32 = arith.constant 0 : i32
    %c0_i32_0 = arith.constant 0 : i32
    %c0_i32_1 = arith.constant 0 : i32
    return %c0_i32, %c0_i32_0 : i32, i32
  }
  func.func @transform_8(%arg0: i32) -> (i32, i32) {
    %c0_i32 = arith.constant 0 : i32
    %c0_i32_0 = arith.constant 0 : i32
    %c0_i32_1 = arith.constant 0 : i32
    return %c0_i32, %c0_i32_0 : i32, i32
  }
  func.func @transform_9(%arg0: i32) -> (i32, i32) {
    %c0_i32 = arith.constant 0 : i32
    %c0_i32_0 = arith.constant 0 : i32
    return %arg0, %c0_i32 : i32, i32
  }
}

</mosaic_0001>

<llo_original>
// kernel: dqn_forward.1
$region0: #{dqn_forward.1}
  #allocation0 [shape = 'u32[]', space=smem, size = 0x4, offset = 0x4, fixed_abs, tag = 'smem constant byte address 0x4 - core index']
  #allocation1 [shape = 'u32[144,128]{1,0:T(1,128)}', space=vmem, size = 0x12000, scoped, tag = 'internal scratch']
  %s0 = inlined_call_operand.vmem [shape: bf16[8,16,128], index: 0, kind: input, shape index: {}]
  %s1 = inlined_call_operand.hbm [shape: bf16[128,128], index: 1, kind: input, shape index: {}]
  %s2 = inlined_call_operand.hbm [shape: f32[1,128], index: 2, kind: input, shape index: {}]
  %s3 = inlined_call_operand.hbm [shape: bf16[5,128,128], index: 3, kind: input, shape index: {}]
  %s4 = inlined_call_operand.hbm [shape: f32[1,128], index: 4, kind: input, shape index: {}]
  %s5 = inlined_call_operand.hbm [shape: bf16[8,128,1024], index: 5, kind: input, shape index: {}]
  %s6 = inlined_call_operand.hbm [shape: f32[1,1024], index: 6, kind: input, shape index: {}]
  %s7 = inlined_call_operand.hbm [shape: bf16[1024,128], index: 7, kind: input, shape index: {}]
  %s8 = inlined_call_operand.hbm [shape: f32[1,128], index: 8, kind: input, shape index: {}]
  %s9 = inlined_call_operand.vmem [shape: f32[8,128], index: 9, kind: output, shape index: {}]
  %s10 = sld [smem:[#allocation0]]
  $region78: #{dqn_forward.1} parent=0
    _
  %s12 = ssub.s32 1, %s10
  %s13 = scalar_select 0, %s12, %s10
  $region1: #{dqn_forward.1} parent=0
    #allocation2 [shape = 'u8[32768]{0}', space=vmem, size = 0x8000, scoped, tag = 'input window, operand 1, single buffered']
    #allocation3 [shape = 's32[1]{0}', space=sflag, size = 0x4, scoped, tag = 'scoped memory for dqn_forward.1']
    #allocation4 [shape = 'u8[512]{0}', space=vmem, size = 0x400, scoped, tag = 'input window, operand 2, single buffered']
    #allocation5 [shape = 's32[1]{0}', space=sflag, size = 0x4, scoped, tag = 'scoped memory for dqn_forward.1']
    #allocation6 [shape = 'u8[163840]{0}', space=vmem, size = 0x28000, scoped, tag = 'input window, operand 3, single buffered']
    #allocation7 [shape = 'u8[512]{0}', space=vmem, size = 0x400, scoped, tag = 'input window, operand 4, single buffered']
    #allocation8 [shape = 's32[1]{0}', space=sflag, size = 0x4, scoped, tag = 'scoped memory for dqn_forward.1']
    #allocation9 [shape = 'u8[2097152]{0}', space=vmem, size = 0x200000, scoped, tag = 'input window, operand 5, single buffered']
    #allocation10 [shape = 'u8[4096]{0}', space=vmem, size = 0x1000, scoped, tag = 'input window, operand 6, single buffered']
    #allocation11 [shape = 's32[1]{0}', space=sflag, size = 0x4, scoped, tag = 'scoped memory for dqn_forward.1']
    #allocation12 [shape = 'u8[262144]{0}', space=vmem, size = 0x40000, scoped, tag = 'input window, operand 7, single buffered']
    #allocation13 [shape = 'u8[512]{0}', space=vmem, size = 0x400, scoped, tag = 'input window, operand 8, single buffered']
    #allocation14 [shape = 's32[1]{0}', space=sflag, size = 0x4, scoped, tag = 'scoped memory for dqn_forward.1']
    %14 = vsyncpa [#allocation3], 0
    %15 = vsyncpa [#allocation5], 0
    %16 = vsyncpa [#allocation8], 0
    %17 = vsyncpa [#allocation11], 0
    %18 = vsyncpa [#allocation14], 0
    // Predicated region
    $region2: #{dqn_forward.1} parent=1 // pred_check
      _
    $region3: #{dqn_forward.1} parent=1 // pred_check_branch
      %20 = sbr.rel (0) target = $region5
    $region4: #{dqn_forward.1} parent=1 // pred_region
      _
    $region5: #{dqn_forward.1} parent=1 // pred_fallthru
      _
    // Predicated region
    $region6: #{dqn_forward.1} parent=1 // pred_check
      _
    $region7: #{dqn_forward.1} parent=1 // pred_check_branch
      %22 = sbr.rel (0) target = $region9
    $region8: #{dqn_forward.1} parent=1 // pred_region
      %s24 = ssub.s32 1024, 1024
      %25 = vsyncadd [#allocation3], %s24
      %s26 = sshll.u32 [#allocation2], 4
      %s27 = int_to_ptr.vmem [resolvable:$true] %s26
      %32 = dma.hbm_to_vmem [thread:$0]  %s1, 1024, %s27, [#allocation3], 64, 64, 4
    $region9: #{dqn_forward.1} parent=1 // pred_fallthru
      _
    // Predicated region
    $region10: #{dqn_forward.1} parent=1 // pred_check
      _
    $region11: #{dqn_forward.1} parent=1 // pred_check_branch
      %34 = sbr.rel (0) target = $region13
    $region12: #{dqn_forward.1} parent=1 // pred_region
      %s36 = ssub.s32 16, 16
      %37 = vsyncadd [#allocation5], %s36
      %s39 = sshll.u32 [#allocation4], 4
      %s40 = int_to_ptr.vmem [resolvable:$true] %s39
      %42 = dma.hbm_to_vmem [thread:$0]  %s2, 16, %s40, [#allocation5]
    $region13: #{dqn_forward.1} parent=1 // pred_fallthru
      _
    // Predicated region
    $region14: #{dqn_forward.1} parent=1 // pred_check
      _
    $region15: #{dqn_forward.1} parent=1 // pred_check_branch
      %44 = sbr.rel (0) target = $region17
    $region16: #{dqn_forward.1} parent=1 // pred_region
      %s46 = ssub.s32 5120, 5120
      %47 = vsyncadd [#allocation5], %s46
      %s48 = sshll.u32 [#allocation6], 4
      %s49 = int_to_ptr.vmem [resolvable:$true] %s48
      %54 = dma.hbm_to_vmem [thread:$0]  %s3, 5120, %s49, [#allocation5], 64, 64, 4
    $region17: #{dqn_forward.1} parent=1 // pred_fallthru
      _
    // Predicated region
    $region18: #{dqn_forward.1} parent=1 // pred_check
      _
    $region19: #{dqn_forward.1} parent=1 // pred_check_branch
      %56 = sbr.rel (0) target = $region21
    $region20: #{dqn_forward.1} parent=1 // pred_region
      %s58 = ssub.s32 16, 16
      %59 = vsyncadd [#allocation8], %s58
      %s61 = sshll.u32 [#allocation7], 4
      %s62 = int_to_ptr.vmem [resolvable:$true] %s61
      %64 = dma.hbm_to_vmem [thread:$0]  %s4, 16, %s62, [#allocation8]
    $region21: #{dqn_forward.1} parent=1 // pred_fallthru
      _
    // Predicated region
    $region22: #{dqn_forward.1} parent=1 // pred_check
      _
    $region23: #{dqn_forward.1} parent=1 // pred_check_branch
      %66 = sbr.rel (0) target = $region25
    $region24: #{dqn_forward.1} parent=1 // pred_region
      %s68 = ssub.s32 65536, 65536
      %69 = vsyncadd [#allocation8], %s68
      %s70 = sshll.u32 [#allocation9], 4
      %s71 = int_to_ptr.vmem [resolvable:$true] %s70
      %76 = dma.hbm_to_vmem [thread:$0]  %s5, 65536, %s71, [#allocation8], 512, 512, 32
    $region25: #{dqn_forward.1} parent=1 // pred_fallthru
      _
    // Predicated region
    $region26: #{dqn_forward.1} parent=1 // pred_check
      _
    $region27: #{dqn_forward.1} parent=1 // pred_check_branch
      %78 = sbr.rel (0) target = $region29
    $region28: #{dqn_forward.1} parent=1 // pred_region
      %s80 = ssub.s32 128, 128
      %81 = vsyncadd [#allocation11], %s80
      %s83 = sshll.u32 [#allocation10], 4
      %s84 = int_to_ptr.vmem [resolvable:$true] %s83
      %86 = dma.hbm_to_vmem [thread:$0]  %s6, 128, %s84, [#allocation11]
    $region29: #{dqn_forward.1} parent=1 // pred_fallthru
      _
    // Predicated region
    $region30: #{dqn_forward.1} parent=1 // pred_check
      _
    $region31: #{dqn_forward.1} parent=1 // pred_check_branch
      %88 = sbr.rel (0) target = $region33
    $region32: #{dqn_forward.1} parent=1 // pred_region
      %s90 = ssub.s32 8192, 8192
      %91 = vsyncadd [#allocation11], %s90
      %s92 = sshll.u32 [#allocation12], 4
      %s93 = int_to_ptr.vmem [resolvable:$true] %s92
      %98 = dma.hbm_to_vmem [thread:$0]  %s7, 8192, %s93, [#allocation11], 64, 64, 4
    $region33: #{dqn_forward.1} parent=1 // pred_fallthru
      _
    // Predicated region
    $region34: #{dqn_forward.1} parent=1 // pred_check
      _
    $region35: #{dqn_forward.1} parent=1 // pred_check_branch
      %100 = sbr.rel (0) target = $region37
    $region36: #{dqn_forward.1} parent=1 // pred_region
      %s102 = ssub.s32 16, 16
      %103 = vsyncadd [#allocation14], %s102
      %s105 = sshll.u32 [#allocation13], 4
      %s106 = int_to_ptr.vmem [resolvable:$true] %s105
      %108 = dma.hbm_to_vmem [thread:$0]  %s8, 16, %s106, [#allocation14]
    $region37: #{dqn_forward.1} parent=1 // pred_fallthru
      _
    // Predicated region
    $region38: #{dqn_forward.1} parent=1 // pred_check
      _
    $region39: #{dqn_forward.1} parent=1 // pred_check_branch
      %110 = sbr.rel (0) target = $region41
    $region40: #{dqn_forward.1} parent=1 // pred_region
      %111 = dma.done [#allocation3], 1024
    $region41: #{dqn_forward.1} parent=1 // pred_fallthru
      _
    // Predicated region
    $region42: #{dqn_forward.1} parent=1 // pred_check
      _
    $region43: #{dqn_forward.1} parent=1 // pred_check_branch
      %113 = sbr.rel (0) target = $region45
    $region44: #{dqn_forward.1} parent=1 // pred_region
      %114 = dma.done [#allocation5], 16
    $region45: #{dqn_forward.1} parent=1 // pred_fallthru
      _
    // Predicated region
    $region46: #{dqn_forward.1} parent=1 // pred_check
      _
    $region47: #{dqn_forward.1} parent=1 // pred_check_branch
      %116 = sbr.rel (0) target = $region49
    $region48: #{dqn_forward.1} parent=1 // pred_region
      %117 = dma.done [#allocation5], 5120
    $region49: #{dqn_forward.1} parent=1 // pred_fallthru
      _
    // Predicated region
    $region50: #{dqn_forward.1} parent=1 // pred_check
      _
    $region51: #{dqn_forward.1} parent=1 // pred_check_branch
      %119 = sbr.rel (0) target = $region53
    $region52: #{dqn_forward.1} parent=1 // pred_region
      %120 = dma.done [#allocation8], 16
    $region53: #{dqn_forward.1} parent=1 // pred_fallthru
      _
    // Predicated region
    $region54: #{dqn_forward.1} parent=1 // pred_check
      _
    $region55: #{dqn_forward.1} parent=1 // pred_check_branch
      %122 = sbr.rel (0) target = $region57
    $region56: #{dqn_forward.1} parent=1 // pred_region
      %123 = dma.done [#allocation8], 65536
    $region57: #{dqn_forward.1} parent=1 // pred_fallthru
      _
    // Predicated region
    $region58: #{dqn_forward.1} parent=1 // pred_check
      _
    $region59: #{dqn_forward.1} parent=1 // pred_check_branch
      %125 = sbr.rel (0) target = $region61
    $region60: #{dqn_forward.1} parent=1 // pred_region
      %126 = dma.done [#allocation11], 128
    $region61: #{dqn_forward.1} parent=1 // pred_fallthru
      _
    // Predicated region
    $region62: #{dqn_forward.1} parent=1 // pred_check
      _
    $region63: #{dqn_forward.1} parent=1 // pred_check_branch
      %128 = sbr.rel (0) target = $region65
    $region64: #{dqn_forward.1} parent=1 // pred_region
      %129 = dma.done [#allocation11], 8192
    $region65: #{dqn_forward.1} parent=1 // pred_fallthru
      _
    // Predicated region
    $region66: #{dqn_forward.1} parent=1 // pred_check
      _
    $region67: #{dqn_forward.1} parent=1 // pred_check_branch
      %131 = sbr.rel (0) target = $region69
    $region68: #{dqn_forward.1} parent=1 // pred_region
      %132 = dma.done [#allocation14], 16
    $region69: #{dqn_forward.1} parent=1 // pred_fallthru
      _
    %v134 = vld [vmem:[%s0] sm:$0xf]
    %v135 = vld [vmem:[%s0 + $0x4] sm:$0xf]
    %v136 = vld [vmem:[%s0 + $0x8] sm:$0xf]
    %v137 = vld [vmem:[%s0 + $0xc] sm:$0xf]
    %v138 = vld [vmem:[%s0 + $0x10] sm:$0xf]
    %v139 = vld [vmem:[%s0 + $0x14] sm:$0xf]
    %v140 = vld [vmem:[%s0 + $0x18] sm:$0xf]
    %v141 = vld [vmem:[%s0 + $0x1c] sm:$0xf]
    %v142 = vld [vmem:[%s0 + $0x20] sm:$0xf]
    %v143 = vld [vmem:[%s0 + $0x24] sm:$0xf]
    %v144 = vld [vmem:[%s0 + $0x28] sm:$0xf]
    %v145 = vld [vmem:[%s0 + $0x2c] sm:$0xf]
    %v146 = vld [vmem:[%s0 + $0x30] sm:$0xf]
    %v147 = vld [vmem:[%s0 + $0x34] sm:$0xf]
    %v148 = vld [vmem:[%s0 + $0x38] sm:$0xf]
    %v149 = vld [vmem:[%s0 + $0x3c] sm:$0xf]
    %v150 = vld [vmem:[#allocation2] sm:$0xf]
    %v151 = vld [vmem:[#allocation2 + $0x4] sm:$0xf]
    %v152 = vld [vmem:[#allocation2 + $0x8] sm:$0xf]
    %v153 = vld [vmem:[#allocation2 + $0xc] sm:$0xf]
    %v154 = vld [vmem:[#allocation2 + $0x10] sm:$0xf]
    %v155 = vld [vmem:[#allocation2 + $0x14] sm:$0xf]
    %v156 = vld [vmem:[#allocation2 + $0x18] sm:$0xf]
    %v157 = vld [vmem:[#allocation2 + $0x1c] sm:$0xf]
    %v158 = vld [vmem:[#allocation2 + $0x20] sm:$0xf]
    %v159 = vld [vmem:[#allocation2 + $0x24] sm:$0xf]
    %v160 = vld [vmem:[#allocation2 + $0x28] sm:$0xf]
    %v161 = vld [vmem:[#allocation2 + $0x2c] sm:$0xf]
    %v162 = vld [vmem:[#allocation2 + $0x30] sm:$0xf]
    %v163 = vld [vmem:[#allocation2 + $0x34] sm:$0xf]
    %v164 = vld [vmem:[#allocation2 + $0x38] sm:$0xf]
    %v165 = vld [vmem:[#allocation2 + $0x3c] sm:$0xf]
    %v166 = vld [vmem:[#allocation4] sm:$0x1]
    %v168 = vlaneseq
    %v169 = vshrl.u32 %v168, 7
    %v170 = vsub.s32 0, %v169
    %v171 = vrot.slane %v166, %v170
    %v189 = vunpack.c.l.b16 %v134
    %v190 = vunpack.c.l.b16 %v135
    %v191 = vunpack.c.l.b16 %v136
    %v192 = vunpack.c.l.b16 %v137
    %v193 = vunpack.c.l.b16 %v138
    %v194 = vunpack.c.l.b16 %v139
    %v195 = vunpack.c.l.b16 %v140
    %v196 = vunpack.c.l.b16 %v141
    %v197 = vunpack.c.l.b16 %v142
    %v198 = vunpack.c.l.b16 %v143
    %v199 = vunpack.c.l.b16 %v144
    %v200 = vunpack.c.l.b16 %v145
    %v201 = vunpack.c.l.b16 %v146
    %v202 = vunpack.c.l.b16 %v147
    %v203 = vunpack.c.l.b16 %v148
    %v204 = vunpack.c.l.b16 %v149
    %v205 = vpack.c.b16 %v190, %v189
    %v206 = vpack.c.b16 %v192, %v191
    %v207 = vpack.c.b16 %v194, %v193
    %v208 = vpack.c.b16 %v196, %v195
    %v209 = vpack.c.b16 %v198, %v197
    %v210 = vpack.c.b16 %v200, %v199
    %v211 = vpack.c.b16 %v202, %v201
    %v212 = vpack.c.b16 %v204, %v203
    %v237 = vunpack.c.l.b16 %v150
    %v238 = vunpack.c.l.b16 %v151
    %v239 = vunpack.c.l.b16 %v152
    %v240 = vunpack.c.l.b16 %v153
    %v241 = vunpack.c.l.b16 %v154
    %v242 = vunpack.c.l.b16 %v155
    %v243 = vunpack.c.l.b16 %v156
    %v244 = vunpack.c.l.b16 %v157
    %v245 = vunpack.c.l.b16 %v158
    %v246 = vunpack.c.l.b16 %v159
    %v247 = vunpack.c.l.b16 %v160
    %v248 = vunpack.c.l.b16 %v161
    %v249 = vunpack.c.l.b16 %v162
    %v250 = vunpack.c.l.b16 %v163
    %v251 = vunpack.c.l.b16 %v164
    %v252 = vunpack.c.l.b16 %v165
    %v253 = vpack.c.b16 %v238, %v237
    %v254 = vpack.c.b16 %v240, %v239
    %v255 = vpack.c.b16 %v242, %v241
    %v256 = vpack.c.b16 %v244, %v243
    %v257 = vpack.c.b16 %v246, %v245
    %v258 = vpack.c.b16 %v248, %v247
    %v259 = vpack.c.b16 %v250, %v249
    %v260 = vpack.c.b16 %v252, %v251
    %269 = vmatprep.subr.bf16.mxu0 0
    %270 = vmatpush1.bf16.msra.mxu0 %v253
    %271 = vmatprep.subr.bf16.mxu0 0
    %272 = vmatpush1.bf16.msra.mxu0 %v254
    %273 = vmatprep.subr.bf16.mxu0 0
    %274 = vmatpush1.bf16.msra.mxu0 %v255
    %275 = vmatprep.subr.bf16.mxu0 0
    %276 = vmatpush1.bf16.msra.mxu0 %v256
    %277 = vmatprep.subr.bf16.mxu0 0
    %278 = vmatpush1.bf16.msra.mxu0 %v257
    %279 = vmatprep.subr.bf16.mxu0 0
    %280 = vmatpush1.bf16.msra.mxu0 %v258
    %281 = vmatprep.subr.bf16.mxu0 0
    %282 = vmatpush1.bf16.msra.mxu0 %v259
    %283 = vmatprep.subr.bf16.mxu0 0
    %284 = vmatpush1.bf16.msra.mxu0 %v260
    %285 = vmatprep.subr.bf16.mxu0 0
    %286 = vmatpush1.bf16.msra.mxu0 0
    %287 = vmatprep.subr.bf16.mxu0 0
    %288 = vmatpush1.bf16.msra.mxu0 0
    %289 = vmatprep.subr.bf16.mxu0 0
    %290 = vmatpush1.bf16.msra.mxu0 0
    %291 = vmatprep.subr.bf16.mxu0 0
    %292 = vmatpush1.bf16.msra.mxu0 0
    %293 = vmatprep.subr.bf16.mxu0 0
    %294 = vmatpush1.bf16.msra.mxu0 0
    %295 = vmatprep.subr.bf16.mxu0 0
    %296 = vmatpush1.bf16.msra.mxu0 0
    %297 = vmatprep.subr.bf16.mxu0 0
    %298 = vmatpush1.bf16.msra.mxu0 0
    %299 = vmatprep.subr.bf16.mxu0 0
    %300 = vmatpush1.bf16.msra.mxu0 0
    %301 = vmatprep.mubr.bf16.mxu0 0
    %302 = vmatmul.mubr.bf16.gmra.mrb[0].mxu0 %v205
    %v303 = vpop.f32.mrb[0].mxu0
    %v304 = vadd.f32 %v171, %v303
    %v305 = vpop.f32.mrb[0].mxu0
    %v306 = vpop.f32.mrb[0].mxu0
    %v307 = vadd.f32 %v171, %v306
    %v308 = vpop.f32.mrb[0].mxu0
    %309 = vmatprep.mubr.bf16.mxu0 0
    %310 = vmatmul.mubr.bf16.gmra.mrb[0].mxu0 %v206
    %v311 = vpop.f32.mrb[0].mxu0
    %v312 = vadd.f32 %v171, %v311
    %v313 = vpop.f32.mrb[0].mxu0
    %v314 = vpop.f32.mrb[0].mxu0
    %v315 = vadd.f32 %v171, %v314
    %v316 = vpop.f32.mrb[0].mxu0
    %317 = vmatprep.mubr.bf16.mxu0 0
    %318 = vmatmul.mubr.bf16.gmra.mrb[0].mxu0 %v207
    %v319 = vpop.f32.mrb[0].mxu0
    %v320 = vadd.f32 %v171, %v319
    %v321 = vpop.f32.mrb[0].mxu0
    %v322 = vpop.f32.mrb[0].mxu0
    %v323 = vadd.f32 %v171, %v322
    %v324 = vpop.f32.mrb[0].mxu0
    %325 = vmatprep.mubr.bf16.mxu0 0
    %326 = vmatmul.mubr.bf16.gmra.mrb[0].mxu0 %v208
    %v327 = vpop.f32.mrb[0].mxu0
    %v328 = vadd.f32 %v171, %v327
    %v329 = vpop.f32.mrb[0].mxu0
    %v330 = vpop.f32.mrb[0].mxu0
    %v331 = vadd.f32 %v171, %v330
    %v332 = vpop.f32.mrb[0].mxu0
    %333 = vmatprep.mubr.bf16.mxu0 0
    %334 = vmatmul.mubr.bf16.gmra.mrb[0].mxu0 %v209
    %v335 = vpop.f32.mrb[0].mxu0
    %v336 = vadd.f32 %v171, %v335
    %v337 = vpop.f32.mrb[0].mxu0
    %v338 = vpop.f32.mrb[0].mxu0
    %v339 = vadd.f32 %v171, %v338
    %v340 = vpop.f32.mrb[0].mxu0
    %341 = vmatprep.mubr.bf16.mxu0 0
    %342 = vmatmul.mubr.bf16.gmra.mrb[0].mxu0 %v210
    %v343 = vpop.f32.mrb[0].mxu0
    %v344 = vadd.f32 %v171, %v343
    %v345 = vpop.f32.mrb[0].mxu0
    %v346 = vpop.f32.mrb[0].mxu0
    %v347 = vadd.f32 %v171, %v346
    %v348 = vpop.f32.mrb[0].mxu0
    %349 = vmatprep.mubr.bf16.mxu0 0
    %350 = vmatmul.mubr.bf16.gmra.mrb[0].mxu0 %v211
    %v351 = vpop.f32.mrb[0].mxu0
    %v352 = vadd.f32 %v171, %v351
    %v353 = vpop.f32.mrb[0].mxu0
    %v354 = vpop.f32.mrb[0].mxu0
    %v355 = vadd.f32 %v171, %v354
    %v356 = vpop.f32.mrb[0].mxu0
    %357 = vmatprep.mubr.bf16.mxu0 0
    %358 = vmatmul.mubr.bf16.gmra.mrb[0].mxu0 %v212
    %v359 = vpop.f32.mrb[0].mxu0
    %v360 = vadd.f32 %v171, %v359
    %v361 = vpop.f32.mrb[0].mxu0
    %v362 = vpop.f32.mrb[0].mxu0
    %v363 = vadd.f32 %v171, %v362
    %v364 = vpop.f32.mrb[0].mxu0
    %365 = vdwg.mxu0
    %v366 = vmax.f32 %v304, 0.0
    %v367 = vmax.f32 %v307, 0.0
    %v368 = vmax.f32 %v312, 0.0
    %v369 = vmax.f32 %v315, 0.0
    %v370 = vmax.f32 %v320, 0.0
    %v371 = vmax.f32 %v323, 0.0
    %v372 = vmax.f32 %v328, 0.0
    %v373 = vmax.f32 %v331, 0.0
    %v374 = vmax.f32 %v336, 0.0
    %v375 = vmax.f32 %v339, 0.0
    %v376 = vmax.f32 %v344, 0.0
    %v377 = vmax.f32 %v347, 0.0
    %v378 = vmax.f32 %v352, 0.0
    %v379 = vmax.f32 %v355, 0.0
    %v380 = vmax.f32 %v360, 0.0
    %v381 = vmax.f32 %v363, 0.0
    %v382 = vpack.c.bf16 %v368, %v366
    %v383 = vpack.c.bf16 %v372, %v370
    %v384 = vpack.c.bf16 %v376, %v374
    %v385 = vpack.c.bf16 %v380, %v378
    %v386 = vld [vmem:[#allocation6] sm:$0xf]
    %v387 = vld [vmem:[#allocation6 + $0x4] sm:$0xf]
    %v388 = vld [vmem:[#allocation6 + $0x8] sm:$0xf]
    %v389 = vld [vmem:[#allocation6 + $0xc] sm:$0xf]
    %v390 = vld [vmem:[#allocation6 + $0x10] sm:$0xf]
    %v391 = vld [vmem:[#allocation6 + $0x14] sm:$0xf]
    %v392 = vld [vmem:[#allocation6 + $0x18] sm:$0xf]
    %v393 = vld [vmem:[#allocation6 + $0x1c] sm:$0xf]
    %v394 = vld [vmem:[#allocation6 + $0x20] sm:$0xf]
    %v395 = vld [vmem:[#allocation6 + $0x24] sm:$0xf]
    %v396 = vld [vmem:[#allocation6 + $0x28] sm:$0xf]
    %v397 = vld [vmem:[#allocation6 + $0x2c] sm:$0xf]
    %v398 = vld [vmem:[#allocation6 + $0x30] sm:$0xf]
    %v399 = vld [vmem:[#allocation6 + $0x34] sm:$0xf]
    %v400 = vld [vmem:[#allocation6 + $0x38] sm:$0xf]
    %v401 = vld [vmem:[#allocation6 + $0x3c] sm:$0xf]
    %vm418 = vcmask 1046528
    %v419 = vrot.slane %v366, 1
    %v420 = vrot.slane %v367, 1
    %v421 = vsel %vm418, %v419, %v420
    %v422 = vrot.slane %v368, 1
    %v423 = vrot.slane %v369, 1
    %v424 = vsel %vm418, %v422, %v423
    %v425 = vrot.slane %v370, 1
    %v426 = vrot.slane %v371, 1
    %v427 = vsel %vm418, %v425, %v426
    %v428 = vrot.slane %v372, 1
    %v429 = vrot.slane %v373, 1
    %v430 = vsel %vm418, %v428, %v429
    %v431 = vrot.slane %v374, 1
    %v432 = vrot.slane %v375, 1
    %v433 = vsel %vm418, %v431, %v432
    %v434 = vrot.slane %v376, 1
    %v435 = vrot.slane %v377, 1
    %v436 = vsel %vm418, %v434, %v435
    %v437 = vrot.slane %v378, 1
    %v438 = vrot.slane %v379, 1
    %v439 = vsel %vm418, %v437, %v438
    %v440 = vrot.slane %v380, 1
    %v441 = vrot.slane %v381, 1
    %v442 = vsel %vm418, %v440, %v441
    %v451 = vpack.c.bf16 %v424, %v421
    %v452 = vpack.c.bf16 %v430, %v427
    %v453 = vpack.c.bf16 %v436, %v433
    %v454 = vpack.c.bf16 %v442, %v439
    %s455 = scalar_lea.vmem [#allocation6], 64
    %v456 = vld [vmem:[%s455] sm:$0xf]
    %v457 = vld [vmem:[%s455 + $0x4] sm:$0xf]
    %v458 = vld [vmem:[%s455 + $0x8] sm:$0xf]
    %v459 = vld [vmem:[%s455 + $0xc] sm:$0xf]
    %v460 = vld [vmem:[%s455 + $0x10] sm:$0xf]
    %v461 = vld [vmem:[%s455 + $0x14] sm:$0xf]
    %v462 = vld [vmem:[%s455 + $0x18] sm:$0xf]
    %v463 = vld [vmem:[%s455 + $0x1c] sm:$0xf]
    %v464 = vld [vmem:[%s455 + $0x20] sm:$0xf]
    %v465 = vld [vmem:[%s455 + $0x24] sm:$0xf]
    %v466 = vld [vmem:[%s455 + $0x28] sm:$0xf]
    %v467 = vld [vmem:[%s455 + $0x2c] sm:$0xf]
    %v468 = vld [vmem:[%s455 + $0x30] sm:$0xf]
    %v469 = vld [vmem:[%s455 + $0x34] sm:$0xf]
    %v470 = vld [vmem:[%s455 + $0x38] sm:$0xf]
    %v471 = vld [vmem:[%s455 + $0x3c] sm:$0xf]
    %v488 = vunpack.c.l.b16 %v456
    %v489 = vunpack.c.l.b16 %v457
    %v490 = vunpack.c.l.b16 %v458
    %v491 = vunpack.c.l.b16 %v459
    %v492 = vunpack.c.l.b16 %v460
    %v493 = vunpack.c.l.b16 %v461
    %v494 = vunpack.c.l.b16 %v462
    %v495 = vunpack.c.l.b16 %v463
    %v496 = vunpack.c.l.b16 %v464
    %v497 = vunpack.c.l.b16 %v465
    %v498 = vunpack.c.l.b16 %v466
    %v499 = vunpack.c.l.b16 %v467
    %v500 = vunpack.c.l.b16 %v468
    %v501 = vunpack.c.l.b16 %v469
    %v502 = vunpack.c.l.b16 %v470
    %v503 = vunpack.c.l.b16 %v471
    %v504 = vpack.c.b16 %v489, %v488
    %v505 = vpack.c.b16 %v491, %v490
    %v506 = vpack.c.b16 %v493, %v492
    %v507 = vpack.c.b16 %v495, %v494
    %v508 = vpack.c.b16 %v497, %v496
    %v509 = vpack.c.b16 %v499, %v498
    %v510 = vpack.c.b16 %v501, %v500
    %v511 = vpack.c.b16 %v503, %v502
    %520 = vmatprep.subr.bf16.mxu0 0
    %521 = vmatpush1.bf16.msra.mxu0 %v504
    %522 = vmatprep.subr.bf16.mxu0 0
    %523 = vmatpush1.bf16.msra.mxu0 %v505
    %524 = vmatprep.subr.bf16.mxu0 0
    %525 = vmatpush1.bf16.msra.mxu0 %v506
    %526 = vmatprep.subr.bf16.mxu0 0
    %527 = vmatpush1.bf16.msra.mxu0 %v507
    %528 = vmatprep.subr.bf16.mxu0 0
    %529 = vmatpush1.bf16.msra.mxu0 %v508
    %530 = vmatprep.subr.bf16.mxu0 0
    %531 = vmatpush1.bf16.msra.mxu0 %v509
    %532 = vmatprep.subr.bf16.mxu0 0
    %533 = vmatpush1.bf16.msra.mxu0 %v510
    %534 = vmatprep.subr.bf16.mxu0 0
    %535 = vmatpush1.bf16.msra.mxu0 %v511
    %536 = vmatprep.subr.bf16.mxu0 0
    %537 = vmatpush1.bf16.msra.mxu0 0
    %538 = vmatprep.subr.bf16.mxu0 0
    %539 = vmatpush1.bf16.msra.mxu0 0
    %540 = vmatprep.subr.bf16.mxu0 0
    %541 = vmatpush1.bf16.msra.mxu0 0
    %542 = vmatprep.subr.bf16.mxu0 0
    %543 = vmatpush1.bf16.msra.mxu0 0
    %544 = vmatprep.subr.bf16.mxu0 0
    %545 = vmatpush1.bf16.msra.mxu0 0
    %546 = vmatprep.subr.bf16.mxu0 0
    %547 = vmatpush1.bf16.msra.mxu0 0
    %548 = vmatprep.subr.bf16.mxu0 0
    %549 = vmatpush1.bf16.msra.mxu0 0
    %550 = vmatprep.subr.bf16.mxu0 0
    %551 = vmatpush1.bf16.msra.mxu0 0
    %552 = vmatprep.mubr.bf16.mxu0 0
    %553 = vmatmul.mubr.bf16.gmra.mrb[0].mxu0 %v451
    %v554 = vpop.f32.mrb[0].mxu0
    %v555 = vadd.f32 0.0, %v554
    %v556 = vpop.f32.mrb[0].mxu0
    %v557 = vpop.f32.mrb[0].mxu0
    %v558 = vadd.f32 0.0, %v557
    %v559 = vpop.f32.mrb[0].mxu0
    %560 = vmatprep.mubr.bf16.mxu0 0
    %561 = vmatmul.mubr.bf16.gmra.mrb[0].mxu0 %v452
    %v562 = vpop.f32.mrb[0].mxu0
    %v563 = vadd.f32 0.0, %v562
    %v564 = vpop.f32.mrb[0].mxu0
    %v565 = vpop.f32.mrb[0].mxu0
    %v566 = vadd.f32 0.0, %v565
    %v567 = vpop.f32.mrb[0].mxu0
    %568 = vmatprep.mubr.bf16.mxu0 0
    %569 = vmatmul.mubr.bf16.gmra.mrb[0].mxu0 %v453
    %v570 = vpop.f32.mrb[0].mxu0
    %v571 = vadd.f32 0.0, %v570
    %v572 = vpop.f32.mrb[0].mxu0
    %v573 = vpop.f32.mrb[0].mxu0
    %v574 = vadd.f32 0.0, %v573
    %v575 = vpop.f32.mrb[0].mxu0
    %576 = vmatprep.mubr.bf16.mxu0 0
    %577 = vmatmul.mubr.bf16.gmra.mrb[0].mxu0 %v454
    %v578 = vpop.f32.mrb[0].mxu0
    %v579 = vadd.f32 0.0, %v578
    %v580 = vpop.f32.mrb[0].mxu0
    %v581 = vpop.f32.mrb[0].mxu0
    %v582 = vadd.f32 0.0, %v581
    %v583 = vpop.f32.mrb[0].mxu0
    %584 = vdwg.mxu0
    %v601 = vunpack.c.l.b16 %v386
    %v602 = vunpack.c.l.b16 %v387
    %v603 = vunpack.c.l.b16 %v388
    %v604 = vunpack.c.l.b16 %v389
    %v605 = vunpack.c.l.b16 %v390
    %v606 = vunpack.c.l.b16 %v391
    %v607 = vunpack.c.l.b16 %v392
    %v608 = vunpack.c.l.b16 %v393
    %v609 = vunpack.c.l.b16 %v394
    %v610 = vunpack.c.l.b16 %v395
    %v611 = vunpack.c.l.b16 %v396
    %v612 = vunpack.c.l.b16 %v397
    %v613 = vunpack.c.l.b16 %v398
    %v614 = vunpack.c.l.b16 %v399
    %v615 = vunpack.c.l.b16 %v400
    %v616 = vunpack.c.l.b16 %v401
    %v617 = vpack.c.b16 %v602, %v601
    %v618 = vpack.c.b16 %v604, %v603
    %v619 = vpack.c.b16 %v606, %v605
    %v620 = vpack.c.b16 %v608, %v607
    %v621 = vpack.c.b16 %v610, %v609
    %v622 = vpack.c.b16 %v612, %v611
    %v623 = vpack.c.b16 %v614, %v613
    %v624 = vpack.c.b16 %v616, %v615
    %633 = vmatprep.subr.bf16.mxu0 0
    %634 = vmatpush1.bf16.msra.mxu0 %v617
    %635 = vmatprep.subr.bf16.mxu0 0
    %636 = vmatpush1.bf16.msra.mxu0 %v618
    %637 = vmatprep.subr.bf16.mxu0 0
    %638 = vmatpush1.bf16.msra.mxu0 %v619
    %639 = vmatprep.subr.bf16.mxu0 0
    %640 = vmatpush1.bf16.msra.mxu0 %v620
    %641 = vmatprep.subr.bf16.mxu0 0
    %642 = vmatpush1.bf16.msra.mxu0 %v621
    %643 = vmatprep.subr.bf16.mxu0 0
    %644 = vmatpush1.bf16.msra.mxu0 %v622
    %645 = vmatprep.subr.bf16.mxu0 0
    %646 = vmatpush1.bf16.msra.mxu0 %v623
    %647 = vmatprep.subr.bf16.mxu0 0
    %648 = vmatpush1.bf16.msra.mxu0 %v624
    %649 = vmatprep.subr.bf16.mxu0 0
    %650 = vmatpush1.bf16.msra.mxu0 0
    %651 = vmatprep.subr.bf16.mxu0 0
    %652 = vmatpush1.bf16.msra.mxu0 0
    %653 = vmatprep.subr.bf16.mxu0 0
    %654 = vmatpush1.bf16.msra.mxu0 0
    %655 = vmatprep.subr.bf16.mxu0 0
    %656 = vmatpush1.bf16.msra.mxu0 0
    %657 = vmatprep.subr.bf16.mxu0 0
    %658 = vmatpush1.bf16.msra.mxu0 0
    %659 = vmatprep.subr.bf16.mxu0 0
    %660 = vmatpush1.bf16.msra.mxu0 0
    %661 = vmatprep.subr.bf16.mxu0 0
    %662 = vmatpush1.bf16.msra.mxu0 0
    %663 = vmatprep.subr.bf16.mxu0 0
    %664 = vmatpush1.bf16.msra.mxu0 0
    %665 = vmatprep.mubr.bf16.mxu0 0
    %666 = vmatmul.mubr.bf16.gmra.mrb[0].mxu0 %v382
    %v667 = vpop.f32.mrb[0].mxu0
    %v668 = vadd.f32 %v555, %v667
    %v669 = vpop.f32.mrb[0].mxu0
    %v670 = vpop.f32.mrb[0].mxu0
    %v671 = vadd.f32 %v558, %v670
    %v672 = vpop.f32.mrb[0].mxu0
    %673 = vmatprep.mubr.bf16.mxu0 0
    %674 = vmatmul.mubr.bf16.gmra.mrb[0].mxu0 %v383
    %v675 = vpop.f32.mrb[0].mxu0
    %v676 = vadd.f32 %v563, %v675
    %v677 = vpop.f32.mrb[0].mxu0
    %v678 = vpop.f32.mrb[0].mxu0
    %v679 = vadd.f32 %v566, %v678
    %v680 = vpop.f32.mrb[0].mxu0
    %681 = vmatprep.mubr.bf16.mxu0 0
    %682 = vmatmul.mubr.bf16.gmra.mrb[0].mxu0 %v384
    %v683 = vpop.f32.mrb[0].mxu0
    %v684 = vadd.f32 %v571, %v683
    %v685 = vpop.f32.mrb[0].mxu0
    %v686 = vpop.f32.mrb[0].mxu0
    %v687 = vadd.f32 %v574, %v686
    %v688 = vpop.f32.mrb[0].mxu0
    %689 = vmatprep.mubr.bf16.mxu0 0
    %690 = vmatmul.mubr.bf16.gmra.mrb[0].mxu0 %v385
    %v691 = vpop.f32.mrb[0].mxu0
    %v692 = vadd.f32 %v579, %v691
    %v693 = vpop.f32.mrb[0].mxu0
    %v694 = vpop.f32.mrb[0].mxu0
    %v695 = vadd.f32 %v582, %v694
    %v696 = vpop.f32.mrb[0].mxu0
    %697 = vdwg.mxu0
    %vm698 = vcmask 1045504
    %v699 = vrot.slane %v366, 2
    %v700 = vrot.slane %v367, 2
    %v701 = vsel %vm698, %v699, %v700
    %v702 = vrot.slane %v368, 2
    %v703 = vrot.slane %v369, 2
    %v704 = vsel %vm698, %v702, %v703
    %v705 = vrot.slane %v370, 2
    %v706 = vrot.slane %v371, 2
    %v707 = vsel %vm698, %v705, %v706
    %v708 = vrot.slane %v372, 2
    %v709 = vrot.slane %v373, 2
    %v710 = vsel %vm698, %v708, %v709
    %v711 = vrot.slane %v374, 2
    %v712 = vrot.slane %v375, 2
    %v713 = vsel %vm698, %v711, %v712
    %v714 = vrot.slane %v376, 2
    %v715 = vrot.slane %v377, 2
    %v716 = vsel %vm698, %v714, %v715
    %v717 = vrot.slane %v378, 2
    %v718 = vrot.slane %v379, 2
    %v719 = vsel %vm698, %v717, %v718
    %v720 = vrot.slane %v380, 2
    %v721 = vrot.slane %v381, 2
    %v722 = vsel %vm698, %v720, %v721
    %v731 = vpack.c.bf16 %v704, %v701
    %v732 = vpack.c.bf16 %v710, %v707
    %v733 = vpack.c.bf16 %v716, %v713
    %v734 = vpack.c.bf16 %v722, %v719
    %s735 = scalar_lea.vmem [#allocation6], 128
    %v736 = vld [vmem:[%s735] sm:$0xf]
    %v737 = vld [vmem:[%s735 + $0x4] sm:$0xf]
    %v738 = vld [vmem:[%s735 + $0x8] sm:$0xf]
    %v739 = vld [vmem:[%s735 + $0xc] sm:$0xf]
    %v740 = vld [vmem:[%s735 + $0x10] sm:$0xf]
    %v741 = vld [vmem:[%s735 + $0x14] sm:$0xf]
    %v742 = vld [vmem:[%s735 + $0x18] sm:$0xf]
    %v743 = vld [vmem:[%s735 + $0x1c] sm:$0xf]
    %v744 = vld [vmem:[%s735 + $0x20] sm:$0xf]
    %v745 = vld [vmem:[%s735 + $0x24] sm:$0xf]
    %v746 = vld [vmem:[%s735 + $0x28] sm:$0xf]
    %v747 = vld [vmem:[%s735 + $0x2c] sm:$0xf]
    %v748 = vld [vmem:[%s735 + $0x30] sm:$0xf]
    %v749 = vld [vmem:[%s735 + $0x34] sm:$0xf]
    %v750 = vld [vmem:[%s735 + $0x38] sm:$0xf]
    %v751 = vld [vmem:[%s735 + $0x3c] sm:$0xf]
    %v768 = vunpack.c.l.b16 %v736
    %v769 = vunpack.c.l.b16 %v737
    %v770 = vunpack.c.l.b16 %v738
    %v771 = vunpack.c.l.b16 %v739
    %v772 = vunpack.c.l.b16 %v740
    %v773 = vunpack.c.l.b16 %v741
    %v774 = vunpack.c.l.b16 %v742
    %v775 = vunpack.c.l.b16 %v743
    %v776 = vunpack.c.l.b16 %v744
    %v777 = vunpack.c.l.b16 %v745
    %v778 = vunpack.c.l.b16 %v746
    %v779 = vunpack.c.l.b16 %v747
    %v780 = vunpack.c.l.b16 %v748
    %v781 = vunpack.c.l.b16 %v749
    %v782 = vunpack.c.l.b16 %v750
    %v783 = vunpack.c.l.b16 %v751
    %v784 = vpack.c.b16 %v769, %v768
    %v785 = vpack.c.b16 %v771, %v770
    %v786 = vpack.c.b16 %v773, %v772
    %v787 = vpack.c.b16 %v775, %v774
    %v788 = vpack.c.b16 %v777, %v776
    %v789 = vpack.c.b16 %v779, %v778
    %v790 = vpack.c.b16 %v781, %v780
    %v791 = vpack.c.b16 %v783, %v782
    %800 = vmatprep.subr.bf16.mxu0 0
    %801 = vmatpush1.bf16.msra.mxu0 %v784
    %802 = vmatprep.subr.bf16.mxu0 0
    %803 = vmatpush1.bf16.msra.mxu0 %v785
    %804 = vmatprep.subr.bf16.mxu0 0
    %805 = vmatpush1.bf16.msra.mxu0 %v786
    %806 = vmatprep.subr.bf16.mxu0 0
    %807 = vmatpush1.bf16.msra.mxu0 %v787
    %808 = vmatprep.subr.bf16.mxu0 0
    %809 = vmatpush1.bf16.msra.mxu0 %v788
    %810 = vmatprep.subr.bf16.mxu0 0
    %811 = vmatpush1.bf16.msra.mxu0 %v789
    %812 = vmatprep.subr.bf16.mxu0 0
    %813 = vmatpush1.bf16.msra.mxu0 %v790
    %814 = vmatprep.subr.bf16.mxu0 0
    %815 = vmatpush1.bf16.msra.mxu0 %v791
    %816 = vmatprep.subr.bf16.mxu0 0
    %817 = vmatpush1.bf16.msra.mxu0 0
    %818 = vmatprep.subr.bf16.mxu0 0
    %819 = vmatpush1.bf16.msra.mxu0 0
    %820 = vmatprep.subr.bf16.mxu0 0
    %821 = vmatpush1.bf16.msra.mxu0 0
    %822 = vmatprep.subr.bf16.mxu0 0
    %823 = vmatpush1.bf16.msra.mxu0 0
    %824 = vmatprep.subr.bf16.mxu0 0
    %825 = vmatpush1.bf16.msra.mxu0 0
    %826 = vmatprep.subr.bf16.mxu0 0
    %827 = vmatpush1.bf16.msra.mxu0 0
    %828 = vmatprep.subr.bf16.mxu0 0
    %829 = vmatpush1.bf16.msra.mxu0 0
    %830 = vmatprep.subr.bf16.mxu0 0
    %831 = vmatpush1.bf16.msra.mxu0 0
    %832 = vmatprep.mubr.bf16.mxu0 0
    %833 = vmatmul.mubr.bf16.gmra.mrb[0].mxu0 %v731
    %v834 = vpop.f32.mrb[0].mxu0
    %v835 = vadd.f32 0.0, %v834
    %v836 = vpop.f32.mrb[0].mxu0
    %v837 = vpop.f32.mrb[0].mxu0
    %v838 = vadd.f32 0.0, %v837
    %v839 = vpop.f32.mrb[0].mxu0
    %840 = vmatprep.mubr.bf16.mxu0 0
    %841 = vmatmul.mubr.bf16.gmra.mrb[0].mxu0 %v732
    %v842 = vpop.f32.mrb[0].mxu0
    %v843 = vadd.f32 0.0, %v842
    %v844 = vpop.f32.mrb[0].mxu0
    %v845 = vpop.f32.mrb[0].mxu0
    %v846 = vadd.f32 0.0, %v845
    %v847 = vpop.f32.mrb[0].mxu0
    %848 = vmatprep.mubr.bf16.mxu0 0
    %849 = vmatmul.mubr.bf16.gmra.mrb[0].mxu0 %v733
    %v850 = vpop.f32.mrb[0].mxu0
    %v851 = vadd.f32 0.0, %v850
    %v852 = vpop.f32.mrb[0].mxu0
    %v853 = vpop.f32.mrb[0].mxu0
    %v854 = vadd.f32 0.0, %v853
    %v855 = vpop.f32.mrb[0].mxu0
    %856 = vmatprep.mubr.bf16.mxu0 0
    %857 = vmatmul.mubr.bf16.gmra.mrb[0].mxu0 %v734
    %v858 = vpop.f32.mrb[0].mxu0
    %v859 = vadd.f32 0.0, %v858
    %v860 = vpop.f32.mrb[0].mxu0
    %v861 = vpop.f32.mrb[0].mxu0
    %v862 = vadd.f32 0.0, %v861
    %v863 = vpop.f32.mrb[0].mxu0
    %864 = vdwg.mxu0
    %v865 = vadd.f32 %v668, %v835
    %v866 = vadd.f32 %v671, %v838
    %v867 = vadd.f32 %v676, %v843
    %v868 = vadd.f32 %v679, %v846
    %v869 = vadd.f32 %v684, %v851
    %v870 = vadd.f32 %v687, %v854
    %v871 = vadd.f32 %v692, %v859
    %v872 = vadd.f32 %v695, %v862
    %vm873 = vcmask 1044480
    %v874 = vrot.slane %v366, 3
    %v875 = vrot.slane %v367, 3
    %v876 = vsel %vm873, %v874, %v875
    %v877 = vrot.slane %v368, 3
    %v878 = vrot.slane %v369, 3
    %v879 = vsel %vm873, %v877, %v878
    %v880 = vrot.slane %v370, 3
    %v881 = vrot.slane %v371, 3
    %v882 = vsel %vm873, %v880, %v881
    %v883 = vrot.slane %v372, 3
    %v884 = vrot.slane %v373, 3
    %v885 = vsel %vm873, %v883, %v884
    %v886 = vrot.slane %v374, 3
    %v887 = vrot.slane %v375, 3
    %v888 = vsel %vm873, %v886, %v887
    %v889 = vrot.slane %v376, 3
    %v890 = vrot.slane %v377, 3
    %v891 = vsel %vm873, %v889, %v890
    %v892 = vrot.slane %v378, 3
    %v893 = vrot.slane %v379, 3
    %v894 = vsel %vm873, %v892, %v893
    %v895 = vrot.slane %v380, 3
    %v896 = vrot.slane %v381, 3
    %v897 = vsel %vm873, %v895, %v896
    %v906 = vpack.c.bf16 %v879, %v876
    %v907 = vpack.c.bf16 %v885, %v882
    %v908 = vpack.c.bf16 %v891, %v888
    %v909 = vpack.c.bf16 %v897, %v894
    %s910 = scalar_lea.vmem [#allocation6], 192
    %v911 = vld [vmem:[%s910] sm:$0xf]
    %v912 = vld [vmem:[%s910 + $0x4] sm:$0xf]
    %v913 = vld [vmem:[%s910 + $0x8] sm:$0xf]
    %v914 = vld [vmem:[%s910 + $0xc] sm:$0xf]
    %v915 = vld [vmem:[%s910 + $0x10] sm:$0xf]
    %v916 = vld [vmem:[%s910 + $0x14] sm:$0xf]
    %v917 = vld [vmem:[%s910 + $0x18] sm:$0xf]
    %v918 = vld [vmem:[%s910 + $0x1c] sm:$0xf]
    %v919 = vld [vmem:[%s910 + $0x20] sm:$0xf]
    %v920 = vld [vmem:[%s910 + $0x24] sm:$0xf]
    %v921 = vld [vmem:[%s910 + $0x28] sm:$0xf]
    %v922 = vld [vmem:[%s910 + $0x2c] sm:$0xf]
    %v923 = vld [vmem:[%s910 + $0x30] sm:$0xf]
    %v924 = vld [vmem:[%s910 + $0x34] sm:$0xf]
    %v925 = vld [vmem:[%s910 + $0x38] sm:$0xf]
    %v926 = vld [vmem:[%s910 + $0x3c] sm:$0xf]
    %v943 = vunpack.c.l.b16 %v911
    %v944 = vunpack.c.l.b16 %v912
    %v945 = vunpack.c.l.b16 %v913
    %v946 = vunpack.c.l.b16 %v914
    %v947 = vunpack.c.l.b16 %v915
    %v948 = vunpack.c.l.b16 %v916
    %v949 = vunpack.c.l.b16 %v917
    %v950 = vunpack.c.l.b16 %v918
    %v951 = vunpack.c.l.b16 %v919
    %v952 = vunpack.c.l.b16 %v920
    %v953 = vunpack.c.l.b16 %v921
    %v954 = vunpack.c.l.b16 %v922
    %v955 = vunpack.c.l.b16 %v923
    %v956 = vunpack.c.l.b16 %v924
    %v957 = vunpack.c.l.b16 %v925
    %v958 = vunpack.c.l.b16 %v926
    %v959 = vpack.c.b16 %v944, %v943
    %v960 = vpack.c.b16 %v946, %v945
    %v961 = vpack.c.b16 %v948, %v947
    %v962 = vpack.c.b16 %v950, %v949
    %v963 = vpack.c.b16 %v952, %v951
    %v964 = vpack.c.b16 %v954, %v953
    %v965 = vpack.c.b16 %v956, %v955
    %v966 = vpack.c.b16 %v958, %v957
    %975 = vmatprep.subr.bf16.mxu0 0
    %976 = vmatpush1.bf16.msra.mxu0 %v959
    %977 = vmatprep.subr.bf16.mxu0 0
    %978 = vmatpush1.bf16.msra.mxu0 %v960
    %979 = vmatprep.subr.bf16.mxu0 0
    %980 = vmatpush1.bf16.msra.mxu0 %v961
    %981 = vmatprep.subr.bf16.mxu0 0
    %982 = vmatpush1.bf16.msra.mxu0 %v962
    %983 = vmatprep.subr.bf16.mxu0 0
    %984 = vmatpush1.bf16.msra.mxu0 %v963
    %985 = vmatprep.subr.bf16.mxu0 0
    %986 = vmatpush1.bf16.msra.mxu0 %v964
    %987 = vmatprep.subr.bf16.mxu0 0
    %988 = vmatpush1.bf16.msra.mxu0 %v965
    %989 = vmatprep.subr.bf16.mxu0 0
    %990 = vmatpush1.bf16.msra.mxu0 %v966
    %991 = vmatprep.subr.bf16.mxu0 0
    %992 = vmatpush1.bf16.msra.mxu0 0
    %993 = vmatprep.subr.bf16.mxu0 0
    %994 = vmatpush1.bf16.msra.mxu0 0
    %995 = vmatprep.subr.bf16.mxu0 0
    %996 = vmatpush1.bf16.msra.mxu0 0
    %997 = vmatprep.subr.bf16.mxu0 0
    %998 = vmatpush1.bf16.msra.mxu0 0
    %999 = vmatprep.subr.bf16.mxu0 0
    %1000 = vmatpush1.bf16.msra.mxu0 0
    %1001 = vmatprep.subr.bf16.mxu0 0
    %1002 = vmatpush1.bf16.msra.mxu0 0
    %1003 = vmatprep.subr.bf16.mxu0 0
    %1004 = vmatpush1.bf16.msra.mxu0 0
    %1005 = vmatprep.subr.bf16.mxu0 0
    %1006 = vmatpush1.bf16.msra.mxu0 0
    %1007 = vmatprep.mubr.bf16.mxu0 0
    %1008 = vmatmul.mubr.bf16.gmra.mrb[0].mxu0 %v906
    %v1009 = vpop.f32.mrb[0].mxu0
    %v1010 = vadd.f32 0.0, %v1009
    %v1011 = vpop.f32.mrb[0].mxu0
    %v1012 = vpop.f32.mrb[0].mxu0
    %v1013 = vadd.f32 0.0, %v1012
    %v1014 = vpop.f32.mrb[0].mxu0
    %1015 = vmatprep.mubr.bf16.mxu0 0
    %1016 = vmatmul.mubr.bf16.gmra.mrb[0].mxu0 %v907
    %v1017 = vpop.f32.mrb[0].mxu0
    %v1018 = vadd.f32 0.0, %v1017
    %v1019 = vpop.f32.mrb[0].mxu0
    %v1020 = vpop.f32.mrb[0].mxu0
    %v1021 = vadd.f32 0.0, %v1020
    %v1022 = vpop.f32.mrb[0].mxu0
    %1023 = vmatprep.mubr.bf16.mxu0 0
    %1024 = vmatmul.mubr.bf16.gmra.mrb[0].mxu0 %v908
    %v1025 = vpop.f32.mrb[0].mxu0
    %v1026 = vadd.f32 0.0, %v1025
    %v1027 = vpop.f32.mrb[0].mxu0
    %v1028 = vpop.f32.mrb[0].mxu0
    %v1029 = vadd.f32 0.0, %v1028
    %v1030 = vpop.f32.mrb[0].mxu0
    %1031 = vmatprep.mubr.bf16.mxu0 0
    %1032 = vmatmul.mubr.bf16.gmra.mrb[0].mxu0 %v909
    %v1033 = vpop.f32.mrb[0].mxu0
    %v1034 = vadd.f32 0.0, %v1033
    %v1035 = vpop.f32.mrb[0].mxu0
    %v1036 = vpop.f32.mrb[0].mxu0
    %v1037 = vadd.f32 0.0, %v1036
    %v1038 = vpop.f32.mrb[0].mxu0
    %1039 = vdwg.mxu0
    %v1040 = vadd.f32 %v865, %v1010
    %v1041 = vadd.f32 %v866, %v1013
    %v1042 = vadd.f32 %v867, %v1018
    %v1043 = vadd.f32 %v868, %v1021
    %v1044 = vadd.f32 %v869, %v1026
    %v1045 = vadd.f32 %v870, %v1029
    %v1046 = vadd.f32 %v871, %v1034
    %v1047 = vadd.f32 %v872, %v1037
    %vm1048 = vcmask 1043456
    %v1049 = vrot.slane %v366, 4
    %v1050 = vrot.slane %v367, 4
    %v1051 = vsel %vm1048, %v1049, %v1050
    %v1052 = vrot.slane %v368, 4
    %v1053 = vrot.slane %v369, 4
    %v1054 = vsel %vm1048, %v1052, %v1053
    %v1055 = vrot.slane %v370, 4
    %v1056 = vrot.slane %v371, 4
    %v1057 = vsel %vm1048, %v1055, %v1056
    %v1058 = vrot.slane %v372, 4
    %v1059 = vrot.slane %v373, 4
    %v1060 = vsel %vm1048, %v1058, %v1059
    %v1061 = vrot.slane %v374, 4
    %v1062 = vrot.slane %v375, 4
    %v1063 = vsel %vm1048, %v1061, %v1062
    %v1064 = vrot.slane %v376, 4
    %v1065 = vrot.slane %v377, 4
    %v1066 = vsel %vm1048, %v1064, %v1065
    %v1067 = vrot.slane %v378, 4
    %v1068 = vrot.slane %v379, 4
    %v1069 = vsel %vm1048, %v1067, %v1068
    %v1070 = vrot.slane %v380, 4
    %v1071 = vrot.slane %v381, 4
    %v1072 = vsel %vm1048, %v1070, %v1071
    %v1081 = vpack.c.bf16 %v1054, %v1051
    %v1082 = vpack.c.bf16 %v1060, %v1057
    %v1083 = vpack.c.bf16 %v1066, %v1063
    %v1084 = vpack.c.bf16 %v1072, %v1069
    %s1085 = scalar_lea.vmem [#allocation6], 256
    %v1086 = vld [vmem:[%s1085] sm:$0xf]
    %v1087 = vld [vmem:[%s1085 + $0x4] sm:$0xf]
    %v1088 = vld [vmem:[%s1085 + $0x8] sm:$0xf]
    %v1089 = vld [vmem:[%s1085 + $0xc] sm:$0xf]
    %v1090 = vld [vmem:[%s1085 + $0x10] sm:$0xf]
    %v1091 = vld [vmem:[%s1085 + $0x14] sm:$0xf]
    %v1092 = vld [vmem:[%s1085 + $0x18] sm:$0xf]
    %v1093 = vld [vmem:[%s1085 + $0x1c] sm:$0xf]
    %v1094 = vld [vmem:[%s1085 + $0x20] sm:$0xf]
    %v1095 = vld [vmem:[%s1085 + $0x24] sm:$0xf]
    %v1096 = vld [vmem:[%s1085 + $0x28] sm:$0xf]
    %v1097 = vld [vmem:[%s1085 + $0x2c] sm:$0xf]
    %v1098 = vld [vmem:[%s1085 + $0x30] sm:$0xf]
    %v1099 = vld [vmem:[%s1085 + $0x34] sm:$0xf]
    %v1100 = vld [vmem:[%s1085 + $0x38] sm:$0xf]
    %v1101 = vld [vmem:[%s1085 + $0x3c] sm:$0xf]
    %v1118 = vunpack.c.l.b16 %v1086
    %v1119 = vunpack.c.l.b16 %v1087
    %v1120 = vunpack.c.l.b16 %v1088
    %v1121 = vunpack.c.l.b16 %v1089
    %v1122 = vunpack.c.l.b16 %v1090
    %v1123 = vunpack.c.l.b16 %v1091
    %v1124 = vunpack.c.l.b16 %v1092
    %v1125 = vunpack.c.l.b16 %v1093
    %v1126 = vunpack.c.l.b16 %v1094
    %v1127 = vunpack.c.l.b16 %v1095
    %v1128 = vunpack.c.l.b16 %v1096
    %v1129 = vunpack.c.l.b16 %v1097
    %v1130 = vunpack.c.l.b16 %v1098
    %v1131 = vunpack.c.l.b16 %v1099
    %v1132 = vunpack.c.l.b16 %v1100
    %v1133 = vunpack.c.l.b16 %v1101
    %v1134 = vpack.c.b16 %v1119, %v1118
    %v1135 = vpack.c.b16 %v1121, %v1120
    %v1136 = vpack.c.b16 %v1123, %v1122
    %v1137 = vpack.c.b16 %v1125, %v1124
    %v1138 = vpack.c.b16 %v1127, %v1126
    %v1139 = vpack.c.b16 %v1129, %v1128
    %v1140 = vpack.c.b16 %v1131, %v1130
    %v1141 = vpack.c.b16 %v1133, %v1132
    %1150 = vmatprep.subr.bf16.mxu0 0
    %1151 = vmatpush1.bf16.msra.mxu0 %v1134
    %1152 = vmatprep.subr.bf16.mxu0 0
    %1153 = vmatpush1.bf16.msra.mxu0 %v1135
    %1154 = vmatprep.subr.bf16.mxu0 0
    %1155 = vmatpush1.bf16.msra.mxu0 %v1136
    %1156 = vmatprep.subr.bf16.mxu0 0
    %1157 = vmatpush1.bf16.msra.mxu0 %v1137
    %1158 = vmatprep.subr.bf16.mxu0 0
    %1159 = vmatpush1.bf16.msra.mxu0 %v1138
    %1160 = vmatprep.subr.bf16.mxu0 0
    %1161 = vmatpush1.bf16.msra.mxu0 %v1139
    %1162 = vmatprep.subr.bf16.mxu0 0
    %1163 = vmatpush1.bf16.msra.mxu0 %v1140
    %1164 = vmatprep.subr.bf16.mxu0 0
    %1165 = vmatpush1.bf16.msra.mxu0 %v1141
    %1166 = vmatprep.subr.bf16.mxu0 0
    %1167 = vmatpush1.bf16.msra.mxu0 0
    %1168 = vmatprep.subr.bf16.mxu0 0
    %1169 = vmatpush1.bf16.msra.mxu0 0
    %1170 = vmatprep.subr.bf16.mxu0 0
    %1171 = vmatpush1.bf16.msra.mxu0 0
    %1172 = vmatprep.subr.bf16.mxu0 0
    %1173 = vmatpush1.bf16.msra.mxu0 0
    %1174 = vmatprep.subr.bf16.mxu0 0
    %1175 = vmatpush1.bf16.msra.mxu0 0
    %1176 = vmatprep.subr.bf16.mxu0 0
    %1177 = vmatpush1.bf16.msra.mxu0 0
    %1178 = vmatprep.subr.bf16.mxu0 0
    %1179 = vmatpush1.bf16.msra.mxu0 0
    %1180 = vmatprep.subr.bf16.mxu0 0
    %1181 = vmatpush1.bf16.msra.mxu0 0
    %1182 = vmatprep.mubr.bf16.mxu0 0
    %1183 = vmatmul.mubr.bf16.gmra.mrb[0].mxu0 %v1081
    %v1184 = vpop.f32.mrb[0].mxu0
    %v1185 = vadd.f32 0.0, %v1184
    %v1186 = vpop.f32.mrb[0].mxu0
    %v1187 = vpop.f32.mrb[0].mxu0
    %v1188 = vadd.f32 0.0, %v1187
    %v1189 = vpop.f32.mrb[0].mxu0
    %1190 = vmatprep.mubr.bf16.mxu0 0
    %1191 = vmatmul.mubr.bf16.gmra.mrb[0].mxu0 %v1082
    %v1192 = vpop.f32.mrb[0].mxu0
    %v1193 = vadd.f32 0.0, %v1192
    %v1194 = vpop.f32.mrb[0].mxu0
    %v1195 = vpop.f32.mrb[0].mxu0
    %v1196 = vadd.f32 0.0, %v1195
    %v1197 = vpop.f32.mrb[0].mxu0
    %1198 = vmatprep.mubr.bf16.mxu0 0
    %1199 = vmatmul.mubr.bf16.gmra.mrb[0].mxu0 %v1083
    %v1200 = vpop.f32.mrb[0].mxu0
    %v1201 = vadd.f32 0.0, %v1200
    %v1202 = vpop.f32.mrb[0].mxu0
    %v1203 = vpop.f32.mrb[0].mxu0
    %v1204 = vadd.f32 0.0, %v1203
    %v1205 = vpop.f32.mrb[0].mxu0
    %1206 = vmatprep.mubr.bf16.mxu0 0
    %1207 = vmatmul.mubr.bf16.gmra.mrb[0].mxu0 %v1084
    %v1208 = vpop.f32.mrb[0].mxu0
    %v1209 = vadd.f32 0.0, %v1208
    %v1210 = vpop.f32.mrb[0].mxu0
    %v1211 = vpop.f32.mrb[0].mxu0
    %v1212 = vadd.f32 0.0, %v1211
    %v1213 = vpop.f32.mrb[0].mxu0
    %1214 = vdwg.mxu0
    %v1215 = vadd.f32 %v1040, %v1185
    %v1216 = vadd.f32 %v1041, %v1188
    %v1217 = vadd.f32 %v1042, %v1193
    %v1218 = vadd.f32 %v1043, %v1196
    %v1219 = vadd.f32 %v1044, %v1201
    %v1220 = vadd.f32 %v1045, %v1204
    %v1221 = vadd.f32 %v1046, %v1209
    %v1222 = vadd.f32 %v1047, %v1212
    %v1223 = vld [vmem:[#allocation7] sm:$0x1]
    %v1225 = vlaneseq
    %v1226 = vshrl.u32 %v1225, 7
    %v1227 = vsub.s32 0, %v1226
    %v1228 = vrot.slane %v1223, %v1227
    %v1230 = vadd.f32 %v1215, %v1228
    %v1231 = vadd.f32 %v1216, %v1228
    %v1232 = vadd.f32 %v1217, %v1228
    %v1233 = vadd.f32 %v1218, %v1228
    %v1234 = vadd.f32 %v1219, %v1228
    %v1235 = vadd.f32 %v1220, %v1228
    %v1236 = vadd.f32 %v1221, %v1228
    %v1237 = vadd.f32 %v1222, %v1228
    %v1238 = vmax.f32 %v1230, 0.0
    %v1239 = vmax.f32 %v1231, 0.0
    %v1240 = vmax.f32 %v1232, 0.0
    %v1241 = vmax.f32 %v1233, 0.0
    %v1242 = vmax.f32 %v1234, 0.0
    %v1243 = vmax.f32 %v1235, 0.0
    %v1244 = vmax.f32 %v1236, 0.0
    %v1245 = vmax.f32 %v1237, 0.0
    %v1246 = vpack.c.bf16 %v1238, %v1238
    %v1247 = vpack.c.bf16 %v1239, %v1239
    %v1248 = vpack.c.bf16 %v1240, %v1240
    %v1249 = vpack.c.bf16 %v1241, %v1241
    %v1250 = vpack.c.bf16 %v1242, %v1242
    %v1251 = vpack.c.bf16 %v1243, %v1243
    %v1252 = vpack.c.bf16 %v1244, %v1244
    %v1253 = vpack.c.bf16 %v1245, %v1245
    %v1254 = vld [vmem:[#allocation9] sm:$0xff]
    %v1255 = vld [vmem:[#allocation9 + $0x8] sm:$0xff]
    %v1256 = vld [vmem:[#allocation9 + $0x10] sm:$0xff]
    %v1257 = vld [vmem:[#allocation9 + $0x18] sm:$0xff]
    %v1258 = vld [vmem:[#allocation9 + $0x20] sm:$0xff]
    %v1259 = vld [vmem:[#allocation9 + $0x28] sm:$0xff]
    %v1260 = vld [vmem:[#allocation9 + $0x30] sm:$0xff]
    %v1261 = vld [vmem:[#allocation9 + $0x38] sm:$0xff]
    %v1262 = vld [vmem:[#allocation9 + $0x40] sm:$0xff]
    %v1263 = vld [vmem:[#allocation9 + $0x48] sm:$0xff]
    %v1264 = vld [vmem:[#allocation9 + $0x50] sm:$0xff]
    %v1265 = vld [vmem:[#allocation9 + $0x58] sm:$0xff]
    %v1266 = vld [vmem:[#allocation9 + $0x60] sm:$0xff]
    %v1267 = vld [vmem:[#allocation9 + $0x68] sm:$0xff]
    %v1268 = vld [vmem:[#allocation9 + $0x70] sm:$0xff]
    %v1269 = vld [vmem:[#allocation9 + $0x78] sm:$0xff]
    %v1270 = vld [vmem:[#allocation9 + $0x80] sm:$0xff]
    %v1271 = vld [vmem:[#allocation9 + $0x88] sm:$0xff]
    %v1272 = vld [vmem:[#allocation9 + $0x90] sm:$0xff]
    %v1273 = vld [vmem:[#allocation9 + $0x98] sm:$0xff]
    %v1274 = vld [vmem:[#allocation9 + $0xa0] sm:$0xff]
    %v1275 = vld [vmem:[#allocation9 + $0xa8] sm:$0xff]
    %v1276 = vld [vmem:[#allocation9 + $0xb0] sm:$0xff]
    %v1277 = vld [vmem:[#allocation9 + $0xb8] sm:$0xff]
    %v1278 = vld [vmem:[#allocation9 + $0xc0] sm:$0xff]
    %v1279 = vld [vmem:[#allocation9 + $0xc8] sm:$0xff]
    %v1280 = vld [vmem:[#allocation9 + $0xd0] sm:$0xff]
    %v1281 = vld [vmem:[#allocation9 + $0xd8] sm:$0xff]
    %v1282 = vld [vmem:[#allocation9 + $0xe0] sm:$0xff]
    %v1283 = vld [vmem:[#allocation9 + $0xe8] sm:$0xff]
    %v1284 = vld [vmem:[#allocation9 + $0xf0] sm:$0xff]
    %v1285 = vld [vmem:[#allocation9 + $0xf8] sm:$0xff]
    %v1286 = vld [vmem:[#allocation9 + $0x100] sm:$0xff]
    %v1287 = vld [vmem:[#allocation9 + $0x108] sm:$0xff]
    %v1288 = vld [vmem:[#allocation9 + $0x110] sm:$0xff]
    %v1289 = vld [vmem:[#allocation9 + $0x118] sm:$0xff]
    %v1290 = vld [vmem:[#allocation9 + $0x120] sm:$0xff]
    %v1291 = vld [vmem:[#allocation9 + $0x128] sm:$0xff]
    %v1292 = vld [vmem:[#allocation9 + $0x130] sm:$0xff]
    %v1293 = vld [vmem:[#allocation9 + $0x138] sm:$0xff]
    %v1294 = vld [vmem:[#allocation9 + $0x140] sm:$0xff]
    %v1295 = vld [vmem:[#allocation9 + $0x148] sm:$0xff]
    %v1296 = vld [vmem:[#allocation9 + $0x150] sm:$0xff]
    %v1297 = vld [vmem:[#allocation9 + $0x158] sm:$0xff]
    %v1298 = vld [vmem:[#allocation9 + $0x160] sm:$0xff]
    %v1299 = vld [vmem:[#allocation9 + $0x168] sm:$0xff]
    %v1300 = vld [vmem:[#allocation9 + $0x170] sm:$0xff]
    %v1301 = vld [vmem:[#allocation9 + $0x178] sm:$0xff]
    %v1302 = vld [vmem:[#allocation9 + $0x180] sm:$0xff]
    %v1303 = vld [vmem:[#allocation9 + $0x188] sm:$0xff]
    %v1304 = vld [vmem:[#allocation9 + $0x190] sm:$0xff]
    %v1305 = vld [vmem:[#allocation9 + $0x198] sm:$0xff]
    %v1306 = vld [vmem:[#allocation9 + $0x1a0] sm:$0xff]
    %v1307 = vld [vmem:[#allocation9 + $0x1a8] sm:$0xff]
    %v1308 = vld [vmem:[#allocation9 + $0x1b0] sm:$0xff]
    %v1309 = vld [vmem:[#allocation9 + $0x1b8] sm:$0xff]
    %v1310 = vld [vmem:[#allocation9 + $0x1c0] sm:$0xff]
    %v1311 = vld [vmem:[#allocation9 + $0x1c8] sm:$0xff]
    %v1312 = vld [vmem:[#allocation9 + $0x1d0] sm:$0xff]
    %v1313 = vld [vmem:[#allocation9 + $0x1d8] sm:$0xff]
    %v1314 = vld [vmem:[#allocation9 + $0x1e0] sm:$0xff]
    %v1315 = vld [vmem:[#allocation9 + $0x1e8] sm:$0xff]
    %v1316 = vld [vmem:[#allocation9 + $0x1f0] sm:$0xff]
    %v1317 = vld [vmem:[#allocation9 + $0x1f8] sm:$0xff]
    %s1318 = scalar_lea.vmem [#allocation9], 512
    %v1319 = vld [vmem:[%s1318] sm:$0xff]
    %v1320 = vld [vmem:[%s1318 + $0x8] sm:$0xff]
    %v1321 = vld [vmem:[%s1318 + $0x10] sm:$0xff]
    %v1322 = vld [vmem:[%s1318 + $0x18] sm:$0xff]
    %v1323 = vld [vmem:[%s1318 + $0x20] sm:$0xff]
    %v1324 = vld [vmem:[%s1318 + $0x28] sm:$0xff]
    %v1325 = vld [vmem:[%s1318 + $0x30] sm:$0xff]
    %v1326 = vld [vmem:[%s1318 + $0x38] sm:$0xff]
    %v1327 = vld [vmem:[%s1318 + $0x40] sm:$0xff]
    %v1328 = vld [vmem:[%s1318 + $0x48] sm:$0xff]
    %v1329 = vld [vmem:[%s1318 + $0x50] sm:$0xff]
    %v1330 = vld [vmem:[%s1318 + $0x58] sm:$0xff]
    %v1331 = vld [vmem:[%s1318 + $0x60] sm:$0xff]
    %v1332 = vld [vmem:[%s1318 + $0x68] sm:$0xff]
    %v1333 = vld [vmem:[%s1318 + $0x70] sm:$0xff]
    %v1334 = vld [vmem:[%s1318 + $0x78] sm:$0xff]
    %v1335 = vld [vmem:[%s1318 + $0x80] sm:$0xff]
    %v1336 = vld [vmem:[%s1318 + $0x88] sm:$0xff]
    %v1337 = vld [vmem:[%s1318 + $0x90] sm:$0xff]
    %v1338 = vld [vmem:[%s1318 + $0x98] sm:$0xff]
    %v1339 = vld [vmem:[%s1318 + $0xa0] sm:$0xff]
    %v1340 = vld [vmem:[%s1318 + $0xa8] sm:$0xff]
    %v1341 = vld [vmem:[%s1318 + $0xb0] sm:$0xff]
    %v1342 = vld [vmem:[%s1318 + $0xb8] sm:$0xff]
    %v1343 = vld [vmem:[%s1318 + $0xc0] sm:$0xff]
    %v1344 = vld [vmem:[%s1318 + $0xc8] sm:$0xff]
    %v1345 = vld [vmem:[%s1318 + $0xd0] sm:$0xff]
    %v1346 = vld [vmem:[%s1318 + $0xd8] sm:$0xff]
    %v1347 = vld [vmem:[%s1318 + $0xe0] sm:$0xff]
    %v1348 = vld [vmem:[%s1318 + $0xe8] sm:$0xff]
    %v1349 = vld [vmem:[%s1318 + $0xf0] sm:$0xff]
    %v1350 = vld [vmem:[%s1318 + $0xf8] sm:$0xff]
    %v1351 = vld [vmem:[%s1318 + $0x100] sm:$0xff]
    %v1352 = vld [vmem:[%s1318 + $0x108] sm:$0xff]
    %v1353 = vld [vmem:[%s1318 + $0x110] sm:$0xff]
    %v1354 = vld [vmem:[%s1318 + $0x118] sm:$0xff]
    %v1355 = vld [vmem:[%s1318 + $0x120] sm:$0xff]
    %v1356 = vld [vmem:[%s1318 + $0x128] sm:$0xff]
    %v1357 = vld [vmem:[%s1318 + $0x130] sm:$0xff]
    %v1358 = vld [vmem:[%s1318 + $0x138] sm:$0xff]
    %v1359 = vld [vmem:[%s1318 + $0x140] sm:$0xff]
    %v1360 = vld [vmem:[%s1318 + $0x148] sm:$0xff]
    %v1361 = vld [vmem:[%s1318 + $0x150] sm:$0xff]
    %v1362 = vld [vmem:[%s1318 + $0x158] sm:$0xff]
    %v1363 = vld [vmem:[%s1318 + $0x160] sm:$0xff]
    %v1364 = vld [vmem:[%s1318 + $0x168] sm:$0xff]
    %v1365 = vld [vmem:[%s1318 + $0x170] sm:$0xff]
    %v1366 = vld [vmem:[%s1318 + $0x178] sm:$0xff]
    %v1367 = vld [vmem:[%s1318 + $0x180] sm:$0xff]
    %v1368 = vld [vmem:[%s1318 + $0x188] sm:$0xff]
    %v1369 = vld [vmem:[%s1318 + $0x190] sm:$0xff]
    %v1370 = vld [vmem:[%s1318 + $0x198] sm:$0xff]
    %v1371 = vld [vmem:[%s1318 + $0x1a0] sm:$0xff]
    %v1372 = vld [vmem:[%s1318 + $0x1a8] sm:$0xff]
    %v1373 = vld [vmem:[%s1318 + $0x1b0] sm:$0xff]
    %v1374 = vld [vmem:[%s1318 + $0x1b8] sm:$0xff]
    %v1375 = vld [vmem:[%s1318 + $0x1c0] sm:$0xff]
    %v1376 = vld [vmem:[%s1318 + $0x1c8] sm:$0xff]
    %v1377 = vld [vmem:[%s1318 + $0x1d0] sm:$0xff]
    %v1378 = vld [vmem:[%s1318 + $0x1d8] sm:$0xff]
    %v1379 = vld [vmem:[%s1318 + $0x1e0] sm:$0xff]
    %v1380 = vld [vmem:[%s1318 + $0x1e8] sm:$0xff]
    %v1381 = vld [vmem:[%s1318 + $0x1f0] sm:$0xff]
    %v1382 = vld [vmem:[%s1318 + $0x1f8] sm:$0xff]
    %v1391 = vunpack.c.l.b16 %v1246
    %v1392 = vunpack.c.l.b16 %v1247
    %v1393 = vunpack.c.l.b16 %v1248
    %v1394 = vunpack.c.l.b16 %v1249
    %v1395 = vunpack.c.l.b16 %v1250
    %v1396 = vunpack.c.l.b16 %v1251
    %v1397 = vunpack.c.l.b16 %v1252
    %v1398 = vunpack.c.l.b16 %v1253
    %v1399 = vrot.slane %v1391, 1
    %vm1400 = vcmask 1041409
    %v1401 = vsel %vm1400, %v1392, %v1399
    %v1402 = vrot.slane %v1393, 7
    %vm1403 = vcmask 1042434
    %v1404 = vsel %vm1403, %v1402, %v1401
    %v1405 = vrot.slane %v1394, 6
    %vm1406 = vcmask 1043459
    %v1407 = vsel %vm1406, %v1405, %v1404
    %v1408 = vrot.slane %v1395, 5
    %vm1409 = vcmask 1044484
    %v1410 = vsel %vm1409, %v1408, %v1407
    %v1411 = vrot.slane %v1396, 4
    %vm1412 = vcmask 1045509
    %v1413 = vsel %vm1412, %v1411, %v1410
    %v1414 = vrot.slane %v1397, 3
    %vm1415 = vcmask 1046534
    %v1416 = vsel %vm1415, %v1414, %v1413
    %v1417 = vrot.slane %v1398, 2
    %vm1418 = vcmask 1047559
    %v1419 = vsel %vm1418, %v1417, %v1416
    %v1420 = vpack.c.b16 %v1419, %v1419
    %v1486 = vunpack.c.l.b16 %v1319
    %v1487 = vunpack.c.h.b16 %v1319
    %v1488 = vunpack.c.l.b16 %v1320
    %v1489 = vunpack.c.h.b16 %v1320
    %v1490 = vunpack.c.l.b16 %v1321
    %v1491 = vunpack.c.h.b16 %v1321
    %v1492 = vunpack.c.l.b16 %v1322
    %v1493 = vunpack.c.h.b16 %v1322
    %v1494 = vunpack.c.l.b16 %v1323
    %v1495 = vunpack.c.h.b16 %v1323
    %v1496 = vunpack.c.l.b16 %v1324
    %v1497 = vunpack.c.h.b16 %v1324
    %v1498 = vunpack.c.l.b16 %v1325
    %v1499 = vunpack.c.h.b16 %v1325
    %v1500 = vunpack.c.l.b16 %v1326
    %v1501 = vunpack.c.h.b16 %v1326
    %v1502 = vunpack.c.l.b16 %v1327
    %v1503 = vunpack.c.h.b16 %v1327
    %v1504 = vunpack.c.l.b16 %v1328
    %v1505 = vunpack.c.h.b16 %v1328
    %v1506 = vunpack.c.l.b16 %v1329
    %v1507 = vunpack.c.h.b16 %v1329
    %v1508 = vunpack.c.l.b16 %v1330
    %v1509 = vunpack.c.h.b16 %v1330
    %v1510 = vunpack.c.l.b16 %v1331
    %v1511 = vunpack.c.h.b16 %v1331
    %v1512 = vunpack.c.l.b16 %v1332
    %v1513 = vunpack.c.h.b16 %v1332
    %v1514 = vunpack.c.l.b16 %v1333
    %v1515 = vunpack.c.h.b16 %v1333
    %v1516 = vunpack.c.l.b16 %v1334
    %v1517 = vunpack.c.h.b16 %v1334
    %v1518 = vunpack.c.l.b16 %v1335
    %v1519 = vunpack.c.h.b16 %v1335
    %v1520 = vunpack.c.l.b16 %v1336
    %v1521 = vunpack.c.h.b16 %v1336
    %v1522 = vunpack.c.l.b16 %v1337
    %v1523 = vunpack.c.h.b16 %v1337
    %v1524 = vunpack.c.l.b16 %v1338
    %v1525 = vunpack.c.h.b16 %v1338
    %v1526 = vunpack.c.l.b16 %v1339
    %v1527 = vunpack.c.h.b16 %v1339
    %v1528 = vunpack.c.l.b16 %v1340
    %v1529 = vunpack.c.h.b16 %v1340
    %v1530 = vunpack.c.l.b16 %v1341
    %v1531 = vunpack.c.h.b16 %v1341
    %v1532 = vunpack.c.l.b16 %v1342
    %v1533 = vunpack.c.h.b16 %v1342
    %v1534 = vunpack.c.l.b16 %v1343
    %v1535 = vunpack.c.h.b16 %v1343
    %v1536 = vunpack.c.l.b16 %v1344
    %v1537 = vunpack.c.h.b16 %v1344
    %v1538 = vunpack.c.l.b16 %v1345
    %v1539 = vunpack.c.h.b16 %v1345
    %v1540 = vunpack.c.l.b16 %v1346
    %v1541 = vunpack.c.h.b16 %v1346
    %v1542 = vunpack.c.l.b16 %v1347
    %v1543 = vunpack.c.h.b16 %v1347
    %v1544 = vunpack.c.l.b16 %v1348
    %v1545 = vunpack.c.h.b16 %v1348
    %v1546 = vunpack.c.l.b16 %v1349
    %v1547 = vunpack.c.h.b16 %v1349
    %v1548 = vunpack.c.l.b16 %v1350
    %v1549 = vunpack.c.h.b16 %v1350
    %v1550 = vunpack.c.l.b16 %v1351
    %v1551 = vunpack.c.h.b16 %v1351
    %v1552 = vunpack.c.l.b16 %v1352
    %v1553 = vunpack.c.h.b16 %v1352
    %v1554 = vunpack.c.l.b16 %v1353
    %v1555 = vunpack.c.h.b16 %v1353
    %v1556 = vunpack.c.l.b16 %v1354
    %v1557 = vunpack.c.h.b16 %v1354
    %v1558 = vunpack.c.l.b16 %v1355
    %v1559 = vunpack.c.h.b16 %v1355
    %v1560 = vunpack.c.l.b16 %v1356
    %v1561 = vunpack.c.h.b16 %v1356
    %v1562 = vunpack.c.l.b16 %v1357
    %v1563 = vunpack.c.h.b16 %v1357
    %v1564 = vunpack.c.l.b16 %v1358
    %v1565 = vunpack.c.h.b16 %v1358
    %v1566 = vunpack.c.l.b16 %v1359
    %v1567 = vunpack.c.h.b16 %v1359
    %v1568 = vunpack.c.l.b16 %v1360
    %v1569 = vunpack.c.h.b16 %v1360
    %v1570 = vunpack.c.l.b16 %v1361
    %v1571 = vunpack.c.h.b16 %v1361
    %v1572 = vunpack.c.l.b16 %v1362
    %v1573 = vunpack.c.h.b16 %v1362
    %v1574 = vunpack.c.l.b16 %v1363
    %v1575 = vunpack.c.h.b16 %v1363
    %v1576 = vunpack.c.l.b16 %v1364
    %v1577 = vunpack.c.h.b16 %v1364
    %v1578 = vunpack.c.l.b16 %v1365
    %v1579 = vunpack.c.h.b16 %v1365
    %v1580 = vunpack.c.l.b16 %v1366
    %v1581 = vunpack.c.h.b16 %v1366
    %v1582 = vunpack.c.l.b16 %v1367
    %v1583 = vunpack.c.h.b16 %v1367
    %v1584 = vunpack.c.l.b16 %v1368
    %v1585 = vunpack.c.h.b16 %v1368
    %v1586 = vunpack.c.l.b16 %v1369
    %v1587 = vunpack.c.h.b16 %v1369
    %v1588 = vunpack.c.l.b16 %v1370
    %v1589 = vunpack.c.h.b16 %v1370
    %v1590 = vunpack.c.l.b16 %v1371
    %v1591 = vunpack.c.h.b16 %v1371
    %v1592 = vunpack.c.l.b16 %v1372
    %v1593 = vunpack.c.h.b16 %v1372
    %v1594 = vunpack.c.l.b16 %v1373
    %v1595 = vunpack.c.h.b16 %v1373
    %v1596 = vunpack.c.l.b16 %v1374
    %v1597 = vunpack.c.h.b16 %v1374
    %v1598 = vunpack.c.l.b16 %v1375
    %v1599 = vunpack.c.h.b16 %v1375
    %v1600 = vunpack.c.l.b16 %v1376
    %v1601 = vunpack.c.h.b16 %v1376
    %v1602 = vunpack.c.l.b16 %v1377
    %v1603 = vunpack.c.h.b16 %v1377
    %v1604 = vunpack.c.l.b16 %v1378
    %v1605 = vunpack.c.h.b16 %v1378
    %v1606 = vunpack.c.l.b16 %v1379
    %v1607 = vunpack.c.h.b16 %v1379
    %v1608 = vunpack.c.l.b16 %v1380
    %v1609 = vunpack.c.h.b16 %v1380
    %v1610 = vunpack.c.l.b16 %v1381
    %v1611 = vunpack.c.h.b16 %v1381
    %v1612 = vunpack.c.l.b16 %v1382
    %v1613 = vunpack.c.h.b16 %v1382
    %v1614 = vpack.c.b16 %v1494, %v1486
    %v1615 = vpack.c.b16 %v1495, %v1487
    %v1616 = vpack.c.b16 %v1496, %v1488
    %v1617 = vpack.c.b16 %v1497, %v1489
    %v1618 = vpack.c.b16 %v1498, %v1490
    %v1619 = vpack.c.b16 %v1499, %v1491
    %v1620 = vpack.c.b16 %v1500, %v1492
    %v1621 = vpack.c.b16 %v1501, %v1493
    %v1622 = vpack.c.b16 %v1510, %v1502
    %v1623 = vpack.c.b16 %v1511, %v1503
    %v1624 = vpack.c.b16 %v1512, %v1504
    %v1625 = vpack.c.b16 %v1513, %v1505
    %v1626 = vpack.c.b16 %v1514, %v1506
    %v1627 = vpack.c.b16 %v1515, %v1507
    %v1628 = vpack.c.b16 %v1516, %v1508
    %v1629 = vpack.c.b16 %v1517, %v1509
    %v1630 = vpack.c.b16 %v1526, %v1518
    %v1631 = vpack.c.b16 %v1527, %v1519
    %v1632 = vpack.c.b16 %v1528, %v1520
    %v1633 = vpack.c.b16 %v1529, %v1521
    %v1634 = vpack.c.b16 %v1530, %v1522
    %v1635 = vpack.c.b16 %v1531, %v1523
    %v1636 = vpack.c.b16 %v1532, %v1524
    %v1637 = vpack.c.b16 %v1533, %v1525
    %v1638 = vpack.c.b16 %v1542, %v1534
    %v1639 = vpack.c.b16 %v1543, %v1535
    %v1640 = vpack.c.b16 %v1544, %v1536
    %v1641 = vpack.c.b16 %v1545, %v1537
    %v1642 = vpack.c.b16 %v1546, %v1538
    %v1643 = vpack.c.b16 %v1547, %v1539
    %v1644 = vpack.c.b16 %v1548, %v1540
    %v1645 = vpack.c.b16 %v1549, %v1541
    %v1646 = vpack.c.b16 %v1558, %v1550
    %v1647 = vpack.c.b16 %v1559, %v1551
    %v1648 = vpack.c.b16 %v1560, %v1552
    %v1649 = vpack.c.b16 %v1561, %v1553
    %v1650 = vpack.c.b16 %v1562, %v1554
    %v1651 = vpack.c.b16 %v1563, %v1555
    %v1652 = vpack.c.b16 %v1564, %v1556
    %v1653 = vpack.c.b16 %v1565, %v1557
    %v1654 = vpack.c.b16 %v1574, %v1566
    %v1655 = vpack.c.b16 %v1575, %v1567
    %v1656 = vpack.c.b16 %v1576, %v1568
    %v1657 = vpack.c.b16 %v1577, %v1569
    %v1658 = vpack.c.b16 %v1578, %v1570
    %v1659 = vpack.c.b16 %v1579, %v1571
    %v1660 = vpack.c.b16 %v1580, %v1572
    %v1661 = vpack.c.b16 %v1581, %v1573
    %v1662 = vpack.c.b16 %v1590, %v1582
    %v1663 = vpack.c.b16 %v1591, %v1583
    %v1664 = vpack.c.b16 %v1592, %v1584
    %v1665 = vpack.c.b16 %v1593, %v1585
    %v1666 = vpack.c.b16 %v1594, %v1586
    %v1667 = vpack.c.b16 %v1595, %v1587
    %v1668 = vpack.c.b16 %v1596, %v1588
    %v1669 = vpack.c.b16 %v1597, %v1589
    %v1670 = vpack.c.b16 %v1606, %v1598
    %v1671 = vpack.c.b16 %v1607, %v1599
    %v1672 = vpack.c.b16 %v1608, %v1600
    %v1673 = vpack.c.b16 %v1609, %v1601
    %v1674 = vpack.c.b16 %v1610, %v1602
    %v1675 = vpack.c.b16 %v1611, %v1603
    %v1676 = vpack.c.b16 %v1612, %v1604
    %v1677 = vpack.c.b16 %v1613, %v1605
    %1742 = vmatprep.subr.bf16.mxu0 %v1615
    %1743 = vmatpush1.bf16.msra.mxu0 %v1614
    %1744 = vmatprep.subr.bf16.mxu0 %v1623
    %1745 = vmatpush1.bf16.msra.mxu0 %v1622
    %1746 = vmatprep.subr.bf16.mxu0 %v1631
    %1747 = vmatpush1.bf16.msra.mxu0 %v1630
    %1748 = vmatprep.subr.bf16.mxu0 %v1639
    %1749 = vmatpush1.bf16.msra.mxu0 %v1638
    %1750 = vmatprep.subr.bf16.mxu0 %v1647
    %1751 = vmatpush1.bf16.msra.mxu0 %v1646
    %1752 = vmatprep.subr.bf16.mxu0 %v1655
    %1753 = vmatpush1.bf16.msra.mxu0 %v1654
    %1754 = vmatprep.subr.bf16.mxu0 %v1663
    %1755 = vmatpush1.bf16.msra.mxu0 %v1662
    %1756 = vmatprep.subr.bf16.mxu0 %v1671
    %1757 = vmatpush1.bf16.msra.mxu0 %v1670
    %1758 = vmatprep.subr.bf16.mxu0 0
    %1759 = vmatpush1.bf16.msra.mxu0 0
    %1760 = vmatprep.subr.bf16.mxu0 0
    %1761 = vmatpush1.bf16.msra.mxu0 0
    %1762 = vmatprep.subr.bf16.mxu0 0
    %1763 = vmatpush1.bf16.msra.mxu0 0
    %1764 = vmatprep.subr.bf16.mxu0 0
    %1765 = vmatpush1.bf16.msra.mxu0 0
    %1766 = vmatprep.subr.bf16.mxu0 0
    %1767 = vmatpush1.bf16.msra.mxu0 0
    %1768 = vmatprep.subr.bf16.mxu0 0
    %1769 = vmatpush1.bf16.msra.mxu0 0
    %1770 = vmatprep.subr.bf16.mxu0 0
    %1771 = vmatpush1.bf16.msra.mxu0 0
    %1772 = vmatprep.subr.bf16.mxu0 0
    %1773 = vmatpush1.bf16.msra.mxu0 0
    %1774 = vmatprep.mubr.bf16.mxu0 0
    %1775 = vmatmul.mubr.bf16.gmra.mrb[0].mxu0 %v1420
    %v1776 = vpop.f32.mrb[0].mxu0
    %v1777 = vadd.f32 0.0, %v1776
    %v1778 = vpop.f32.mrb[0].mxu0
    %v1779 = vadd.f32 0.0, %v1778
    %v1780 = vpop.f32.mrb[0].mxu0
    %v1781 = vpop.f32.mrb[0].mxu0
    %1782 = vdwg.mxu0
    %1783 = vmatprep.subr.bf16.mxu0 %v1617
    %1784 = vmatpush1.bf16.msra.mxu0 %v1616
    %1785 = vmatprep.subr.bf16.mxu0 %v1625
    %1786 = vmatpush1.bf16.msra.mxu0 %v1624
    %1787 = vmatprep.subr.bf16.mxu0 %v1633
    %1788 = vmatpush1.bf16.msra.mxu0 %v1632
    %1789 = vmatprep.subr.bf16.mxu0 %v1641
    %1790 = vmatpush1.bf16.msra.mxu0 %v1640
    %1791 = vmatprep.subr.bf16.mxu0 %v1649
    %1792 = vmatpush1.bf16.msra.mxu0 %v1648
    %1793 = vmatprep.subr.bf16.mxu0 %v1657
    %1794 = vmatpush1.bf16.msra.mxu0 %v1656
    %1795 = vmatprep.subr.bf16.mxu0 %v1665
    %1796 = vmatpush1.bf16.msra.mxu0 %v1664
    %1797 = vmatprep.subr.bf16.mxu0 %v1673
    %1798 = vmatpush1.bf16.msra.mxu0 %v1672
    %1799 = vmatprep.subr.bf16.mxu0 0
    %1800 = vmatpush1.bf16.msra.mxu0 0
    %1801 = vmatprep.subr.bf16.mxu0 0
    %1802 = vmatpush1.bf16.msra.mxu0 0
    %1803 = vmatprep.subr.bf16.mxu0 0
    %1804 = vmatpush1.bf16.msra.mxu0 0
    %1805 = vmatprep.subr.bf16.mxu0 0
    %1806 = vmatpush1.bf16.msra.mxu0 0
    %1807 = vmatprep.subr.bf16.mxu0 0
    %1808 = vmatpush1.bf16.msra.mxu0 0
    %1809 = vmatprep.subr.bf16.mxu0 0
    %1810 = vmatpush1.bf16.msra.mxu0 0
    %1811 = vmatprep.subr.bf16.mxu0 0
    %1812 = vmatpush1.bf16.msra.mxu0 0
    %1813 = vmatprep.subr.bf16.mxu0 0
    %1814 = vmatpush1.bf16.msra.mxu0 0
    %1815 = vmatprep.mubr.bf16.mxu0 0
    %1816 = vmatmul.mubr.bf16.gmra.mrb[0].mxu0 %v1420
    %v1817 = vpop.f32.mrb[0].mxu0
    %v1818 = vadd.f32 0.0, %v1817
    %v1819 = vpop.f32.mrb[0].mxu0
    %v1820 = vadd.f32 0.0, %v1819
    %v1821 = vpop.f32.mrb[0].mxu0
    %v1822 = vpop.f32.mrb[0].mxu0
    %1823 = vdwg.mxu0
    %1824 = vmatprep.subr.bf16.mxu0 %v1619
    %1825 = vmatpush1.bf16.msra.mxu0 %v1618
    %1826 = vmatprep.subr.bf16.mxu0 %v1627
    %1827 = vmatpush1.bf16.msra.mxu0 %v1626
    %1828 = vmatprep.subr.bf16.mxu0 %v1635
    %1829 = vmatpush1.bf16.msra.mxu0 %v1634
    %1830 = vmatprep.subr.bf16.mxu0 %v1643
    %1831 = vmatpush1.bf16.msra.mxu0 %v1642
    %1832 = vmatprep.subr.bf16.mxu0 %v1651
    %1833 = vmatpush1.bf16.msra.mxu0 %v1650
    %1834 = vmatprep.subr.bf16.mxu0 %v1659
    %1835 = vmatpush1.bf16.msra.mxu0 %v1658
    %1836 = vmatprep.subr.bf16.mxu0 %v1667
    %1837 = vmatpush1.bf16.msra.mxu0 %v1666
    %1838 = vmatprep.subr.bf16.mxu0 %v1675
    %1839 = vmatpush1.bf16.msra.mxu0 %v1674
    %1840 = vmatprep.subr.bf16.mxu0 0
    %1841 = vmatpush1.bf16.msra.mxu0 0
    %1842 = vmatprep.subr.bf16.mxu0 0
    %1843 = vmatpush1.bf16.msra.mxu0 0
    %1844 = vmatprep.subr.bf16.mxu0 0
    %1845 = vmatpush1.bf16.msra.mxu0 0
    %1846 = vmatprep.subr.bf16.mxu0 0
    %1847 = vmatpush1.bf16.msra.mxu0 0
    %1848 = vmatprep.subr.bf16.mxu0 0
    %1849 = vmatpush1.bf16.msra.mxu0 0
    %1850 = vmatprep.subr.bf16.mxu0 0
    %1851 = vmatpush1.bf16.msra.mxu0 0
    %1852 = vmatprep.subr.bf16.mxu0 0
    %1853 = vmatpush1.bf16.msra.mxu0 0
    %1854 = vmatprep.subr.bf16.mxu0 0
    %1855 = vmatpush1.bf16.msra.mxu0 0
    %1856 = vmatprep.mubr.bf16.mxu0 0
    %1857 = vmatmul.mubr.bf16.gmra.mrb[0].mxu0 %v1420
    %v1858 = vpop.f32.mrb[0].mxu0
    %v1859 = vadd.f32 0.0, %v1858
    %v1860 = vpop.f32.mrb[0].mxu0
    %v1861 = vadd.f32 0.0, %v1860
    %v1862 = vpop.f32.mrb[0].mxu0
    %v1863 = vpop.f32.mrb[0].mxu0
    %1864 = vdwg.mxu0
    %1865 = vmatprep.subr.bf16.mxu0 %v1621
    %1866 = vmatpush1.bf16.msra.mxu0 %v1620
    %1867 = vmatprep.subr.bf16.mxu0 %v1629
    %1868 = vmatpush1.bf16.msra.mxu0 %v1628
    %1869 = vmatprep.subr.bf16.mxu0 %v1637
    %1870 = vmatpush1.bf16.msra.mxu0 %v1636
    %1871 = vmatprep.subr.bf16.mxu0 %v1645
    %1872 = vmatpush1.bf16.msra.mxu0 %v1644
    %1873 = vmatprep.subr.bf16.mxu0 %v1653
    %1874 = vmatpush1.bf16.msra.mxu0 %v1652
    %1875 = vmatprep.subr.bf16.mxu0 %v1661
    %1876 = vmatpush1.bf16.msra.mxu0 %v1660
    %1877 = vmatprep.subr.bf16.mxu0 %v1669
    %1878 = vmatpush1.bf16.msra.mxu0 %v1668
    %1879 = vmatprep.subr.bf16.mxu0 %v1677
    %1880 = vmatpush1.bf16.msra.mxu0 %v1676
    %1881 = vmatprep.subr.bf16.mxu0 0
    %1882 = vmatpush1.bf16.msra.mxu0 0
    %1883 = vmatprep.subr.bf16.mxu0 0
    %1884 = vmatpush1.bf16.msra.mxu0 0
    %1885 = vmatprep.subr.bf16.mxu0 0
    %1886 = vmatpush1.bf16.msra.mxu0 0
    %1887 = vmatprep.subr.bf16.mxu0 0
    %1888 = vmatpush1.bf16.msra.mxu0 0
    %1889 = vmatprep.subr.bf16.mxu0 0
    %1890 = vmatpush1.bf16.msra.mxu0 0
    %1891 = vmatprep.subr.bf16.mxu0 0
    %1892 = vmatpush1.bf16.msra.mxu0 0
    %1893 = vmatprep.subr.bf16.mxu0 0
    %1894 = vmatpush1.bf16.msra.mxu0 0
    %1895 = vmatprep.subr.bf16.mxu0 0
    %1896 = vmatpush1.bf16.msra.mxu0 0
    %1897 = vmatprep.mubr.bf16.mxu0 0
    %1898 = vmatmul.mubr.bf16.gmra.mrb[0].mxu0 %v1420
    %v1899 = vpop.f32.mrb[0].mxu0
    %v1900 = vadd.f32 0.0, %v1899
    %v1901 = vpop.f32.mrb[0].mxu0
    %v1902 = vadd.f32 0.0, %v1901
    %v1903 = vpop.f32.mrb[0].mxu0
    %v1904 = vpop.f32.mrb[0].mxu0
    %1905 = vdwg.mxu0
    %v1906 = vrot.slane %v1392, 7
    %v1907 = vsel %vm1400, %v1906, %v1391
    %v1908 = vrot.slane %v1393, 6
    %v1909 = vsel %vm1403, %v1908, %v1907
    %v1910 = vrot.slane %v1394, 5
    %v1911 = vsel %vm1406, %v1910, %v1909
    %v1912 = vrot.slane %v1395, 4
    %v1913 = vsel %vm1409, %v1912, %v1911
    %v1914 = vrot.slane %v1396, 3
    %v1915 = vsel %vm1412, %v1914, %v1913
    %v1916 = vrot.slane %v1397, 2
    %v1917 = vsel %vm1415, %v1916, %v1915
    %v1918 = vrot.slane %v1398, 1
    %v1919 = vsel %vm1418, %v1918, %v1917
    %v1920 = vpack.c.b16 %v1919, %v1919
    %v1986 = vunpack.c.l.b16 %v1254
    %v1987 = vunpack.c.h.b16 %v1254
    %v1988 = vunpack.c.l.b16 %v1255
    %v1989 = vunpack.c.h.b16 %v1255
    %v1990 = vunpack.c.l.b16 %v1256
    %v1991 = vunpack.c.h.b16 %v1256
    %v1992 = vunpack.c.l.b16 %v1257
    %v1993 = vunpack.c.h.b16 %v1257
    %v1994 = vunpack.c.l.b16 %v1258
    %v1995 = vunpack.c.h.b16 %v1258
    %v1996 = vunpack.c.l.b16 %v1259
    %v1997 = vunpack.c.h.b16 %v1259
    %v1998 = vunpack.c.l.b16 %v1260
    %v1999 = vunpack.c.h.b16 %v1260
    %v2000 = vunpack.c.l.b16 %v1261
    %v2001 = vunpack.c.h.b16 %v1261
    %v2002 = vunpack.c.l.b16 %v1262
    %v2003 = vunpack.c.h.b16 %v1262
    %v2004 = vunpack.c.l.b16 %v1263
    %v2005 = vunpack.c.h.b16 %v1263
    %v2006 = vunpack.c.l.b16 %v1264
    %v2007 = vunpack.c.h.b16 %v1264
    %v2008 = vunpack.c.l.b16 %v1265
    %v2009 = vunpack.c.h.b16 %v1265
    %v2010 = vunpack.c.l.b16 %v1266
    %v2011 = vunpack.c.h.b16 %v1266
    %v2012 = vunpack.c.l.b16 %v1267
    %v2013 = vunpack.c.h.b16 %v1267
    %v2014 = vunpack.c.l.b16 %v1268
    %v2015 = vunpack.c.h.b16 %v1268
    %v2016 = vunpack.c.l.b16 %v1269
    %v2017 = vunpack.c.h.b16 %v1269
    %v2018 = vunpack.c.l.b16 %v1270
    %v2019 = vunpack.c.h.b16 %v1270
    %v2020 = vunpack.c.l.b16 %v1271
    %v2021 = vunpack.c.h.b16 %v1271
    %v2022 = vunpack.c.l.b16 %v1272
    %v2023 = vunpack.c.h.b16 %v1272
    %v2024 = vunpack.c.l.b16 %v1273
    %v2025 = vunpack.c.h.b16 %v1273
    %v2026 = vunpack.c.l.b16 %v1274
    %v2027 = vunpack.c.h.b16 %v1274
    %v2028 = vunpack.c.l.b16 %v1275
    %v2029 = vunpack.c.h.b16 %v1275
    %v2030 = vunpack.c.l.b16 %v1276
    %v2031 = vunpack.c.h.b16 %v1276
    %v2032 = vunpack.c.l.b16 %v1277
    %v2033 = vunpack.c.h.b16 %v1277
    %v2034 = vunpack.c.l.b16 %v1278
    %v2035 = vunpack.c.h.b16 %v1278
    %v2036 = vunpack.c.l.b16 %v1279
    %v2037 = vunpack.c.h.b16 %v1279
    %v2038 = vunpack.c.l.b16 %v1280
    %v2039 = vunpack.c.h.b16 %v1280
    %v2040 = vunpack.c.l.b16 %v1281
    %v2041 = vunpack.c.h.b16 %v1281
    %v2042 = vunpack.c.l.b16 %v1282
    %v2043 = vunpack.c.h.b16 %v1282
    %v2044 = vunpack.c.l.b16 %v1283
    %v2045 = vunpack.c.h.b16 %v1283
    %v2046 = vunpack.c.l.b16 %v1284
    %v2047 = vunpack.c.h.b16 %v1284
    %v2048 = vunpack.c.l.b16 %v1285
    %v2049 = vunpack.c.h.b16 %v1285
    %v2050 = vunpack.c.l.b16 %v1286
    %v2051 = vunpack.c.h.b16 %v1286
    %v2052 = vunpack.c.l.b16 %v1287
    %v2053 = vunpack.c.h.b16 %v1287
    %v2054 = vunpack.c.l.b16 %v1288
    %v2055 = vunpack.c.h.b16 %v1288
    %v2056 = vunpack.c.l.b16 %v1289
    %v2057 = vunpack.c.h.b16 %v1289
    %v2058 = vunpack.c.l.b16 %v1290
    %v2059 = vunpack.c.h.b16 %v1290
    %v2060 = vunpack.c.l.b16 %v1291
    %v2061 = vunpack.c.h.b16 %v1291
    %v2062 = vunpack.c.l.b16 %v1292
    %v2063 = vunpack.c.h.b16 %v1292
    %v2064 = vunpack.c.l.b16 %v1293
    %v2065 = vunpack.c.h.b16 %v1293
    %v2066 = vunpack.c.l.b16 %v1294
    %v2067 = vunpack.c.h.b16 %v1294
    %v2068 = vunpack.c.l.b16 %v1295
    %v2069 = vunpack.c.h.b16 %v1295
    %v2070 = vunpack.c.l.b16 %v1296
    %v2071 = vunpack.c.h.b16 %v1296
    %v2072 = vunpack.c.l.b16 %v1297
    %v2073 = vunpack.c.h.b16 %v1297
    %v2074 = vunpack.c.l.b16 %v1298
    %v2075 = vunpack.c.h.b16 %v1298
    %v2076 = vunpack.c.l.b16 %v1299
    %v2077 = vunpack.c.h.b16 %v1299
    %v2078 = vunpack.c.l.b16 %v1300
    %v2079 = vunpack.c.h.b16 %v1300
    %v2080 = vunpack.c.l.b16 %v1301
    %v2081 = vunpack.c.h.b16 %v1301
    %v2082 = vunpack.c.l.b16 %v1302
    %v2083 = vunpack.c.h.b16 %v1302
    %v2084 = vunpack.c.l.b16 %v1303
    %v2085 = vunpack.c.h.b16 %v1303
    %v2086 = vunpack.c.l.b16 %v1304
    %v2087 = vunpack.c.h.b16 %v1304
    %v2088 = vunpack.c.l.b16 %v1305
    %v2089 = vunpack.c.h.b16 %v1305
    %v2090 = vunpack.c.l.b16 %v1306
    %v2091 = vunpack.c.h.b16 %v1306
    %v2092 = vunpack.c.l.b16 %v1307
    %v2093 = vunpack.c.h.b16 %v1307
    %v2094 = vunpack.c.l.b16 %v1308
    %v2095 = vunpack.c.h.b16 %v1308
    %v2096 = vunpack.c.l.b16 %v1309
    %v2097 = vunpack.c.h.b16 %v1309
    %v2098 = vunpack.c.l.b16 %v1310
    %v2099 = vunpack.c.h.b16 %v1310
    %v2100 = vunpack.c.l.b16 %v1311
    %v2101 = vunpack.c.h.b16 %v1311
    %v2102 = vunpack.c.l.b16 %v1312
    %v2103 = vunpack.c.h.b16 %v1312
    %v2104 = vunpack.c.l.b16 %v1313
    %v2105 = vunpack.c.h.b16 %v1313
    %v2106 = vunpack.c.l.b16 %v1314
    %v2107 = vunpack.c.h.b16 %v1314
    %v2108 = vunpack.c.l.b16 %v1315
    %v2109 = vunpack.c.h.b16 %v1315
    %v2110 = vunpack.c.l.b16 %v1316
    %v2111 = vunpack.c.h.b16 %v1316
    %v2112 = vunpack.c.l.b16 %v1317
    %v2113 = vunpack.c.h.b16 %v1317
    %v2114 = vpack.c.b16 %v1994, %v1986
    %v2115 = vpack.c.b16 %v1995, %v1987
    %v2116 = vpack.c.b16 %v1996, %v1988
    %v2117 = vpack.c.b16 %v1997, %v1989
    %v2118 = vpack.c.b16 %v1998, %v1990
    %v2119 = vpack.c.b16 %v1999, %v1991
    %v2120 = vpack.c.b16 %v2000, %v1992
    %v2121 = vpack.c.b16 %v2001, %v1993
    %v2122 = vpack.c.b16 %v2010, %v2002
    %v2123 = vpack.c.b16 %v2011, %v2003
    %v2124 = vpack.c.b16 %v2012, %v2004
    %v2125 = vpack.c.b16 %v2013, %v2005
    %v2126 = vpack.c.b16 %v2014, %v2006
    %v2127 = vpack.c.b16 %v2015, %v2007
    %v2128 = vpack.c.b16 %v2016, %v2008
    %v2129 = vpack.c.b16 %v2017, %v2009
    %v2130 = vpack.c.b16 %v2026, %v2018
    %v2131 = vpack.c.b16 %v2027, %v2019
    %v2132 = vpack.c.b16 %v2028, %v2020
    %v2133 = vpack.c.b16 %v2029, %v2021
    %v2134 = vpack.c.b16 %v2030, %v2022
    %v2135 = vpack.c.b16 %v2031, %v2023
    %v2136 = vpack.c.b16 %v2032, %v2024
    %v2137 = vpack.c.b16 %v2033, %v2025
    %v2138 = vpack.c.b16 %v2042, %v2034
    %v2139 = vpack.c.b16 %v2043, %v2035
    %v2140 = vpack.c.b16 %v2044, %v2036
    %v2141 = vpack.c.b16 %v2045, %v2037
    %v2142 = vpack.c.b16 %v2046, %v2038
    %v2143 = vpack.c.b16 %v2047, %v2039
    %v2144 = vpack.c.b16 %v2048, %v2040
    %v2145 = vpack.c.b16 %v2049, %v2041
    %v2146 = vpack.c.b16 %v2058, %v2050
    %v2147 = vpack.c.b16 %v2059, %v2051
    %v2148 = vpack.c.b16 %v2060, %v2052
    %v2149 = vpack.c.b16 %v2061, %v2053
    %v2150 = vpack.c.b16 %v2062, %v2054
    %v2151 = vpack.c.b16 %v2063, %v2055
    %v2152 = vpack.c.b16 %v2064, %v2056
    %v2153 = vpack.c.b16 %v2065, %v2057
    %v2154 = vpack.c.b16 %v2074, %v2066
    %v2155 = vpack.c.b16 %v2075, %v2067
    %v2156 = vpack.c.b16 %v2076, %v2068
    %v2157 = vpack.c.b16 %v2077, %v2069
    %v2158 = vpack.c.b16 %v2078, %v2070
    %v2159 = vpack.c.b16 %v2079, %v2071
    %v2160 = vpack.c.b16 %v2080, %v2072
    %v2161 = vpack.c.b16 %v2081, %v2073
    %v2162 = vpack.c.b16 %v2090, %v2082
    %v2163 = vpack.c.b16 %v2091, %v2083
    %v2164 = vpack.c.b16 %v2092, %v2084
    %v2165 = vpack.c.b16 %v2093, %v2085
    %v2166 = vpack.c.b16 %v2094, %v2086
    %v2167 = vpack.c.b16 %v2095, %v2087
    %v2168 = vpack.c.b16 %v2096, %v2088
    %v2169 = vpack.c.b16 %v2097, %v2089
    %v2170 = vpack.c.b16 %v2106, %v2098
    %v2171 = vpack.c.b16 %v2107, %v2099
    %v2172 = vpack.c.b16 %v2108, %v2100
    %v2173 = vpack.c.b16 %v2109, %v2101
    %v2174 = vpack.c.b16 %v2110, %v2102
    %v2175 = vpack.c.b16 %v2111, %v2103
    %v2176 = vpack.c.b16 %v2112, %v2104
    %v2177 = vpack.c.b16 %v2113, %v2105
    %2242 = vmatprep.subr.bf16.mxu0 %v2115
    %2243 = vmatpush1.bf16.msra.mxu0 %v2114
    %2244 = vmatprep.subr.bf16.mxu0 %v2123
    %2245 = vmatpush1.bf16.msra.mxu0 %v2122
    %2246 = vmatprep.subr.bf16.mxu0 %v2131
    %2247 = vmatpush1.bf16.msra.mxu0 %v2130
    %2248 = vmatprep.subr.bf16.mxu0 %v2139
    %2249 = vmatpush1.bf16.msra.mxu0 %v2138
    %2250 = vmatprep.subr.bf16.mxu0 %v2147
    %2251 = vmatpush1.bf16.msra.mxu0 %v2146
    %2252 = vmatprep.subr.bf16.mxu0 %v2155
    %2253 = vmatpush1.bf16.msra.mxu0 %v2154
    %2254 = vmatprep.subr.bf16.mxu0 %v2163
    %2255 = vmatpush1.bf16.msra.mxu0 %v2162
    %2256 = vmatprep.subr.bf16.mxu0 %v2171
    %2257 = vmatpush1.bf16.msra.mxu0 %v2170
    %2258 = vmatprep.subr.bf16.mxu0 0
    %2259 = vmatpush1.bf16.msra.mxu0 0
    %2260 = vmatprep.subr.bf16.mxu0 0
    %2261 = vmatpush1.bf16.msra.mxu0 0
    %2262 = vmatprep.subr.bf16.mxu0 0
    %2263 = vmatpush1.bf16.msra.mxu0 0
    %2264 = vmatprep.subr.bf16.mxu0 0
    %2265 = vmatpush1.bf16.msra.mxu0 0
    %2266 = vmatprep.subr.bf16.mxu0 0
    %2267 = vmatpush1.bf16.msra.mxu0 0
    %2268 = vmatprep.subr.bf16.mxu0 0
    %2269 = vmatpush1.bf16.msra.mxu0 0
    %2270 = vmatprep.subr.bf16.mxu0 0
    %2271 = vmatpush1.bf16.msra.mxu0 0
    %2272 = vmatprep.subr.bf16.mxu0 0
    %2273 = vmatpush1.bf16.msra.mxu0 0
    %2274 = vmatprep.mubr.bf16.mxu0 0
    %2275 = vmatmul.mubr.bf16.gmra.mrb[0].mxu0 %v1920
    %v2276 = vpop.f32.mrb[0].mxu0
    %v2277 = vadd.f32 %v1777, %v2276
    %v2278 = vpop.f32.mrb[0].mxu0
    %v2279 = vadd.f32 %v1779, %v2278
    %v2280 = vpop.f32.mrb[0].mxu0
    %v2281 = vpop.f32.mrb[0].mxu0
    %2282 = vdwg.mxu0
    %2283 = vmatprep.subr.bf16.mxu0 %v2117
    %2284 = vmatpush1.bf16.msra.mxu0 %v2116
    %2285 = vmatprep.subr.bf16.mxu0 %v2125
    %2286 = vmatpush1.bf16.msra.mxu0 %v2124
    %2287 = vmatprep.subr.bf16.mxu0 %v2133
    %2288 = vmatpush1.bf16.msra.mxu0 %v2132
    %2289 = vmatprep.subr.bf16.mxu0 %v2141
    %2290 = vmatpush1.bf16.msra.mxu0 %v2140
    %2291 = vmatprep.subr.bf16.mxu0 %v2149
    %2292 = vmatpush1.bf16.msra.mxu0 %v2148
    %2293 = vmatprep.subr.bf16.mxu0 %v2157
    %2294 = vmatpush1.bf16.msra.mxu0 %v2156
    %2295 = vmatprep.subr.bf16.mxu0 %v2165
    %2296 = vmatpush1.bf16.msra.mxu0 %v2164
    %2297 = vmatprep.subr.bf16.mxu0 %v2173
    %2298 = vmatpush1.bf16.msra.mxu0 %v2172
    %2299 = vmatprep.subr.bf16.mxu0 0
    %2300 = vmatpush1.bf16.msra.mxu0 0
    %2301 = vmatprep.subr.bf16.mxu0 0
    %2302 = vmatpush1.bf16.msra.mxu0 0
    %2303 = vmatprep.subr.bf16.mxu0 0
    %2304 = vmatpush1.bf16.msra.mxu0 0
    %2305 = vmatprep.subr.bf16.mxu0 0
    %2306 = vmatpush1.bf16.msra.mxu0 0
    %2307 = vmatprep.subr.bf16.mxu0 0
    %2308 = vmatpush1.bf16.msra.mxu0 0
    %2309 = vmatprep.subr.bf16.mxu0 0
    %2310 = vmatpush1.bf16.msra.mxu0 0
    %2311 = vmatprep.subr.bf16.mxu0 0
    %2312 = vmatpush1.bf16.msra.mxu0 0
    %2313 = vmatprep.subr.bf16.mxu0 0
    %2314 = vmatpush1.bf16.msra.mxu0 0
    %2315 = vmatprep.mubr.bf16.mxu0 0
    %2316 = vmatmul.mubr.bf16.gmra.mrb[0].mxu0 %v1920
    %v2317 = vpop.f32.mrb[0].mxu0
    %v2318 = vadd.f32 %v1818, %v2317
    %v2319 = vpop.f32.mrb[0].mxu0
    %v2320 = vadd.f32 %v1820, %v2319
    %v2321 = vpop.f32.mrb[0].mxu0
    %v2322 = vpop.f32.mrb[0].mxu0
    %2323 = vdwg.mxu0
    %2324 = vmatprep.subr.bf16.mxu0 %v2119
    %2325 = vmatpush1.bf16.msra.mxu0 %v2118
    %2326 = vmatprep.subr.bf16.mxu0 %v2127
    %2327 = vmatpush1.bf16.msra.mxu0 %v2126
    %2328 = vmatprep.subr.bf16.mxu0 %v2135
    %2329 = vmatpush1.bf16.msra.mxu0 %v2134
    %2330 = vmatprep.subr.bf16.mxu0 %v2143
    %2331 = vmatpush1.bf16.msra.mxu0 %v2142
    %2332 = vmatprep.subr.bf16.mxu0 %v2151
    %2333 = vmatpush1.bf16.msra.mxu0 %v2150
    %2334 = vmatprep.subr.bf16.mxu0 %v2159
    %2335 = vmatpush1.bf16.msra.mxu0 %v2158
    %2336 = vmatprep.subr.bf16.mxu0 %v2167
    %2337 = vmatpush1.bf16.msra.mxu0 %v2166
    %2338 = vmatprep.subr.bf16.mxu0 %v2175
    %2339 = vmatpush1.bf16.msra.mxu0 %v2174
    %2340 = vmatprep.subr.bf16.mxu0 0
    %2341 = vmatpush1.bf16.msra.mxu0 0
    %2342 = vmatprep.subr.bf16.mxu0 0
    %2343 = vmatpush1.bf16.msra.mxu0 0
    %2344 = vmatprep.subr.bf16.mxu0 0
    %2345 = vmatpush1.bf16.msra.mxu0 0
    %2346 = vmatprep.subr.bf16.mxu0 0
    %2347 = vmatpush1.bf16.msra.mxu0 0
    %2348 = vmatprep.subr.bf16.mxu0 0
    %2349 = vmatpush1.bf16.msra.mxu0 0
    %2350 = vmatprep.subr.bf16.mxu0 0
    %2351 = vmatpush1.bf16.msra.mxu0 0
    %2352 = vmatprep.subr.bf16.mxu0 0
    %2353 = vmatpush1.bf16.msra.mxu0 0
    %2354 = vmatprep.subr.bf16.mxu0 0
    %2355 = vmatpush1.bf16.msra.mxu0 0
    %2356 = vmatprep.mubr.bf16.mxu0 0
    %2357 = vmatmul.mubr.bf16.gmra.mrb[0].mxu0 %v1920
    %v2358 = vpop.f32.mrb[0].mxu0
    %v2359 = vadd.f32 %v1859, %v2358
    %v2360 = vpop.f32.mrb[0].mxu0
    %v2361 = vadd.f32 %v1861, %v2360
    %v2362 = vpop.f32.mrb[0].mxu0
    %v2363 = vpop.f32.mrb[0].mxu0
    %2364 = vdwg.mxu0
    %2365 = vmatprep.subr.bf16.mxu0 %v2121
    %2366 = vmatpush1.bf16.msra.mxu0 %v2120
    %2367 = vmatprep.subr.bf16.mxu0 %v2129
    %2368 = vmatpush1.bf16.msra.mxu0 %v2128
    %2369 = vmatprep.subr.bf16.mxu0 %v2137
    %2370 = vmatpush1.bf16.msra.mxu0 %v2136
    %2371 = vmatprep.subr.bf16.mxu0 %v2145
    %2372 = vmatpush1.bf16.msra.mxu0 %v2144
    %2373 = vmatprep.subr.bf16.mxu0 %v2153
    %2374 = vmatpush1.bf16.msra.mxu0 %v2152
    %2375 = vmatprep.subr.bf16.mxu0 %v2161
    %2376 = vmatpush1.bf16.msra.mxu0 %v2160
    %2377 = vmatprep.subr.bf16.mxu0 %v2169
    %2378 = vmatpush1.bf16.msra.mxu0 %v2168
    %2379 = vmatprep.subr.bf16.mxu0 %v2177
    %2380 = vmatpush1.bf16.msra.mxu0 %v2176
    %2381 = vmatprep.subr.bf16.mxu0 0
    %2382 = vmatpush1.bf16.msra.mxu0 0
    %2383 = vmatprep.subr.bf16.mxu0 0
    %2384 = vmatpush1.bf16.msra.mxu0 0
    %2385 = vmatprep.subr.bf16.mxu0 0
    %2386 = vmatpush1.bf16.msra.mxu0 0
    %2387 = vmatprep.subr.bf16.mxu0 0
    %2388 = vmatpush1.bf16.msra.mxu0 0
    %2389 = vmatprep.subr.bf16.mxu0 0
    %2390 = vmatpush1.bf16.msra.mxu0 0
    %2391 = vmatprep.subr.bf16.mxu0 0
    %2392 = vmatpush1.bf16.msra.mxu0 0
    %2393 = vmatprep.subr.bf16.mxu0 0
    %2394 = vmatpush1.bf16.msra.mxu0 0
    %2395 = vmatprep.subr.bf16.mxu0 0
    %2396 = vmatpush1.bf16.msra.mxu0 0
    %2397 = vmatprep.mubr.bf16.mxu0 0
    %2398 = vmatmul.mubr.bf16.gmra.mrb[0].mxu0 %v1920
    %v2399 = vpop.f32.mrb[0].mxu0
    %v2400 = vadd.f32 %v1900, %v2399
    %v2401 = vpop.f32.mrb[0].mxu0
    %v2402 = vadd.f32 %v1902, %v2401
    %v2403 = vpop.f32.mrb[0].mxu0
    %v2404 = vpop.f32.mrb[0].mxu0
    %2405 = vdwg.mxu0
    %s2406 = scalar_lea.vmem [#allocation9], 1024
    %v2407 = vld [vmem:[%s2406] sm:$0xff]
    %v2408 = vld [vmem:[%s2406 + $0x8] sm:$0xff]
    %v2409 = vld [vmem:[%s2406 + $0x10] sm:$0xff]
    %v2410 = vld [vmem:[%s2406 + $0x18] sm:$0xff]
    %v2411 = vld [vmem:[%s2406 + $0x20] sm:$0xff]
    %v2412 = vld [vmem:[%s2406 + $0x28] sm:$0xff]
    %v2413 = vld [vmem:[%s2406 + $0x30] sm:$0xff]
    %v2414 = vld [vmem:[%s2406 + $0x38] sm:$0xff]
    %v2415 = vld [vmem:[%s2406 + $0x40] sm:$0xff]
    %v2416 = vld [vmem:[%s2406 + $0x48] sm:$0xff]
    %v2417 = vld [vmem:[%s2406 + $0x50] sm:$0xff]
    %v2418 = vld [vmem:[%s2406 + $0x58] sm:$0xff]
    %v2419 = vld [vmem:[%s2406 + $0x60] sm:$0xff]
    %v2420 = vld [vmem:[%s2406 + $0x68] sm:$0xff]
    %v2421 = vld [vmem:[%s2406 + $0x70] sm:$0xff]
    %v2422 = vld [vmem:[%s2406 + $0x78] sm:$0xff]
    %v2423 = vld [vmem:[%s2406 + $0x80] sm:$0xff]
    %v2424 = vld [vmem:[%s2406 + $0x88] sm:$0xff]
    %v2425 = vld [vmem:[%s2406 + $0x90] sm:$0xff]
    %v2426 = vld [vmem:[%s2406 + $0x98] sm:$0xff]
    %v2427 = vld [vmem:[%s2406 + $0xa0] sm:$0xff]
    %v2428 = vld [vmem:[%s2406 + $0xa8] sm:$0xff]
    %v2429 = vld [vmem:[%s2406 + $0xb0] sm:$0xff]
    %v2430 = vld [vmem:[%s2406 + $0xb8] sm:$0xff]
    %v2431 = vld [vmem:[%s2406 + $0xc0] sm:$0xff]
    %v2432 = vld [vmem:[%s2406 + $0xc8] sm:$0xff]
    %v2433 = vld [vmem:[%s2406 + $0xd0] sm:$0xff]
    %v2434 = vld [vmem:[%s2406 + $0xd8] sm:$0xff]
    %v2435 = vld [vmem:[%s2406 + $0xe0] sm:$0xff]
    %v2436 = vld [vmem:[%s2406 + $0xe8] sm:$0xff]
    %v2437 = vld [vmem:[%s2406 + $0xf0] sm:$0xff]
    %v2438 = vld [vmem:[%s2406 + $0xf8] sm:$0xff]
    %v2439 = vld [vmem:[%s2406 + $0x100] sm:$0xff]
    %v2440 = vld [vmem:[%s2406 + $0x108] sm:$0xff]
    %v2441 = vld [vmem:[%s2406 + $0x110] sm:$0xff]
    %v2442 = vld [vmem:[%s2406 + $0x118] sm:$0xff]
    %v2443 = vld [vmem:[%s2406 + $0x120] sm:$0xff]
    %v2444 = vld [vmem:[%s2406 + $0x128] sm:$0xff]
    %v2445 = vld [vmem:[%s2406 + $0x130] sm:$0xff]
    %v2446 = vld [vmem:[%s2406 + $0x138] sm:$0xff]
    %v2447 = vld [vmem:[%s2406 + $0x140] sm:$0xff]
    %v2448 = vld [vmem:[%s2406 + $0x148] sm:$0xff]
    %v2449 = vld [vmem:[%s2406 + $0x150] sm:$0xff]
    %v2450 = vld [vmem:[%s2406 + $0x158] sm:$0xff]
    %v2451 = vld [vmem:[%s2406 + $0x160] sm:$0xff]
    %v2452 = vld [vmem:[%s2406 + $0x168] sm:$0xff]
    %v2453 = vld [vmem:[%s2406 + $0x170] sm:$0xff]
    %v2454 = vld [vmem:[%s2406 + $0x178] sm:$0xff]
    %v2455 = vld [vmem:[%s2406 + $0x180] sm:$0xff]
    %v2456 = vld [vmem:[%s2406 + $0x188] sm:$0xff]
    %v2457 = vld [vmem:[%s2406 + $0x190] sm:$0xff]
    %v2458 = vld [vmem:[%s2406 + $0x198] sm:$0xff]
    %v2459 = vld [vmem:[%s2406 + $0x1a0] sm:$0xff]
    %v2460 = vld [vmem:[%s2406 + $0x1a8] sm:$0xff]
    %v2461 = vld [vmem:[%s2406 + $0x1b0] sm:$0xff]
    %v2462 = vld [vmem:[%s2406 + $0x1b8] sm:$0xff]
    %v2463 = vld [vmem:[%s2406 + $0x1c0] sm:$0xff]
    %v2464 = vld [vmem:[%s2406 + $0x1c8] sm:$0xff]
    %v2465 = vld [vmem:[%s2406 + $0x1d0] sm:$0xff]
    %v2466 = vld [vmem:[%s2406 + $0x1d8] sm:$0xff]
    %v2467 = vld [vmem:[%s2406 + $0x1e0] sm:$0xff]
    %v2468 = vld [vmem:[%s2406 + $0x1e8] sm:$0xff]
    %v2469 = vld [vmem:[%s2406 + $0x1f0] sm:$0xff]
    %v2470 = vld [vmem:[%s2406 + $0x1f8] sm:$0xff]
    %v2471 = vrot.slane %v1391, 2
    %v2472 = vrot.slane %v1392, 1
    %v2473 = vsel %vm1400, %v2472, %v2471
    %v2474 = vsel %vm1403, %v1393, %v2473
    %v2475 = vrot.slane %v1394, 7
    %v2476 = vsel %vm1406, %v2475, %v2474
    %v2477 = vrot.slane %v1395, 6
    %v2478 = vsel %vm1409, %v2477, %v2476
    %v2479 = vrot.slane %v1396, 5
    %v2480 = vsel %vm1412, %v2479, %v2478
    %v2481 = vrot.slane %v1397, 4
    %v2482 = vsel %vm1415, %v2481, %v2480
    %v2483 = vrot.slane %v1398, 3
    %v2484 = vsel %vm1418, %v2483, %v2482
    %v2485 = vpack.c.b16 %v2484, %v2484
    %v2551 = vunpack.c.l.b16 %v2407
    %v2552 = vunpack.c.h.b16 %v2407
    %v2553 = vunpack.c.l.b16 %v2408
    %v2554 = vunpack.c.h.b16 %v2408
    %v2555 = vunpack.c.l.b16 %v2409
    %v2556 = vunpack.c.h.b16 %v2409
    %v2557 = vunpack.c.l.b16 %v2410
    %v2558 = vunpack.c.h.b16 %v2410
    %v2559 = vunpack.c.l.b16 %v2411
    %v2560 = vunpack.c.h.b16 %v2411
    %v2561 = vunpack.c.l.b16 %v2412
    %v2562 = vunpack.c.h.b16 %v2412
    %v2563 = vunpack.c.l.b16 %v2413
    %v2564 = vunpack.c.h.b16 %v2413
    %v2565 = vunpack.c.l.b16 %v2414
    %v2566 = vunpack.c.h.b16 %v2414
    %v2567 = vunpack.c.l.b16 %v2415
    %v2568 = vunpack.c.h.b16 %v2415
    %v2569 = vunpack.c.l.b16 %v2416
    %v2570 = vunpack.c.h.b16 %v2416
    %v2571 = vunpack.c.l.b16 %v2417
    %v2572 = vunpack.c.h.b16 %v2417
    %v2573 = vunpack.c.l.b16 %v2418
    %v2574 = vunpack.c.h.b16 %v2418
    %v2575 = vunpack.c.l.b16 %v2419
    %v2576 = vunpack.c.h.b16 %v2419
    %v2577 = vunpack.c.l.b16 %v2420
    %v2578 = vunpack.c.h.b16 %v2420
    %v2579 = vunpack.c.l.b16 %v2421
    %v2580 = vunpack.c.h.b16 %v2421
    %v2581 = vunpack.c.l.b16 %v2422
    %v2582 = vunpack.c.h.b16 %v2422
    %v2583 = vunpack.c.l.b16 %v2423
    %v2584 = vunpack.c.h.b16 %v2423
    %v2585 = vunpack.c.l.b16 %v2424
    %v2586 = vunpack.c.h.b16 %v2424
    %v2587 = vunpack.c.l.b16 %v2425
    %v2588 = vunpack.c.h.b16 %v2425
    %v2589 = vunpack.c.l.b16 %v2426
    %v2590 = vunpack.c.h.b16 %v2426
    %v2591 = vunpack.c.l.b16 %v2427
    %v2592 = vunpack.c.h.b16 %v2427
    %v2593 = vunpack.c.l.b16 %v2428
    %v2594 = vunpack.c.h.b16 %v2428
    %v2595 = vunpack.c.l.b16 %v2429
    %v2596 = vunpack.c.h.b16 %v2429
    %v2597 = vunpack.c.l.b16 %v2430
    %v2598 = vunpack.c.h.b16 %v2430
    %v2599 = vunpack.c.l.b16 %v2431
    %v2600 = vunpack.c.h.b16 %v2431
    %v2601 = vunpack.c.l.b16 %v2432
    %v2602 = vunpack.c.h.b16 %v2432
    %v2603 = vunpack.c.l.b16 %v2433
    %v2604 = vunpack.c.h.b16 %v2433
    %v2605 = vunpack.c.l.b16 %v2434
    %v2606 = vunpack.c.h.b16 %v2434
    %v2607 = vunpack.c.l.b16 %v2435
    %v2608 = vunpack.c.h.b16 %v2435
    %v2609 = vunpack.c.l.b16 %v2436
    %v2610 = vunpack.c.h.b16 %v2436
    %v2611 = vunpack.c.l.b16 %v2437
    %v2612 = vunpack.c.h.b16 %v2437
    %v2613 = vunpack.c.l.b16 %v2438
    %v2614 = vunpack.c.h.b16 %v2438
    %v2615 = vunpack.c.l.b16 %v2439
    %v2616 = vunpack.c.h.b16 %v2439
    %v2617 = vunpack.c.l.b16 %v2440
    %v2618 = vunpack.c.h.b16 %v2440
    %v2619 = vunpack.c.l.b16 %v2441
    %v2620 = vunpack.c.h.b16 %v2441
    %v2621 = vunpack.c.l.b16 %v2442
    %v2622 = vunpack.c.h.b16 %v2442
    %v2623 = vunpack.c.l.b16 %v2443
    %v2624 = vunpack.c.h.b16 %v2443
    %v2625 = vunpack.c.l.b16 %v2444
    %v2626 = vunpack.c.h.b16 %v2444
    %v2627 = vunpack.c.l.b16 %v2445
    %v2628 = vunpack.c.h.b16 %v2445
    %v2629 = vunpack.c.l.b16 %v2446
    %v2630 = vunpack.c.h.b16 %v2446
    %v2631 = vunpack.c.l.b16 %v2447
    %v2632 = vunpack.c.h.b16 %v2447
    %v2633 = vunpack.c.l.b16 %v2448
    %v2634 = vunpack.c.h.b16 %v2448
    %v2635 = vunpack.c.l.b16 %v2449
    %v2636 = vunpack.c.h.b16 %v2449
    %v2637 = vunpack.c.l.b16 %v2450
    %v2638 = vunpack.c.h.b16 %v2450
    %v2639 = vunpack.c.l.b16 %v2451
    %v2640 = vunpack.c.h.b16 %v2451
    %v2641 = vunpack.c.l.b16 %v2452
    %v2642 = vunpack.c.h.b16 %v2452
    %v2643 = vunpack.c.l.b16 %v2453
    %v2644 = vunpack.c.h.b16 %v2453
    %v2645 = vunpack.c.l.b16 %v2454
    %v2646 = vunpack.c.h.b16 %v2454
    %v2647 = vunpack.c.l.b16 %v2455
    %v2648 = vunpack.c.h.b16 %v2455
    %v2649 = vunpack.c.l.b16 %v2456
    %v2650 = vunpack.c.h.b16 %v2456
    %v2651 = vunpack.c.l.b16 %v2457
    %v2652 = vunpack.c.h.b16 %v2457
    %v2653 = vunpack.c.l.b16 %v2458
    %v2654 = vunpack.c.h.b16 %v2458
    %v2655 = vunpack.c.l.b16 %v2459
    %v2656 = vunpack.c.h.b16 %v2459
    %v2657 = vunpack.c.l.b16 %v2460
    %v2658 = vunpack.c.h.b16 %v2460
    %v2659 = vunpack.c.l.b16 %v2461
    %v2660 = vunpack.c.h.b16 %v2461
    %v2661 = vunpack.c.l.b16 %v2462
    %v2662 = vunpack.c.h.b16 %v2462
    %v2663 = vunpack.c.l.b16 %v2463
    %v2664 = vunpack.c.h.b16 %v2463
    %v2665 = vunpack.c.l.b16 %v2464
    %v2666 = vunpack.c.h.b16 %v2464
    %v2667 = vunpack.c.l.b16 %v2465
    %v2668 = vunpack.c.h.b16 %v2465
    %v2669 = vunpack.c.l.b16 %v2466
    %v2670 = vunpack.c.h.b16 %v2466
    %v2671 = vunpack.c.l.b16 %v2467
    %v2672 = vunpack.c.h.b16 %v2467
    %v2673 = vunpack.c.l.b16 %v2468
    %v2674 = vunpack.c.h.b16 %v2468
    %v2675 = vunpack.c.l.b16 %v2469
    %v2676 = vunpack.c.h.b16 %v2469
    %v2677 = vunpack.c.l.b16 %v2470
    %v2678 = vunpack.c.h.b16 %v2470
    %v2679 = vpack.c.b16 %v2559, %v2551
    %v2680 = vpack.c.b16 %v2560, %v2552
    %v2681 = vpack.c.b16 %v2561, %v2553
    %v2682 = vpack.c.b16 %v2562, %v2554
    %v2683 = vpack.c.b16 %v2563, %v2555
    %v2684 = vpack.c.b16 %v2564, %v2556
    %v2685 = vpack.c.b16 %v2565, %v2557
    %v2686 = vpack.c.b16 %v2566, %v2558
    %v2687 = vpack.c.b16 %v2575, %v2567
    %v2688 = vpack.c.b16 %v2576, %v2568
    %v2689 = vpack.c.b16 %v2577, %v2569
    %v2690 = vpack.c.b16 %v2578, %v2570
    %v2691 = vpack.c.b16 %v2579, %v2571
    %v2692 = vpack.c.b16 %v2580, %v2572
    %v2693 = vpack.c.b16 %v2581, %v2573
    %v2694 = vpack.c.b16 %v2582, %v2574
    %v2695 = vpack.c.b16 %v2591, %v2583
    %v2696 = vpack.c.b16 %v2592, %v2584
    %v2697 = vpack.c.b16 %v2593, %v2585
    %v2698 = vpack.c.b16 %v2594, %v2586
    %v2699 = vpack.c.b16 %v2595, %v2587
    %v2700 = vpack.c.b16 %v2596, %v2588
    %v2701 = vpack.c.b16 %v2597, %v2589
    %v2702 = vpack.c.b16 %v2598, %v2590
    %v2703 = vpack.c.b16 %v2607, %v2599
    %v2704 = vpack.c.b16 %v2608, %v2600
    %v2705 = vpack.c.b16 %v2609, %v2601
    %v2706 = vpack.c.b16 %v2610, %v2602
    %v2707 = vpack.c.b16 %v2611, %v2603
    %v2708 = vpack.c.b16 %v2612, %v2604
    %v2709 = vpack.c.b16 %v2613, %v2605
    %v2710 = vpack.c.b16 %v2614, %v2606
    %v2711 = vpack.c.b16 %v2623, %v2615
    %v2712 = vpack.c.b16 %v2624, %v2616
    %v2713 = vpack.c.b16 %v2625, %v2617
    %v2714 = vpack.c.b16 %v2626, %v2618
    %v2715 = vpack.c.b16 %v2627, %v2619
    %v2716 = vpack.c.b16 %v2628, %v2620
    %v2717 = vpack.c.b16 %v2629, %v2621
    %v2718 = vpack.c.b16 %v2630, %v2622
    %v2719 = vpack.c.b16 %v2639, %v2631
    %v2720 = vpack.c.b16 %v2640, %v2632
    %v2721 = vpack.c.b16 %v2641, %v2633
    %v2722 = vpack.c.b16 %v2642, %v2634
    %v2723 = vpack.c.b16 %v2643, %v2635
    %v2724 = vpack.c.b16 %v2644, %v2636
    %v2725 = vpack.c.b16 %v2645, %v2637
    %v2726 = vpack.c.b16 %v2646, %v2638
    %v2727 = vpack.c.b16 %v2655, %v2647
    %v2728 = vpack.c.b16 %v2656, %v2648
    %v2729 = vpack.c.b16 %v2657, %v2649
    %v2730 = vpack.c.b16 %v2658, %v2650
    %v2731 = vpack.c.b16 %v2659, %v2651
    %v2732 = vpack.c.b16 %v2660, %v2652
    %v2733 = vpack.c.b16 %v2661, %v2653
    %v2734 = vpack.c.b16 %v2662, %v2654
    %v2735 = vpack.c.b16 %v2671, %v2663
    %v2736 = vpack.c.b16 %v2672, %v2664
    %v2737 = vpack.c.b16 %v2673, %v2665
    %v2738 = vpack.c.b16 %v2674, %v2666
    %v2739 = vpack.c.b16 %v2675, %v2667
    %v2740 = vpack.c.b16 %v2676, %v2668
    %v2741 = vpack.c.b16 %v2677, %v2669
    %v2742 = vpack.c.b16 %v2678, %v2670
    %2807 = vmatprep.subr.bf16.mxu0 %v2680
    %2808 = vmatpush1.bf16.msra.mxu0 %v2679
    %2809 = vmatprep.subr.bf16.mxu0 %v2688
    %2810 = vmatpush1.bf16.msra.mxu0 %v2687
    %2811 = vmatprep.subr.bf16.mxu0 %v2696
    %2812 = vmatpush1.bf16.msra.mxu0 %v2695
    %2813 = vmatprep.subr.bf16.mxu0 %v2704
    %2814 = vmatpush1.bf16.msra.mxu0 %v2703
    %2815 = vmatprep.subr.bf16.mxu0 %v2712
    %2816 = vmatpush1.bf16.msra.mxu0 %v2711
    %2817 = vmatprep.subr.bf16.mxu0 %v2720
    %2818 = vmatpush1.bf16.msra.mxu0 %v2719
    %2819 = vmatprep.subr.bf16.mxu0 %v2728
    %2820 = vmatpush1.bf16.msra.mxu0 %v2727
    %2821 = vmatprep.subr.bf16.mxu0 %v2736
    %2822 = vmatpush1.bf16.msra.mxu0 %v2735
    %2823 = vmatprep.subr.bf16.mxu0 0
    %2824 = vmatpush1.bf16.msra.mxu0 0
    %2825 = vmatprep.subr.bf16.mxu0 0
    %2826 = vmatpush1.bf16.msra.mxu0 0
    %2827 = vmatprep.subr.bf16.mxu0 0
    %2828 = vmatpush1.bf16.msra.mxu0 0
    %2829 = vmatprep.subr.bf16.mxu0 0
    %2830 = vmatpush1.bf16.msra.mxu0 0
    %2831 = vmatprep.subr.bf16.mxu0 0
    %2832 = vmatpush1.bf16.msra.mxu0 0
    %2833 = vmatprep.subr.bf16.mxu0 0
    %2834 = vmatpush1.bf16.msra.mxu0 0
    %2835 = vmatprep.subr.bf16.mxu0 0
    %2836 = vmatpush1.bf16.msra.mxu0 0
    %2837 = vmatprep.subr.bf16.mxu0 0
    %2838 = vmatpush1.bf16.msra.mxu0 0
    %2839 = vmatprep.mubr.bf16.mxu0 0
    %2840 = vmatmul.mubr.bf16.gmra.mrb[0].mxu0 %v2485
    %v2841 = vpop.f32.mrb[0].mxu0
    %v2842 = vadd.f32 0.0, %v2841
    %v2843 = vpop.f32.mrb[0].mxu0
    %v2844 = vadd.f32 0.0, %v2843
    %v2845 = vpop.f32.mrb[0].mxu0
    %v2846 = vpop.f32.mrb[0].mxu0
    %2847 = vdwg.mxu0
    %2848 = vmatprep.subr.bf16.mxu0 %v2682
    %2849 = vmatpush1.bf16.msra.mxu0 %v2681
    %2850 = vmatprep.subr.bf16.mxu0 %v2690
    %2851 = vmatpush1.bf16.msra.mxu0 %v2689
    %2852 = vmatprep.subr.bf16.mxu0 %v2698
    %2853 = vmatpush1.bf16.msra.mxu0 %v2697
    %2854 = vmatprep.subr.bf16.mxu0 %v2706
    %2855 = vmatpush1.bf16.msra.mxu0 %v2705
    %2856 = vmatprep.subr.bf16.mxu0 %v2714
    %2857 = vmatpush1.bf16.msra.mxu0 %v2713
    %2858 = vmatprep.subr.bf16.mxu0 %v2722
    %2859 = vmatpush1.bf16.msra.mxu0 %v2721
    %2860 = vmatprep.subr.bf16.mxu0 %v2730
    %2861 = vmatpush1.bf16.msra.mxu0 %v2729
    %2862 = vmatprep.subr.bf16.mxu0 %v2738
    %2863 = vmatpush1.bf16.msra.mxu0 %v2737
    %2864 = vmatprep.subr.bf16.mxu0 0
    %2865 = vmatpush1.bf16.msra.mxu0 0
    %2866 = vmatprep.subr.bf16.mxu0 0
    %2867 = vmatpush1.bf16.msra.mxu0 0
    %2868 = vmatprep.subr.bf16.mxu0 0
    %2869 = vmatpush1.bf16.msra.mxu0 0
    %2870 = vmatprep.subr.bf16.mxu0 0
    %2871 = vmatpush1.bf16.msra.mxu0 0
    %2872 = vmatprep.subr.bf16.mxu0 0
    %2873 = vmatpush1.bf16.msra.mxu0 0
    %2874 = vmatprep.subr.bf16.mxu0 0
    %2875 = vmatpush1.bf16.msra.mxu0 0
    %2876 = vmatprep.subr.bf16.mxu0 0
    %2877 = vmatpush1.bf16.msra.mxu0 0
    %2878 = vmatprep.subr.bf16.mxu0 0
    %2879 = vmatpush1.bf16.msra.mxu0 0
    %2880 = vmatprep.mubr.bf16.mxu0 0
    %2881 = vmatmul.mubr.bf16.gmra.mrb[0].mxu0 %v2485
    %v2882 = vpop.f32.mrb[0].mxu0
    %v2883 = vadd.f32 0.0, %v2882
    %v2884 = vpop.f32.mrb[0].mxu0
    %v2885 = vadd.f32 0.0, %v2884
    %v2886 = vpop.f32.mrb[0].mxu0
    %v2887 = vpop.f32.mrb[0].mxu0
    %2888 = vdwg.mxu0
    %2889 = vmatprep.subr.bf16.mxu0 %v2684
    %2890 = vmatpush1.bf16.msra.mxu0 %v2683
    %2891 = vmatprep.subr.bf16.mxu0 %v2692
    %2892 = vmatpush1.bf16.msra.mxu0 %v2691
    %2893 = vmatprep.subr.bf16.mxu0 %v2700
    %2894 = vmatpush1.bf16.msra.mxu0 %v2699
    %2895 = vmatprep.subr.bf16.mxu0 %v2708
    %2896 = vmatpush1.bf16.msra.mxu0 %v2707
    %2897 = vmatprep.subr.bf16.mxu0 %v2716
    %2898 = vmatpush1.bf16.msra.mxu0 %v2715
    %2899 = vmatprep.subr.bf16.mxu0 %v2724
    %2900 = vmatpush1.bf16.msra.mxu0 %v2723
    %2901 = vmatprep.subr.bf16.mxu0 %v2732
    %2902 = vmatpush1.bf16.msra.mxu0 %v2731
    %2903 = vmatprep.subr.bf16.mxu0 %v2740
    %2904 = vmatpush1.bf16.msra.mxu0 %v2739
    %2905 = vmatprep.subr.bf16.mxu0 0
    %2906 = vmatpush1.bf16.msra.mxu0 0
    %2907 = vmatprep.subr.bf16.mxu0 0
    %2908 = vmatpush1.bf16.msra.mxu0 0
    %2909 = vmatprep.subr.bf16.mxu0 0
    %2910 = vmatpush1.bf16.msra.mxu0 0
    %2911 = vmatprep.subr.bf16.mxu0 0
    %2912 = vmatpush1.bf16.msra.mxu0 0
    %2913 = vmatprep.subr.bf16.mxu0 0
    %2914 = vmatpush1.bf16.msra.mxu0 0
    %2915 = vmatprep.subr.bf16.mxu0 0
    %2916 = vmatpush1.bf16.msra.mxu0 0
    %2917 = vmatprep.subr.bf16.mxu0 0
    %2918 = vmatpush1.bf16.msra.mxu0 0
    %2919 = vmatprep.subr.bf16.mxu0 0
    %2920 = vmatpush1.bf16.msra.mxu0 0
    %2921 = vmatprep.mubr.bf16.mxu0 0
    %2922 = vmatmul.mubr.bf16.gmra.mrb[0].mxu0 %v2485
    %v2923 = vpop.f32.mrb[0].mxu0
    %v2924 = vadd.f32 0.0, %v2923
    %v2925 = vpop.f32.mrb[0].mxu0
    %v2926 = vadd.f32 0.0, %v2925
    %v2927 = vpop.f32.mrb[0].mxu0
    %v2928 = vpop.f32.mrb[0].mxu0
    %2929 = vdwg.mxu0
    %2930 = vmatprep.subr.bf16.mxu0 %v2686
    %2931 = vmatpush1.bf16.msra.mxu0 %v2685
    %2932 = vmatprep.subr.bf16.mxu0 %v2694
    %2933 = vmatpush1.bf16.msra.mxu0 %v2693
    %2934 = vmatprep.subr.bf16.mxu0 %v2702
    %2935 = vmatpush1.bf16.msra.mxu0 %v2701
    %2936 = vmatprep.subr.bf16.mxu0 %v2710
    %2937 = vmatpush1.bf16.msra.mxu0 %v2709
    %2938 = vmatprep.subr.bf16.mxu0 %v2718
    %2939 = vmatpush1.bf16.msra.mxu0 %v2717
    %2940 = vmatprep.subr.bf16.mxu0 %v2726
    %2941 = vmatpush1.bf16.msra.mxu0 %v2725
    %2942 = vmatprep.subr.bf16.mxu0 %v2734
    %2943 = vmatpush1.bf16.msra.mxu0 %v2733
    %2944 = vmatprep.subr.bf16.mxu0 %v2742
    %2945 = vmatpush1.bf16.msra.mxu0 %v2741
    %2946 = vmatprep.subr.bf16.mxu0 0
    %2947 = vmatpush1.bf16.msra.mxu0 0
    %2948 = vmatprep.subr.bf16.mxu0 0
    %2949 = vmatpush1.bf16.msra.mxu0 0
    %2950 = vmatprep.subr.bf16.mxu0 0
    %2951 = vmatpush1.bf16.msra.mxu0 0
    %2952 = vmatprep.subr.bf16.mxu0 0
    %2953 = vmatpush1.bf16.msra.mxu0 0
    %2954 = vmatprep.subr.bf16.mxu0 0
    %2955 = vmatpush1.bf16.msra.mxu0 0
    %2956 = vmatprep.subr.bf16.mxu0 0
    %2957 = vmatpush1.bf16.msra.mxu0 0
    %2958 = vmatprep.subr.bf16.mxu0 0
    %2959 = vmatpush1.bf16.msra.mxu0 0
    %2960 = vmatprep.subr.bf16.mxu0 0
    %2961 = vmatpush1.bf16.msra.mxu0 0
    %2962 = vmatprep.mubr.bf16.mxu0 0
    %2963 = vmatmul.mubr.bf16.gmra.mrb[0].mxu0 %v2485
    %v2964 = vpop.f32.mrb[0].mxu0
    %v2965 = vadd.f32 0.0, %v2964
    %v2966 = vpop.f32.mrb[0].mxu0
    %v2967 = vadd.f32 0.0, %v2966
    %v2968 = vpop.f32.mrb[0].mxu0
    %v2969 = vpop.f32.mrb[0].mxu0
    %2970 = vdwg.mxu0
    %v2971 = vadd.f32 %v2277, %v2842
    %v2972 = vadd.f32 %v2279, %v2844
    %v2973 = vadd.f32 %v2318, %v2883
    %v2974 = vadd.f32 %v2320, %v2885
    %v2975 = vadd.f32 %v2359, %v2924
    %v2976 = vadd.f32 %v2361, %v2926
    %v2977 = vadd.f32 %v2400, %v2965
    %v2978 = vadd.f32 %v2402, %v2967
    %s2979 = scalar_lea.vmem [#allocation9], 1536
    %v2980 = vld [vmem:[%s2979] sm:$0xff]
    %v2981 = vld [vmem:[%s2979 + $0x8] sm:$0xff]
    %v2982 = vld [vmem:[%s2979 + $0x10] sm:$0xff]
    %v2983 = vld [vmem:[%s2979 + $0x18] sm:$0xff]
    %v2984 = vld [vmem:[%s2979 + $0x20] sm:$0xff]
    %v2985 = vld [vmem:[%s2979 + $0x28] sm:$0xff]
    %v2986 = vld [vmem:[%s2979 + $0x30] sm:$0xff]
    %v2987 = vld [vmem:[%s2979 + $0x38] sm:$0xff]
    %v2988 = vld [vmem:[%s2979 + $0x40] sm:$0xff]
    %v2989 = vld [vmem:[%s2979 + $0x48] sm:$0xff]
    %v2990 = vld [vmem:[%s2979 + $0x50] sm:$0xff]
    %v2991 = vld [vmem:[%s2979 + $0x58] sm:$0xff]
    %v2992 = vld [vmem:[%s2979 + $0x60] sm:$0xff]
    %v2993 = vld [vmem:[%s2979 + $0x68] sm:$0xff]
    %v2994 = vld [vmem:[%s2979 + $0x70] sm:$0xff]
    %v2995 = vld [vmem:[%s2979 + $0x78] sm:$0xff]
    %v2996 = vld [vmem:[%s2979 + $0x80] sm:$0xff]
    %v2997 = vld [vmem:[%s2979 + $0x88] sm:$0xff]
    %v2998 = vld [vmem:[%s2979 + $0x90] sm:$0xff]
    %v2999 = vld [vmem:[%s2979 + $0x98] sm:$0xff]
    %v3000 = vld [vmem:[%s2979 + $0xa0] sm:$0xff]
    %v3001 = vld [vmem:[%s2979 + $0xa8] sm:$0xff]
    %v3002 = vld [vmem:[%s2979 + $0xb0] sm:$0xff]
    %v3003 = vld [vmem:[%s2979 + $0xb8] sm:$0xff]
    %v3004 = vld [vmem:[%s2979 + $0xc0] sm:$0xff]
    %v3005 = vld [vmem:[%s2979 + $0xc8] sm:$0xff]
    %v3006 = vld [vmem:[%s2979 + $0xd0] sm:$0xff]
    %v3007 = vld [vmem:[%s2979 + $0xd8] sm:$0xff]
    %v3008 = vld [vmem:[%s2979 + $0xe0] sm:$0xff]
    %v3009 = vld [vmem:[%s2979 + $0xe8] sm:$0xff]
    %v3010 = vld [vmem:[%s2979 + $0xf0] sm:$0xff]
    %v3011 = vld [vmem:[%s2979 + $0xf8] sm:$0xff]
    %v3012 = vld [vmem:[%s2979 + $0x100] sm:$0xff]
    %v3013 = vld [vmem:[%s2979 + $0x108] sm:$0xff]
    %v3014 = vld [vmem:[%s2979 + $0x110] sm:$0xff]
    %v3015 = vld [vmem:[%s2979 + $0x118] sm:$0xff]
    %v3016 = vld [vmem:[%s2979 + $0x120] sm:$0xff]
    %v3017 = vld [vmem:[%s2979 + $0x128] sm:$0xff]
    %v3018 = vld [vmem:[%s2979 + $0x130] sm:$0xff]
    %v3019 = vld [vmem:[%s2979 + $0x138] sm:$0xff]
    %v3020 = vld [vmem:[%s2979 + $0x140] sm:$0xff]
    %v3021 = vld [vmem:[%s2979 + $0x148] sm:$0xff]
    %v3022 = vld [vmem:[%s2979 + $0x150] sm:$0xff]
    %v3023 = vld [vmem:[%s2979 + $0x158] sm:$0xff]
    %v3024 = vld [vmem:[%s2979 + $0x160] sm:$0xff]
    %v3025 = vld [vmem:[%s2979 + $0x168] sm:$0xff]
    %v3026 = vld [vmem:[%s2979 + $0x170] sm:$0xff]
    %v3027 = vld [vmem:[%s2979 + $0x178] sm:$0xff]
    %v3028 = vld [vmem:[%s2979 + $0x180] sm:$0xff]
    %v3029 = vld [vmem:[%s2979 + $0x188] sm:$0xff]
    %v3030 = vld [vmem:[%s2979 + $0x190] sm:$0xff]
    %v3031 = vld [vmem:[%s2979 + $0x198] sm:$0xff]
    %v3032 = vld [vmem:[%s2979 + $0x1a0] sm:$0xff]
    %v3033 = vld [vmem:[%s2979 + $0x1a8] sm:$0xff]
    %v3034 = vld [vmem:[%s2979 + $0x1b0] sm:$0xff]
    %v3035 = vld [vmem:[%s2979 + $0x1b8] sm:$0xff]
    %v3036 = vld [vmem:[%s2979 + $0x1c0] sm:$0xff]
    %v3037 = vld [vmem:[%s2979 + $0x1c8] sm:$0xff]
    %v3038 = vld [vmem:[%s2979 + $0x1d0] sm:$0xff]
    %v3039 = vld [vmem:[%s2979 + $0x1d8] sm:$0xff]
    %v3040 = vld [vmem:[%s2979 + $0x1e0] sm:$0xff]
    %v3041 = vld [vmem:[%s2979 + $0x1e8] sm:$0xff]
    %v3042 = vld [vmem:[%s2979 + $0x1f0] sm:$0xff]
    %v3043 = vld [vmem:[%s2979 + $0x1f8] sm:$0xff]
    %v3044 = vrot.slane %v1391, 3
    %v3045 = vrot.slane %v1392, 2
    %v3046 = vsel %vm1400, %v3045, %v3044
    %v3047 = vrot.slane %v1393, 1
    %v3048 = vsel %vm1403, %v3047, %v3046
    %v3049 = vsel %vm1406, %v1394, %v3048
    %v3050 = vrot.slane %v1395, 7
    %v3051 = vsel %vm1409, %v3050, %v3049
    %v3052 = vrot.slane %v1396, 6
    %v3053 = vsel %vm1412, %v3052, %v3051
    %v3054 = vrot.slane %v1397, 5
    %v3055 = vsel %vm1415, %v3054, %v3053
    %v3056 = vrot.slane %v1398, 4
    %v3057 = vsel %vm1418, %v3056, %v3055
    %v3058 = vpack.c.b16 %v3057, %v3057
    %v3124 = vunpack.c.l.b16 %v2980
    %v3125 = vunpack.c.h.b16 %v2980
    %v3126 = vunpack.c.l.b16 %v2981
    %v3127 = vunpack.c.h.b16 %v2981
    %v3128 = vunpack.c.l.b16 %v2982
    %v3129 = vunpack.c.h.b16 %v2982
    %v3130 = vunpack.c.l.b16 %v2983
    %v3131 = vunpack.c.h.b16 %v2983
    %v3132 = vunpack.c.l.b16 %v2984
    %v3133 = vunpack.c.h.b16 %v2984
    %v3134 = vunpack.c.l.b16 %v2985
    %v3135 = vunpack.c.h.b16 %v2985
    %v3136 = vunpack.c.l.b16 %v2986
    %v3137 = vunpack.c.h.b16 %v2986
    %v3138 = vunpack.c.l.b16 %v2987
    %v3139 = vunpack.c.h.b16 %v2987
    %v3140 = vunpack.c.l.b16 %v2988
    %v3141 = vunpack.c.h.b16 %v2988
    %v3142 = vunpack.c.l.b16 %v2989
    %v3143 = vunpack.c.h.b16 %v2989
    %v3144 = vunpack.c.l.b16 %v2990
    %v3145 = vunpack.c.h.b16 %v2990
    %v3146 = vunpack.c.l.b16 %v2991
    %v3147 = vunpack.c.h.b16 %v2991
    %v3148 = vunpack.c.l.b16 %v2992
    %v3149 = vunpack.c.h.b16 %v2992
    %v3150 = vunpack.c.l.b16 %v2993
    %v3151 = vunpack.c.h.b16 %v2993
    %v3152 = vunpack.c.l.b16 %v2994
    %v3153 = vunpack.c.h.b16 %v2994
    %v3154 = vunpack.c.l.b16 %v2995
    %v3155 = vunpack.c.h.b16 %v2995
    %v3156 = vunpack.c.l.b16 %v2996
    %v3157 = vunpack.c.h.b16 %v2996
    %v3158 = vunpack.c.l.b16 %v2997
    %v3159 = vunpack.c.h.b16 %v2997
    %v3160 = vunpack.c.l.b16 %v2998
    %v3161 = vunpack.c.h.b16 %v2998
    %v3162 = vunpack.c.l.b16 %v2999
    %v3163 = vunpack.c.h.b16 %v2999
    %v3164 = vunpack.c.l.b16 %v3000
    %v3165 = vunpack.c.h.b16 %v3000
    %v3166 = vunpack.c.l.b16 %v3001
    %v3167 = vunpack.c.h.b16 %v3001
    %v3168 = vunpack.c.l.b16 %v3002
    %v3169 = vunpack.c.h.b16 %v3002
    %v3170 = vunpack.c.l.b16 %v3003
    %v3171 = vunpack.c.h.b16 %v3003
    %v3172 = vunpack.c.l.b16 %v3004
    %v3173 = vunpack.c.h.b16 %v3004
    %v3174 = vunpack.c.l.b16 %v3005
    %v3175 = vunpack.c.h.b16 %v3005
    %v3176 = vunpack.c.l.b16 %v3006
    %v3177 = vunpack.c.h.b16 %v3006
    %v3178 = vunpack.c.l.b16 %v3007
    %v3179 = vunpack.c.h.b16 %v3007
    %v3180 = vunpack.c.l.b16 %v3008
    %v3181 = vunpack.c.h.b16 %v3008
    %v3182 = vunpack.c.l.b16 %v3009
    %v3183 = vunpack.c.h.b16 %v3009
    %v3184 = vunpack.c.l.b16 %v3010
    %v3185 = vunpack.c.h.b16 %v3010
    %v3186 = vunpack.c.l.b16 %v3011
    %v3187 = vunpack.c.h.b16 %v3011
    %v3188 = vunpack.c.l.b16 %v3012
    %v3189 = vunpack.c.h.b16 %v3012
    %v3190 = vunpack.c.l.b16 %v3013
    %v3191 = vunpack.c.h.b16 %v3013
    %v3192 = vunpack.c.l.b16 %v3014
    %v3193 = vunpack.c.h.b16 %v3014
    %v3194 = vunpack.c.l.b16 %v3015
    %v3195 = vunpack.c.h.b16 %v3015
    %v3196 = vunpack.c.l.b16 %v3016
    %v3197 = vunpack.c.h.b16 %v3016
    %v3198 = vunpack.c.l.b16 %v3017
    %v3199 = vunpack.c.h.b16 %v3017
    %v3200 = vunpack.c.l.b16 %v3018
    %v3201 = vunpack.c.h.b16 %v3018
    %v3202 = vunpack.c.l.b16 %v3019
    %v3203 = vunpack.c.h.b16 %v3019
    %v3204 = vunpack.c.l.b16 %v3020
    %v3205 = vunpack.c.h.b16 %v3020
    %v3206 = vunpack.c.l.b16 %v3021
    %v3207 = vunpack.c.h.b16 %v3021
    %v3208 = vunpack.c.l.b16 %v3022
    %v3209 = vunpack.c.h.b16 %v3022
    %v3210 = vunpack.c.l.b16 %v3023
    %v3211 = vunpack.c.h.b16 %v3023
    %v3212 = vunpack.c.l.b16 %v3024
    %v3213 = vunpack.c.h.b16 %v3024
    %v3214 = vunpack.c.l.b16 %v3025
    %v3215 = vunpack.c.h.b16 %v3025
    %v3216 = vunpack.c.l.b16 %v3026
    %v3217 = vunpack.c.h.b16 %v3026
    %v3218 = vunpack.c.l.b16 %v3027
    %v3219 = vunpack.c.h.b16 %v3027
    %v3220 = vunpack.c.l.b16 %v3028
    %v3221 = vunpack.c.h.b16 %v3028
    %v3222 = vunpack.c.l.b16 %v3029
    %v3223 = vunpack.c.h.b16 %v3029
    %v3224 = vunpack.c.l.b16 %v3030
    %v3225 = vunpack.c.h.b16 %v3030
    %v3226 = vunpack.c.l.b16 %v3031
    %v3227 = vunpack.c.h.b16 %v3031
    %v3228 = vunpack.c.l.b16 %v3032
    %v3229 = vunpack.c.h.b16 %v3032
    %v3230 = vunpack.c.l.b16 %v3033
    %v3231 = vunpack.c.h.b16 %v3033
    %v3232 = vunpack.c.l.b16 %v3034
    %v3233 = vunpack.c.h.b16 %v3034
    %v3234 = vunpack.c.l.b16 %v3035
    %v3235 = vunpack.c.h.b16 %v3035
    %v3236 = vunpack.c.l.b16 %v3036
    %v3237 = vunpack.c.h.b16 %v3036
    %v3238 = vunpack.c.l.b16 %v3037
    %v3239 = vunpack.c.h.b16 %v3037
    %v3240 = vunpack.c.l.b16 %v3038
    %v3241 = vunpack.c.h.b16 %v3038
    %v3242 = vunpack.c.l.b16 %v3039
    %v3243 = vunpack.c.h.b16 %v3039
    %v3244 = vunpack.c.l.b16 %v3040
    %v3245 = vunpack.c.h.b16 %v3040
    %v3246 = vunpack.c.l.b16 %v3041
    %v3247 = vunpack.c.h.b16 %v3041
    %v3248 = vunpack.c.l.b16 %v3042
    %v3249 = vunpack.c.h.b16 %v3042
    %v3250 = vunpack.c.l.b16 %v3043
    %v3251 = vunpack.c.h.b16 %v3043
    %v3252 = vpack.c.b16 %v3132, %v3124
    %v3253 = vpack.c.b16 %v3133, %v3125
    %v3254 = vpack.c.b16 %v3134, %v3126
    %v3255 = vpack.c.b16 %v3135, %v3127
    %v3256 = vpack.c.b16 %v3136, %v3128
    %v3257 = vpack.c.b16 %v3137, %v3129
    %v3258 = vpack.c.b16 %v3138, %v3130
    %v3259 = vpack.c.b16 %v3139, %v3131
    %v3260 = vpack.c.b16 %v3148, %v3140
    %v3261 = vpack.c.b16 %v3149, %v3141
    %v3262 = vpack.c.b16 %v3150, %v3142
    %v3263 = vpack.c.b16 %v3151, %v3143
    %v3264 = vpack.c.b16 %v3152, %v3144
    %v3265 = vpack.c.b16 %v3153, %v3145
    %v3266 = vpack.c.b16 %v3154, %v3146
    %v3267 = vpack.c.b16 %v3155, %v3147
    %v3268 = vpack.c.b16 %v3164, %v3156
    %v3269 = vpack.c.b16 %v3165, %v3157
    %v3270 = vpack.c.b16 %v3166, %v3158
    %v3271 = vpack.c.b16 %v3167, %v3159
    %v3272 = vpack.c.b16 %v3168, %v3160
    %v3273 = vpack.c.b16 %v3169, %v3161
    %v3274 = vpack.c.b16 %v3170, %v3162
    %v3275 = vpack.c.b16 %v3171, %v3163
    %v3276 = vpack.c.b16 %v3180, %v3172
    %v3277 = vpack.c.b16 %v3181, %v3173
    %v3278 = vpack.c.b16 %v3182, %v3174
    %v3279 = vpack.c.b16 %v3183, %v3175
    %v3280 = vpack.c.b16 %v3184, %v3176
    %v3281 = vpack.c.b16 %v3185, %v3177
    %v3282 = vpack.c.b16 %v3186, %v3178
    %v3283 = vpack.c.b16 %v3187, %v3179
    %v3284 = vpack.c.b16 %v3196, %v3188
    %v3285 = vpack.c.b16 %v3197, %v3189
    %v3286 = vpack.c.b16 %v3198, %v3190
    %v3287 = vpack.c.b16 %v3199, %v3191
    %v3288 = vpack.c.b16 %v3200, %v3192
    %v3289 = vpack.c.b16 %v3201, %v3193
    %v3290 = vpack.c.b16 %v3202, %v3194
    %v3291 = vpack.c.b16 %v3203, %v3195
    %v3292 = vpack.c.b16 %v3212, %v3204
    %v3293 = vpack.c.b16 %v3213, %v3205
    %v3294 = vpack.c.b16 %v3214, %v3206
    %v3295 = vpack.c.b16 %v3215, %v3207
    %v3296 = vpack.c.b16 %v3216, %v3208
    %v3297 = vpack.c.b16 %v3217, %v3209
    %v3298 = vpack.c.b16 %v3218, %v3210
    %v3299 = vpack.c.b16 %v3219, %v3211
    %v3300 = vpack.c.b16 %v3228, %v3220
    %v3301 = vpack.c.b16 %v3229, %v3221
    %v3302 = vpack.c.b16 %v3230, %v3222
    %v3303 = vpack.c.b16 %v3231, %v3223
    %v3304 = vpack.c.b16 %v3232, %v3224
    %v3305 = vpack.c.b16 %v3233, %v3225
    %v3306 = vpack.c.b16 %v3234, %v3226
    %v3307 = vpack.c.b16 %v3235, %v3227
    %v3308 = vpack.c.b16 %v3244, %v3236
    %v3309 = vpack.c.b16 %v3245, %v3237
    %v3310 = vpack.c.b16 %v3246, %v3238
    %v3311 = vpack.c.b16 %v3247, %v3239
    %v3312 = vpack.c.b16 %v3248, %v3240
    %v3313 = vpack.c.b16 %v3249, %v3241
    %v3314 = vpack.c.b16 %v3250, %v3242
    %v3315 = vpack.c.b16 %v3251, %v3243
    %3380 = vmatprep.subr.bf16.mxu0 %v3253
    %3381 = vmatpush1.bf16.msra.mxu0 %v3252
    %3382 = vmatprep.subr.bf16.mxu0 %v3261
    %3383 = vmatpush1.bf16.msra.mxu0 %v3260
    %3384 = vmatprep.subr.bf16.mxu0 %v3269
    %3385 = vmatpush1.bf16.msra.mxu0 %v3268
    %3386 = vmatprep.subr.bf16.mxu0 %v3277
    %3387 = vmatpush1.bf16.msra.mxu0 %v3276
    %3388 = vmatprep.subr.bf16.mxu0 %v3285
    %3389 = vmatpush1.bf16.msra.mxu0 %v3284
    %3390 = vmatprep.subr.bf16.mxu0 %v3293
    %3391 = vmatpush1.bf16.msra.mxu0 %v3292
    %3392 = vmatprep.subr.bf16.mxu0 %v3301
    %3393 = vmatpush1.bf16.msra.mxu0 %v3300
    %3394 = vmatprep.subr.bf16.mxu0 %v3309
    %3395 = vmatpush1.bf16.msra.mxu0 %v3308
    %3396 = vmatprep.subr.bf16.mxu0 0
    %3397 = vmatpush1.bf16.msra.mxu0 0
    %3398 = vmatprep.subr.bf16.mxu0 0
    %3399 = vmatpush1.bf16.msra.mxu0 0
    %3400 = vmatprep.subr.bf16.mxu0 0
    %3401 = vmatpush1.bf16.msra.mxu0 0
    %3402 = vmatprep.subr.bf16.mxu0 0
    %3403 = vmatpush1.bf16.msra.mxu0 0
    %3404 = vmatprep.subr.bf16.mxu0 0
    %3405 = vmatpush1.bf16.msra.mxu0 0
    %3406 = vmatprep.subr.bf16.mxu0 0
    %3407 = vmatpush1.bf16.msra.mxu0 0
    %3408 = vmatprep.subr.bf16.mxu0 0
    %3409 = vmatpush1.bf16.msra.mxu0 0
    %3410 = vmatprep.subr.bf16.mxu0 0
    %3411 = vmatpush1.bf16.msra.mxu0 0
    %3412 = vmatprep.mubr.bf16.mxu0 0
    %3413 = vmatmul.mubr.bf16.gmra.mrb[0].mxu0 %v3058
    %v3414 = vpop.f32.mrb[0].mxu0
    %v3415 = vadd.f32 0.0, %v3414
    %v3416 = vpop.f32.mrb[0].mxu0
    %v3417 = vadd.f32 0.0, %v3416
    %v3418 = vpop.f32.mrb[0].mxu0
    %v3419 = vpop.f32.mrb[0].mxu0
    %3420 = vdwg.mxu0
    %3421 = vmatprep.subr.bf16.mxu0 %v3255
    %3422 = vmatpush1.bf16.msra.mxu0 %v3254
    %3423 = vmatprep.subr.bf16.mxu0 %v3263
    %3424 = vmatpush1.bf16.msra.mxu0 %v3262
    %3425 = vmatprep.subr.bf16.mxu0 %v3271
    %3426 = vmatpush1.bf16.msra.mxu0 %v3270
    %3427 = vmatprep.subr.bf16.mxu0 %v3279
    %3428 = vmatpush1.bf16.msra.mxu0 %v3278
    %3429 = vmatprep.subr.bf16.mxu0 %v3287
    %3430 = vmatpush1.bf16.msra.mxu0 %v3286
    %3431 = vmatprep.subr.bf16.mxu0 %v3295
    %3432 = vmatpush1.bf16.msra.mxu0 %v3294
    %3433 = vmatprep.subr.bf16.mxu0 %v3303
    %3434 = vmatpush1.bf16.msra.mxu0 %v3302
    %3435 = vmatprep.subr.bf16.mxu0 %v3311
    %3436 = vmatpush1.bf16.msra.mxu0 %v3310
    %3437 = vmatprep.subr.bf16.mxu0 0
    %3438 = vmatpush1.bf16.msra.mxu0 0
    %3439 = vmatprep.subr.bf16.mxu0 0
    %3440 = vmatpush1.bf16.msra.mxu0 0
    %3441 = vmatprep.subr.bf16.mxu0 0
    %3442 = vmatpush1.bf16.msra.mxu0 0
    %3443 = vmatprep.subr.bf16.mxu0 0
    %3444 = vmatpush1.bf16.msra.mxu0 0
    %3445 = vmatprep.subr.bf16.mxu0 0
    %3446 = vmatpush1.bf16.msra.mxu0 0
    %3447 = vmatprep.subr.bf16.mxu0 0
    %3448 = vmatpush1.bf16.msra.mxu0 0
    %3449 = vmatprep.subr.bf16.mxu0 0
    %3450 = vmatpush1.bf16.msra.mxu0 0
    %3451 = vmatprep.subr.bf16.mxu0 0
    %3452 = vmatpush1.bf16.msra.mxu0 0
    %3453 = vmatprep.mubr.bf16.mxu0 0
    %3454 = vmatmul.mubr.bf16.gmra.mrb[0].mxu0 %v3058
    %v3455 = vpop.f32.mrb[0].mxu0
    %v3456 = vadd.f32 0.0, %v3455
    %v3457 = vpop.f32.mrb[0].mxu0
    %v3458 = vadd.f32 0.0, %v3457
    %v3459 = vpop.f32.mrb[0].mxu0
    %v3460 = vpop.f32.mrb[0].mxu0
    %3461 = vdwg.mxu0
    %3462 = vmatprep.subr.bf16.mxu0 %v3257
    %3463 = vmatpush1.bf16.msra.mxu0 %v3256
    %3464 = vmatprep.subr.bf16.mxu0 %v3265
    %3465 = vmatpush1.bf16.msra.mxu0 %v3264
    %3466 = vmatprep.subr.bf16.mxu0 %v3273
    %3467 = vmatpush1.bf16.msra.mxu0 %v3272
    %3468 = vmatprep.subr.bf16.mxu0 %v3281
    %3469 = vmatpush1.bf16.msra.mxu0 %v3280
    %3470 = vmatprep.subr.bf16.mxu0 %v3289
    %3471 = vmatpush1.bf16.msra.mxu0 %v3288
    %3472 = vmatprep.subr.bf16.mxu0 %v3297
    %3473 = vmatpush1.bf16.msra.mxu0 %v3296
    %3474 = vmatprep.subr.bf16.mxu0 %v3305
    %3475 = vmatpush1.bf16.msra.mxu0 %v3304
    %3476 = vmatprep.subr.bf16.mxu0 %v3313
    %3477 = vmatpush1.bf16.msra.mxu0 %v3312
    %3478 = vmatprep.subr.bf16.mxu0 0
    %3479 = vmatpush1.bf16.msra.mxu0 0
    %3480 = vmatprep.subr.bf16.mxu0 0
    %3481 = vmatpush1.bf16.msra.mxu0 0
    %3482 = vmatprep.subr.bf16.mxu0 0
    %3483 = vmatpush1.bf16.msra.mxu0 0
    %3484 = vmatprep.subr.bf16.mxu0 0
    %3485 = vmatpush1.bf16.msra.mxu0 0
    %3486 = vmatprep.subr.bf16.mxu0 0
    %3487 = vmatpush1.bf16.msra.mxu0 0
    %3488 = vmatprep.subr.bf16.mxu0 0
    %3489 = vmatpush1.bf16.msra.mxu0 0
    %3490 = vmatprep.subr.bf16.mxu0 0
    %3491 = vmatpush1.bf16.msra.mxu0 0
    %3492 = vmatprep.subr.bf16.mxu0 0
    %3493 = vmatpush1.bf16.msra.mxu0 0
    %3494 = vmatprep.mubr.bf16.mxu0 0
    %3495 = vmatmul.mubr.bf16.gmra.mrb[0].mxu0 %v3058
    %v3496 = vpop.f32.mrb[0].mxu0
    %v3497 = vadd.f32 0.0, %v3496
    %v3498 = vpop.f32.mrb[0].mxu0
    %v3499 = vadd.f32 0.0, %v3498
    %v3500 = vpop.f32.mrb[0].mxu0
    %v3501 = vpop.f32.mrb[0].mxu0
    %3502 = vdwg.mxu0
    %3503 = vmatprep.subr.bf16.mxu0 %v3259
    %3504 = vmatpush1.bf16.msra.mxu0 %v3258
    %3505 = vmatprep.subr.bf16.mxu0 %v3267
    %3506 = vmatpush1.bf16.msra.mxu0 %v3266
    %3507 = vmatprep.subr.bf16.mxu0 %v3275
    %3508 = vmatpush1.bf16.msra.mxu0 %v3274
    %3509 = vmatprep.subr.bf16.mxu0 %v3283
    %3510 = vmatpush1.bf16.msra.mxu0 %v3282
    %3511 = vmatprep.subr.bf16.mxu0 %v3291
    %3512 = vmatpush1.bf16.msra.mxu0 %v3290
    %3513 = vmatprep.subr.bf16.mxu0 %v3299
    %3514 = vmatpush1.bf16.msra.mxu0 %v3298
    %3515 = vmatprep.subr.bf16.mxu0 %v3307
    %3516 = vmatpush1.bf16.msra.mxu0 %v3306
    %3517 = vmatprep.subr.bf16.mxu0 %v3315
    %3518 = vmatpush1.bf16.msra.mxu0 %v3314
    %3519 = vmatprep.subr.bf16.mxu0 0
    %3520 = vmatpush1.bf16.msra.mxu0 0
    %3521 = vmatprep.subr.bf16.mxu0 0
    %3522 = vmatpush1.bf16.msra.mxu0 0
    %3523 = vmatprep.subr.bf16.mxu0 0
    %3524 = vmatpush1.bf16.msra.mxu0 0
    %3525 = vmatprep.subr.bf16.mxu0 0
    %3526 = vmatpush1.bf16.msra.mxu0 0
    %3527 = vmatprep.subr.bf16.mxu0 0
    %3528 = vmatpush1.bf16.msra.mxu0 0
    %3529 = vmatprep.subr.bf16.mxu0 0
    %3530 = vmatpush1.bf16.msra.mxu0 0
    %3531 = vmatprep.subr.bf16.mxu0 0
    %3532 = vmatpush1.bf16.msra.mxu0 0
    %3533 = vmatprep.subr.bf16.mxu0 0
    %3534 = vmatpush1.bf16.msra.mxu0 0
    %3535 = vmatprep.mubr.bf16.mxu0 0
    %3536 = vmatmul.mubr.bf16.gmra.mrb[0].mxu0 %v3058
    %v3537 = vpop.f32.mrb[0].mxu0
    %v3538 = vadd.f32 0.0, %v3537
    %v3539 = vpop.f32.mrb[0].mxu0
    %v3540 = vadd.f32 0.0, %v3539
    %v3541 = vpop.f32.mrb[0].mxu0
    %v3542 = vpop.f32.mrb[0].mxu0
    %3543 = vdwg.mxu0
    %v3544 = vadd.f32 %v2971, %v3415
    %v3545 = vadd.f32 %v2972, %v3417
    %v3546 = vadd.f32 %v2973, %v3456
    %v3547 = vadd.f32 %v2974, %v3458
    %v3548 = vadd.f32 %v2975, %v3497
    %v3549 = vadd.f32 %v2976, %v3499
    %v3550 = vadd.f32 %v2977, %v3538
    %v3551 = vadd.f32 %v2978, %v3540
    %s3552 = scalar_lea.vmem [#allocation9], 2048
    %v3553 = vld [vmem:[%s3552] sm:$0xff]
    %v3554 = vld [vmem:[%s3552 + $0x8] sm:$0xff]
    %v3555 = vld [vmem:[%s3552 + $0x10] sm:$0xff]
    %v3556 = vld [vmem:[%s3552 + $0x18] sm:$0xff]
    %v3557 = vld [vmem:[%s3552 + $0x20] sm:$0xff]
    %v3558 = vld [vmem:[%s3552 + $0x28] sm:$0xff]
    %v3559 = vld [vmem:[%s3552 + $0x30] sm:$0xff]
    %v3560 = vld [vmem:[%s3552 + $0x38] sm:$0xff]
    %v3561 = vld [vmem:[%s3552 + $0x40] sm:$0xff]
    %v3562 = vld [vmem:[%s3552 + $0x48] sm:$0xff]
    %v3563 = vld [vmem:[%s3552 + $0x50] sm:$0xff]
    %v3564 = vld [vmem:[%s3552 + $0x58] sm:$0xff]
    %v3565 = vld [vmem:[%s3552 + $0x60] sm:$0xff]
    %v3566 = vld [vmem:[%s3552 + $0x68] sm:$0xff]
    %v3567 = vld [vmem:[%s3552 + $0x70] sm:$0xff]
    %v3568 = vld [vmem:[%s3552 + $0x78] sm:$0xff]
    %v3569 = vld [vmem:[%s3552 + $0x80] sm:$0xff]
    %v3570 = vld [vmem:[%s3552 + $0x88] sm:$0xff]
    %v3571 = vld [vmem:[%s3552 + $0x90] sm:$0xff]
    %v3572 = vld [vmem:[%s3552 + $0x98] sm:$0xff]
    %v3573 = vld [vmem:[%s3552 + $0xa0] sm:$0xff]
    %v3574 = vld [vmem:[%s3552 + $0xa8] sm:$0xff]
    %v3575 = vld [vmem:[%s3552 + $0xb0] sm:$0xff]
    %v3576 = vld [vmem:[%s3552 + $0xb8] sm:$0xff]
    %v3577 = vld [vmem:[%s3552 + $0xc0] sm:$0xff]
    %v3578 = vld [vmem:[%s3552 + $0xc8] sm:$0xff]
    %v3579 = vld [vmem:[%s3552 + $0xd0] sm:$0xff]
    %v3580 = vld [vmem:[%s3552 + $0xd8] sm:$0xff]
    %v3581 = vld [vmem:[%s3552 + $0xe0] sm:$0xff]
    %v3582 = vld [vmem:[%s3552 + $0xe8] sm:$0xff]
    %v3583 = vld [vmem:[%s3552 + $0xf0] sm:$0xff]
    %v3584 = vld [vmem:[%s3552 + $0xf8] sm:$0xff]
    %v3585 = vld [vmem:[%s3552 + $0x100] sm:$0xff]
    %v3586 = vld [vmem:[%s3552 + $0x108] sm:$0xff]
    %v3587 = vld [vmem:[%s3552 + $0x110] sm:$0xff]
    %v3588 = vld [vmem:[%s3552 + $0x118] sm:$0xff]
    %v3589 = vld [vmem:[%s3552 + $0x120] sm:$0xff]
    %v3590 = vld [vmem:[%s3552 + $0x128] sm:$0xff]
    %v3591 = vld [vmem:[%s3552 + $0x130] sm:$0xff]
    %v3592 = vld [vmem:[%s3552 + $0x138] sm:$0xff]
    %v3593 = vld [vmem:[%s3552 + $0x140] sm:$0xff]
    %v3594 = vld [vmem:[%s3552 + $0x148] sm:$0xff]
    %v3595 = vld [vmem:[%s3552 + $0x150] sm:$0xff]
    %v3596 = vld [vmem:[%s3552 + $0x158] sm:$0xff]
    %v3597 = vld [vmem:[%s3552 + $0x160] sm:$0xff]
    %v3598 = vld [vmem:[%s3552 + $0x168] sm:$0xff]
    %v3599 = vld [vmem:[%s3552 + $0x170] sm:$0xff]
    %v3600 = vld [vmem:[%s3552 + $0x178] sm:$0xff]
    %v3601 = vld [vmem:[%s3552 + $0x180] sm:$0xff]
    %v3602 = vld [vmem:[%s3552 + $0x188] sm:$0xff]
    %v3603 = vld [vmem:[%s3552 + $0x190] sm:$0xff]
    %v3604 = vld [vmem:[%s3552 + $0x198] sm:$0xff]
    %v3605 = vld [vmem:[%s3552 + $0x1a0] sm:$0xff]
    %v3606 = vld [vmem:[%s3552 + $0x1a8] sm:$0xff]
    %v3607 = vld [vmem:[%s3552 + $0x1b0] sm:$0xff]
    %v3608 = vld [vmem:[%s3552 + $0x1b8] sm:$0xff]
    %v3609 = vld [vmem:[%s3552 + $0x1c0] sm:$0xff]
    %v3610 = vld [vmem:[%s3552 + $0x1c8] sm:$0xff]
    %v3611 = vld [vmem:[%s3552 + $0x1d0] sm:$0xff]
    %v3612 = vld [vmem:[%s3552 + $0x1d8] sm:$0xff]
    %v3613 = vld [vmem:[%s3552 + $0x1e0] sm:$0xff]
    %v3614 = vld [vmem:[%s3552 + $0x1e8] sm:$0xff]
    %v3615 = vld [vmem:[%s3552 + $0x1f0] sm:$0xff]
    %v3616 = vld [vmem:[%s3552 + $0x1f8] sm:$0xff]
    %v3617 = vrot.slane %v1391, 4
    %v3618 = vrot.slane %v1392, 3
    %v3619 = vsel %vm1400, %v3618, %v3617
    %v3620 = vrot.slane %v1393, 2
    %v3621 = vsel %vm1403, %v3620, %v3619
    %v3622 = vrot.slane %v1394, 1
    %v3623 = vsel %vm1406, %v3622, %v3621
    %v3624 = vsel %vm1409, %v1395, %v3623
    %v3625 = vrot.slane %v1396, 7
    %v3626 = vsel %vm1412, %v3625, %v3624
    %v3627 = vrot.slane %v1397, 6
    %v3628 = vsel %vm1415, %v3627, %v3626
    %v3629 = vrot.slane %v1398, 5
    %v3630 = vsel %vm1418, %v3629, %v3628
    %v3631 = vpack.c.b16 %v3630, %v3630
    %v3697 = vunpack.c.l.b16 %v3553
    %v3698 = vunpack.c.h.b16 %v3553
    %v3699 = vunpack.c.l.b16 %v3554
    %v3700 = vunpack.c.h.b16 %v3554
    %v3701 = vunpack.c.l.b16 %v3555
    %v3702 = vunpack.c.h.b16 %v3555
    %v3703 = vunpack.c.l.b16 %v3556
    %v3704 = vunpack.c.h.b16 %v3556
    %v3705 = vunpack.c.l.b16 %v3557
    %v3706 = vunpack.c.h.b16 %v3557
    %v3707 = vunpack.c.l.b16 %v3558
    %v3708 = vunpack.c.h.b16 %v3558
    %v3709 = vunpack.c.l.b16 %v3559
    %v3710 = vunpack.c.h.b16 %v3559
    %v3711 = vunpack.c.l.b16 %v3560
    %v3712 = vunpack.c.h.b16 %v3560
    %v3713 = vunpack.c.l.b16 %v3561
    %v3714 = vunpack.c.h.b16 %v3561
    %v3715 = vunpack.c.l.b16 %v3562
    %v3716 = vunpack.c.h.b16 %v3562
    %v3717 = vunpack.c.l.b16 %v3563
    %v3718 = vunpack.c.h.b16 %v3563
    %v3719 = vunpack.c.l.b16 %v3564
    %v3720 = vunpack.c.h.b16 %v3564
    %v3721 = vunpack.c.l.b16 %v3565
    %v3722 = vunpack.c.h.b16 %v3565
    %v3723 = vunpack.c.l.b16 %v3566
    %v3724 = vunpack.c.h.b16 %v3566
    %v3725 = vunpack.c.l.b16 %v3567
    %v3726 = vunpack.c.h.b16 %v3567
    %v3727 = vunpack.c.l.b16 %v3568
    %v3728 = vunpack.c.h.b16 %v3568
    %v3729 = vunpack.c.l.b16 %v3569
    %v3730 = vunpack.c.h.b16 %v3569
    %v3731 = vunpack.c.l.b16 %v3570
    %v3732 = vunpack.c.h.b16 %v3570
    %v3733 = vunpack.c.l.b16 %v3571
    %v3734 = vunpack.c.h.b16 %v3571
    %v3735 = vunpack.c.l.b16 %v3572
    %v3736 = vunpack.c.h.b16 %v3572
    %v3737 = vunpack.c.l.b16 %v3573
    %v3738 = vunpack.c.h.b16 %v3573
    %v3739 = vunpack.c.l.b16 %v3574
    %v3740 = vunpack.c.h.b16 %v3574
    %v3741 = vunpack.c.l.b16 %v3575
    %v3742 = vunpack.c.h.b16 %v3575
    %v3743 = vunpack.c.l.b16 %v3576
    %v3744 = vunpack.c.h.b16 %v3576
    %v3745 = vunpack.c.l.b16 %v3577
    %v3746 = vunpack.c.h.b16 %v3577
    %v3747 = vunpack.c.l.b16 %v3578
    %v3748 = vunpack.c.h.b16 %v3578
    %v3749 = vunpack.c.l.b16 %v3579
    %v3750 = vunpack.c.h.b16 %v3579
    %v3751 = vunpack.c.l.b16 %v3580
    %v3752 = vunpack.c.h.b16 %v3580
    %v3753 = vunpack.c.l.b16 %v3581
    %v3754 = vunpack.c.h.b16 %v3581
    %v3755 = vunpack.c.l.b16 %v3582
    %v3756 = vunpack.c.h.b16 %v3582
    %v3757 = vunpack.c.l.b16 %v3583
    %v3758 = vunpack.c.h.b16 %v3583
    %v3759 = vunpack.c.l.b16 %v3584
    %v3760 = vunpack.c.h.b16 %v3584
    %v3761 = vunpack.c.l.b16 %v3585
    %v3762 = vunpack.c.h.b16 %v3585
    %v3763 = vunpack.c.l.b16 %v3586
    %v3764 = vunpack.c.h.b16 %v3586
    %v3765 = vunpack.c.l.b16 %v3587
    %v3766 = vunpack.c.h.b16 %v3587
    %v3767 = vunpack.c.l.b16 %v3588
    %v3768 = vunpack.c.h.b16 %v3588
    %v3769 = vunpack.c.l.b16 %v3589
    %v3770 = vunpack.c.h.b16 %v3589
    %v3771 = vunpack.c.l.b16 %v3590
    %v3772 = vunpack.c.h.b16 %v3590
    %v3773 = vunpack.c.l.b16 %v3591
    %v3774 = vunpack.c.h.b16 %v3591
    %v3775 = vunpack.c.l.b16 %v3592
    %v3776 = vunpack.c.h.b16 %v3592
    %v3777 = vunpack.c.l.b16 %v3593
    %v3778 = vunpack.c.h.b16 %v3593
    %v3779 = vunpack.c.l.b16 %v3594
    %v3780 = vunpack.c.h.b16 %v3594
    %v3781 = vunpack.c.l.b16 %v3595
    %v3782 = vunpack.c.h.b16 %v3595
    %v3783 = vunpack.c.l.b16 %v3596
    %v3784 = vunpack.c.h.b16 %v3596
    %v3785 = vunpack.c.l.b16 %v3597
    %v3786 = vunpack.c.h.b16 %v3597
    %v3787 = vunpack.c.l.b16 %v3598
    %v3788 = vunpack.c.h.b16 %v3598
    %v3789 = vunpack.c.l.b16 %v3599
    %v3790 = vunpack.c.h.b16 %v3599
    %v3791 = vunpack.c.l.b16 %v3600
    %v3792 = vunpack.c.h.b16 %v3600
    %v3793 = vunpack.c.l.b16 %v3601
    %v3794 = vunpack.c.h.b16 %v3601
    %v3795 = vunpack.c.l.b16 %v3602
    %v3796 = vunpack.c.h.b16 %v3602
    %v3797 = vunpack.c.l.b16 %v3603
    %v3798 = vunpack.c.h.b16 %v3603
    %v3799 = vunpack.c.l.b16 %v3604
    %v3800 = vunpack.c.h.b16 %v3604
    %v3801 = vunpack.c.l.b16 %v3605
    %v3802 = vunpack.c.h.b16 %v3605
    %v3803 = vunpack.c.l.b16 %v3606
    %v3804 = vunpack.c.h.b16 %v3606
    %v3805 = vunpack.c.l.b16 %v3607
    %v3806 = vunpack.c.h.b16 %v3607
    %v3807 = vunpack.c.l.b16 %v3608
    %v3808 = vunpack.c.h.b16 %v3608
    %v3809 = vunpack.c.l.b16 %v3609
    %v3810 = vunpack.c.h.b16 %v3609
    %v3811 = vunpack.c.l.b16 %v3610
    %v3812 = vunpack.c.h.b16 %v3610
    %v3813 = vunpack.c.l.b16 %v3611
    %v3814 = vunpack.c.h.b16 %v3611
    %v3815 = vunpack.c.l.b16 %v3612
    %v3816 = vunpack.c.h.b16 %v3612
    %v3817 = vunpack.c.l.b16 %v3613
    %v3818 = vunpack.c.h.b16 %v3613
    %v3819 = vunpack.c.l.b16 %v3614
    %v3820 = vunpack.c.h.b16 %v3614
    %v3821 = vunpack.c.l.b16 %v3615
    %v3822 = vunpack.c.h.b16 %v3615
    %v3823 = vunpack.c.l.b16 %v3616
    %v3824 = vunpack.c.h.b16 %v3616
    %v3825 = vpack.c.b16 %v3705, %v3697
    %v3826 = vpack.c.b16 %v3706, %v3698
    %v3827 = vpack.c.b16 %v3707, %v3699
    %v3828 = vpack.c.b16 %v3708, %v3700
    %v3829 = vpack.c.b16 %v3709, %v3701
    %v3830 = vpack.c.b16 %v3710, %v3702
    %v3831 = vpack.c.b16 %v3711, %v3703
    %v3832 = vpack.c.b16 %v3712, %v3704
    %v3833 = vpack.c.b16 %v3721, %v3713
    %v3834 = vpack.c.b16 %v3722, %v3714
    %v3835 = vpack.c.b16 %v3723, %v3715
    %v3836 = vpack.c.b16 %v3724, %v3716
    %v3837 = vpack.c.b16 %v3725, %v3717
    %v3838 = vpack.c.b16 %v3726, %v3718
    %v3839 = vpack.c.b16 %v3727, %v3719
    %v3840 = vpack.c.b16 %v3728, %v3720
    %v3841 = vpack.c.b16 %v3737, %v3729
    %v3842 = vpack.c.b16 %v3738, %v3730
    %v3843 = vpack.c.b16 %v3739, %v3731
    %v3844 = vpack.c.b16 %v3740, %v3732
    %v3845 = vpack.c.b16 %v3741, %v3733
    %v3846 = vpack.c.b16 %v3742, %v3734
    %v3847 = vpack.c.b16 %v3743, %v3735
    %v3848 = vpack.c.b16 %v3744, %v3736
    %v3849 = vpack.c.b16 %v3753, %v3745
    %v3850 = vpack.c.b16 %v3754, %v3746
    %v3851 = vpack.c.b16 %v3755, %v3747
    %v3852 = vpack.c.b16 %v3756, %v3748
    %v3853 = vpack.c.b16 %v3757, %v3749
    %v3854 = vpack.c.b16 %v3758, %v3750
    %v3855 = vpack.c.b16 %v3759, %v3751
    %v3856 = vpack.c.b16 %v3760, %v3752
    %v3857 = vpack.c.b16 %v3769, %v3761
    %v3858 = vpack.c.b16 %v3770, %v3762
    %v3859 = vpack.c.b16 %v3771, %v3763
    %v3860 = vpack.c.b16 %v3772, %v3764
    %v3861 = vpack.c.b16 %v3773, %v3765
    %v3862 = vpack.c.b16 %v3774, %v3766
    %v3863 = vpack.c.b16 %v3775, %v3767
    %v3864 = vpack.c.b16 %v3776, %v3768
    %v3865 = vpack.c.b16 %v3785, %v3777
    %v3866 = vpack.c.b16 %v3786, %v3778
    %v3867 = vpack.c.b16 %v3787, %v3779
    %v3868 = vpack.c.b16 %v3788, %v3780
    %v3869 = vpack.c.b16 %v3789, %v3781
    %v3870 = vpack.c.b16 %v3790, %v3782
    %v3871 = vpack.c.b16 %v3791, %v3783
    %v3872 = vpack.c.b16 %v3792, %v3784
    %v3873 = vpack.c.b16 %v3801, %v3793
    %v3874 = vpack.c.b16 %v3802, %v3794
    %v3875 = vpack.c.b16 %v3803, %v3795
    %v3876 = vpack.c.b16 %v3804, %v3796
    %v3877 = vpack.c.b16 %v3805, %v3797
    %v3878 = vpack.c.b16 %v3806, %v3798
    %v3879 = vpack.c.b16 %v3807, %v3799
    %v3880 = vpack.c.b16 %v3808, %v3800
    %v3881 = vpack.c.b16 %v3817, %v3809
    %v3882 = vpack.c.b16 %v3818, %v3810
    %v3883 = vpack.c.b16 %v3819, %v3811
    %v3884 = vpack.c.b16 %v3820, %v3812
    %v3885 = vpack.c.b16 %v3821, %v3813
    %v3886 = vpack.c.b16 %v3822, %v3814
    %v3887 = vpack.c.b16 %v3823, %v3815
    %v3888 = vpack.c.b16 %v3824, %v3816
    %3953 = vmatprep.subr.bf16.mxu0 %v3826
    %3954 = vmatpush1.bf16.msra.mxu0 %v3825
    %3955 = vmatprep.subr.bf16.mxu0 %v3834
    %3956 = vmatpush1.bf16.msra.mxu0 %v3833
    %3957 = vmatprep.subr.bf16.mxu0 %v3842
    %3958 = vmatpush1.bf16.msra.mxu0 %v3841
    %3959 = vmatprep.subr.bf16.mxu0 %v3850
    %3960 = vmatpush1.bf16.msra.mxu0 %v3849
    %3961 = vmatprep.subr.bf16.mxu0 %v3858
    %3962 = vmatpush1.bf16.msra.mxu0 %v3857
    %3963 = vmatprep.subr.bf16.mxu0 %v3866
    %3964 = vmatpush1.bf16.msra.mxu0 %v3865
    %3965 = vmatprep.subr.bf16.mxu0 %v3874
    %3966 = vmatpush1.bf16.msra.mxu0 %v3873
    %3967 = vmatprep.subr.bf16.mxu0 %v3882
    %3968 = vmatpush1.bf16.msra.mxu0 %v3881
    %3969 = vmatprep.subr.bf16.mxu0 0
    %3970 = vmatpush1.bf16.msra.mxu0 0
    %3971 = vmatprep.subr.bf16.mxu0 0
    %3972 = vmatpush1.bf16.msra.mxu0 0
    %3973 = vmatprep.subr.bf16.mxu0 0
    %3974 = vmatpush1.bf16.msra.mxu0 0
    %3975 = vmatprep.subr.bf16.mxu0 0
    %3976 = vmatpush1.bf16.msra.mxu0 0
    %3977 = vmatprep.subr.bf16.mxu0 0
    %3978 = vmatpush1.bf16.msra.mxu0 0
    %3979 = vmatprep.subr.bf16.mxu0 0
    %3980 = vmatpush1.bf16.msra.mxu0 0
    %3981 = vmatprep.subr.bf16.mxu0 0
    %3982 = vmatpush1.bf16.msra.mxu0 0
    %3983 = vmatprep.subr.bf16.mxu0 0
    %3984 = vmatpush1.bf16.msra.mxu0 0
    %3985 = vmatprep.mubr.bf16.mxu0 0
    %3986 = vmatmul.mubr.bf16.gmra.mrb[0].mxu0 %v3631
    %v3987 = vpop.f32.mrb[0].mxu0
    %v3988 = vadd.f32 0.0, %v3987
    %v3989 = vpop.f32.mrb[0].mxu0
    %v3990 = vadd.f32 0.0, %v3989
    %v3991 = vpop.f32.mrb[0].mxu0
    %v3992 = vpop.f32.mrb[0].mxu0
    %3993 = vdwg.mxu0
    %3994 = vmatprep.subr.bf16.mxu0 %v3828
    %3995 = vmatpush1.bf16.msra.mxu0 %v3827
    %3996 = vmatprep.subr.bf16.mxu0 %v3836
    %3997 = vmatpush1.bf16.msra.mxu0 %v3835
    %3998 = vmatprep.subr.bf16.mxu0 %v3844
    %3999 = vmatpush1.bf16.msra.mxu0 %v3843
    %4000 = vmatprep.subr.bf16.mxu0 %v3852
    %4001 = vmatpush1.bf16.msra.mxu0 %v3851
    %4002 = vmatprep.subr.bf16.mxu0 %v3860
    %4003 = vmatpush1.bf16.msra.mxu0 %v3859
    %4004 = vmatprep.subr.bf16.mxu0 %v3868
    %4005 = vmatpush1.bf16.msra.mxu0 %v3867
    %4006 = vmatprep.subr.bf16.mxu0 %v3876
    %4007 = vmatpush1.bf16.msra.mxu0 %v3875
    %4008 = vmatprep.subr.bf16.mxu0 %v3884
    %4009 = vmatpush1.bf16.msra.mxu0 %v3883
    %4010 = vmatprep.subr.bf16.mxu0 0
    %4011 = vmatpush1.bf16.msra.mxu0 0
    %4012 = vmatprep.subr.bf16.mxu0 0
    %4013 = vmatpush1.bf16.msra.mxu0 0
    %4014 = vmatprep.subr.bf16.mxu0 0
    %4015 = vmatpush1.bf16.msra.mxu0 0
    %4016 = vmatprep.subr.bf16.mxu0 0
    %4017 = vmatpush1.bf16.msra.mxu0 0
    %4018 = vmatprep.subr.bf16.mxu0 0
    %4019 = vmatpush1.bf16.msra.mxu0 0
    %4020 = vmatprep.subr.bf16.mxu0 0
    %4021 = vmatpush1.bf16.msra.mxu0 0
    %4022 = vmatprep.subr.bf16.mxu0 0
    %4023 = vmatpush1.bf16.msra.mxu0 0
    %4024 = vmatprep.subr.bf16.mxu0 0
    %4025 = vmatpush1.bf16.msra.mxu0 0
    %4026 = vmatprep.mubr.bf16.mxu0 0
    %4027 = vmatmul.mubr.bf16.gmra.mrb[0].mxu0 %v3631
    %v4028 = vpop.f32.mrb[0].mxu0
    %v4029 = vadd.f32 0.0, %v4028
    %v4030 = vpop.f32.mrb[0].mxu0
    %v4031 = vadd.f32 0.0, %v4030
    %v4032 = vpop.f32.mrb[0].mxu0
    %v4033 = vpop.f32.mrb[0].mxu0
    %4034 = vdwg.mxu0
    %4035 = vmatprep.subr.bf16.mxu0 %v3830
    %4036 = vmatpush1.bf16.msra.mxu0 %v3829
    %4037 = vmatprep.subr.bf16.mxu0 %v3838
    %4038 = vmatpush1.bf16.msra.mxu0 %v3837
    %4039 = vmatprep.subr.bf16.mxu0 %v3846
    %4040 = vmatpush1.bf16.msra.mxu0 %v3845
    %4041 = vmatprep.subr.bf16.mxu0 %v3854
    %4042 = vmatpush1.bf16.msra.mxu0 %v3853
    %4043 = vmatprep.subr.bf16.mxu0 %v3862
    %4044 = vmatpush1.bf16.msra.mxu0 %v3861
    %4045 = vmatprep.subr.bf16.mxu0 %v3870
    %4046 = vmatpush1.bf16.msra.mxu0 %v3869
    %4047 = vmatprep.subr.bf16.mxu0 %v3878
    %4048 = vmatpush1.bf16.msra.mxu0 %v3877
    %4049 = vmatprep.subr.bf16.mxu0 %v3886
    %4050 = vmatpush1.bf16.msra.mxu0 %v3885
    %4051 = vmatprep.subr.bf16.mxu0 0
    %4052 = vmatpush1.bf16.msra.mxu0 0
    %4053 = vmatprep.subr.bf16.mxu0 0
    %4054 = vmatpush1.bf16.msra.mxu0 0
    %4055 = vmatprep.subr.bf16.mxu0 0
    %4056 = vmatpush1.bf16.msra.mxu0 0
    %4057 = vmatprep.subr.bf16.mxu0 0
    %4058 = vmatpush1.bf16.msra.mxu0 0
    %4059 = vmatprep.subr.bf16.mxu0 0
    %4060 = vmatpush1.bf16.msra.mxu0 0
    %4061 = vmatprep.subr.bf16.mxu0 0
    %4062 = vmatpush1.bf16.msra.mxu0 0
    %4063 = vmatprep.subr.bf16.mxu0 0
    %4064 = vmatpush1.bf16.msra.mxu0 0
    %4065 = vmatprep.subr.bf16.mxu0 0
    %4066 = vmatpush1.bf16.msra.mxu0 0
    %4067 = vmatprep.mubr.bf16.mxu0 0
    %4068 = vmatmul.mubr.bf16.gmra.mrb[0].mxu0 %v3631
    %v4069 = vpop.f32.mrb[0].mxu0
    %v4070 = vadd.f32 0.0, %v4069
    %v4071 = vpop.f32.mrb[0].mxu0
    %v4072 = vadd.f32 0.0, %v4071
    %v4073 = vpop.f32.mrb[0].mxu0
    %v4074 = vpop.f32.mrb[0].mxu0
    %4075 = vdwg.mxu0
    %4076 = vmatprep.subr.bf16.mxu0 %v3832
    %4077 = vmatpush1.bf16.msra.mxu0 %v3831
    %4078 = vmatprep.subr.bf16.mxu0 %v3840
    %4079 = vmatpush1.bf16.msra.mxu0 %v3839
    %4080 = vmatprep.subr.bf16.mxu0 %v3848
    %4081 = vmatpush1.bf16.msra.mxu0 %v3847
    %4082 = vmatprep.subr.bf16.mxu0 %v3856
    %4083 = vmatpush1.bf16.msra.mxu0 %v3855
    %4084 = vmatprep.subr.bf16.mxu0 %v3864
    %4085 = vmatpush1.bf16.msra.mxu0 %v3863
    %4086 = vmatprep.subr.bf16.mxu0 %v3872
    %4087 = vmatpush1.bf16.msra.mxu0 %v3871
    %4088 = vmatprep.subr.bf16.mxu0 %v3880
    %4089 = vmatpush1.bf16.msra.mxu0 %v3879
    %4090 = vmatprep.subr.bf16.mxu0 %v3888
    %4091 = vmatpush1.bf16.msra.mxu0 %v3887
    %4092 = vmatprep.subr.bf16.mxu0 0
    %4093 = vmatpush1.bf16.msra.mxu0 0
    %4094 = vmatprep.subr.bf16.mxu0 0
    %4095 = vmatpush1.bf16.msra.mxu0 0
    %4096 = vmatprep.subr.bf16.mxu0 0
    %4097 = vmatpush1.bf16.msra.mxu0 0
    %4098 = vmatprep.subr.bf16.mxu0 0
    %4099 = vmatpush1.bf16.msra.mxu0 0
    %4100 = vmatprep.subr.bf16.mxu0 0
    %4101 = vmatpush1.bf16.msra.mxu0 0
    %4102 = vmatprep.subr.bf16.mxu0 0
    %4103 = vmatpush1.bf16.msra.mxu0 0
    %4104 = vmatprep.subr.bf16.mxu0 0
    %4105 = vmatpush1.bf16.msra.mxu0 0
    %4106 = vmatprep.subr.bf16.mxu0 0
    %4107 = vmatpush1.bf16.msra.mxu0 0
    %4108 = vmatprep.mubr.bf16.mxu0 0
    %4109 = vmatmul.mubr.bf16.gmra.mrb[0].mxu0 %v3631
    %v4110 = vpop.f32.mrb[0].mxu0
    %v4111 = vadd.f32 0.0, %v4110
    %v4112 = vpop.f32.mrb[0].mxu0
    %v4113 = vadd.f32 0.0, %v4112
    %v4114 = vpop.f32.mrb[0].mxu0
    %v4115 = vpop.f32.mrb[0].mxu0
    %4116 = vdwg.mxu0
    %v4117 = vadd.f32 %v3544, %v3988
    %v4118 = vadd.f32 %v3545, %v3990
    %v4119 = vadd.f32 %v3546, %v4029
    %v4120 = vadd.f32 %v3547, %v4031
    %v4121 = vadd.f32 %v3548, %v4070
    %v4122 = vadd.f32 %v3549, %v4072
    %v4123 = vadd.f32 %v3550, %v4111
    %v4124 = vadd.f32 %v3551, %v4113
    %s4125 = scalar_lea.vmem [#allocation9], 2560
    %v4126 = vld [vmem:[%s4125] sm:$0xff]
    %v4127 = vld [vmem:[%s4125 + $0x8] sm:$0xff]
    %v4128 = vld [vmem:[%s4125 + $0x10] sm:$0xff]
    %v4129 = vld [vmem:[%s4125 + $0x18] sm:$0xff]
    %v4130 = vld [vmem:[%s4125 + $0x20] sm:$0xff]
    %v4131 = vld [vmem:[%s4125 + $0x28] sm:$0xff]
    %v4132 = vld [vmem:[%s4125 + $0x30] sm:$0xff]
    %v4133 = vld [vmem:[%s4125 + $0x38] sm:$0xff]
    %v4134 = vld [vmem:[%s4125 + $0x40] sm:$0xff]
    %v4135 = vld [vmem:[%s4125 + $0x48] sm:$0xff]
    %v4136 = vld [vmem:[%s4125 + $0x50] sm:$0xff]
    %v4137 = vld [vmem:[%s4125 + $0x58] sm:$0xff]
    %v4138 = vld [vmem:[%s4125 + $0x60] sm:$0xff]
    %v4139 = vld [vmem:[%s4125 + $0x68] sm:$0xff]
    %v4140 = vld [vmem:[%s4125 + $0x70] sm:$0xff]
    %v4141 = vld [vmem:[%s4125 + $0x78] sm:$0xff]
    %v4142 = vld [vmem:[%s4125 + $0x80] sm:$0xff]
    %v4143 = vld [vmem:[%s4125 + $0x88] sm:$0xff]
    %v4144 = vld [vmem:[%s4125 + $0x90] sm:$0xff]
    %v4145 = vld [vmem:[%s4125 + $0x98] sm:$0xff]
    %v4146 = vld [vmem:[%s4125 + $0xa0] sm:$0xff]
    %v4147 = vld [vmem:[%s4125 + $0xa8] sm:$0xff]
    %v4148 = vld [vmem:[%s4125 + $0xb0] sm:$0xff]
    %v4149 = vld [vmem:[%s4125 + $0xb8] sm:$0xff]
    %v4150 = vld [vmem:[%s4125 + $0xc0] sm:$0xff]
    %v4151 = vld [vmem:[%s4125 + $0xc8] sm:$0xff]
    %v4152 = vld [vmem:[%s4125 + $0xd0] sm:$0xff]
    %v4153 = vld [vmem:[%s4125 + $0xd8] sm:$0xff]
    %v4154 = vld [vmem:[%s4125 + $0xe0] sm:$0xff]
    %v4155 = vld [vmem:[%s4125 + $0xe8] sm:$0xff]
    %v4156 = vld [vmem:[%s4125 + $0xf0] sm:$0xff]
    %v4157 = vld [vmem:[%s4125 + $0xf8] sm:$0xff]
    %v4158 = vld [vmem:[%s4125 + $0x100] sm:$0xff]
    %v4159 = vld [vmem:[%s4125 + $0x108] sm:$0xff]
    %v4160 = vld [vmem:[%s4125 + $0x110] sm:$0xff]
    %v4161 = vld [vmem:[%s4125 + $0x118] sm:$0xff]
    %v4162 = vld [vmem:[%s4125 + $0x120] sm:$0xff]
    %v4163 = vld [vmem:[%s4125 + $0x128] sm:$0xff]
    %v4164 = vld [vmem:[%s4125 + $0x130] sm:$0xff]
    %v4165 = vld [vmem:[%s4125 + $0x138] sm:$0xff]
    %v4166 = vld [vmem:[%s4125 + $0x140] sm:$0xff]
    %v4167 = vld [vmem:[%s4125 + $0x148] sm:$0xff]
    %v4168 = vld [vmem:[%s4125 + $0x150] sm:$0xff]
    %v4169 = vld [vmem:[%s4125 + $0x158] sm:$0xff]
    %v4170 = vld [vmem:[%s4125 + $0x160] sm:$0xff]
    %v4171 = vld [vmem:[%s4125 + $0x168] sm:$0xff]
    %v4172 = vld [vmem:[%s4125 + $0x170] sm:$0xff]
    %v4173 = vld [vmem:[%s4125 + $0x178] sm:$0xff]
    %v4174 = vld [vmem:[%s4125 + $0x180] sm:$0xff]
    %v4175 = vld [vmem:[%s4125 + $0x188] sm:$0xff]
    %v4176 = vld [vmem:[%s4125 + $0x190] sm:$0xff]
    %v4177 = vld [vmem:[%s4125 + $0x198] sm:$0xff]
    %v4178 = vld [vmem:[%s4125 + $0x1a0] sm:$0xff]
    %v4179 = vld [vmem:[%s4125 + $0x1a8] sm:$0xff]
    %v4180 = vld [vmem:[%s4125 + $0x1b0] sm:$0xff]
    %v4181 = vld [vmem:[%s4125 + $0x1b8] sm:$0xff]
    %v4182 = vld [vmem:[%s4125 + $0x1c0] sm:$0xff]
    %v4183 = vld [vmem:[%s4125 + $0x1c8] sm:$0xff]
    %v4184 = vld [vmem:[%s4125 + $0x1d0] sm:$0xff]
    %v4185 = vld [vmem:[%s4125 + $0x1d8] sm:$0xff]
    %v4186 = vld [vmem:[%s4125 + $0x1e0] sm:$0xff]
    %v4187 = vld [vmem:[%s4125 + $0x1e8] sm:$0xff]
    %v4188 = vld [vmem:[%s4125 + $0x1f0] sm:$0xff]
    %v4189 = vld [vmem:[%s4125 + $0x1f8] sm:$0xff]
    %v4190 = vrot.slane %v1391, 5
    %v4191 = vrot.slane %v1392, 4
    %v4192 = vsel %vm1400, %v4191, %v4190
    %v4193 = vrot.slane %v1393, 3
    %v4194 = vsel %vm1403, %v4193, %v4192
    %v4195 = vrot.slane %v1394, 2
    %v4196 = vsel %vm1406, %v4195, %v4194
    %v4197 = vrot.slane %v1395, 1
    %v4198 = vsel %vm1409, %v4197, %v4196
    %v4199 = vsel %vm1412, %v1396, %v4198
    %v4200 = vrot.slane %v1397, 7
    %v4201 = vsel %vm1415, %v4200, %v4199
    %v4202 = vrot.slane %v1398, 6
    %v4203 = vsel %vm1418, %v4202, %v4201
    %v4204 = vpack.c.b16 %v4203, %v4203
    %v4270 = vunpack.c.l.b16 %v4126
    %v4271 = vunpack.c.h.b16 %v4126
    %v4272 = vunpack.c.l.b16 %v4127
    %v4273 = vunpack.c.h.b16 %v4127
    %v4274 = vunpack.c.l.b16 %v4128
    %v4275 = vunpack.c.h.b16 %v4128
    %v4276 = vunpack.c.l.b16 %v4129
    %v4277 = vunpack.c.h.b16 %v4129
    %v4278 = vunpack.c.l.b16 %v4130
    %v4279 = vunpack.c.h.b16 %v4130
    %v4280 = vunpack.c.l.b16 %v4131
    %v4281 = vunpack.c.h.b16 %v4131
    %v4282 = vunpack.c.l.b16 %v4132
    %v4283 = vunpack.c.h.b16 %v4132
    %v4284 = vunpack.c.l.b16 %v4133
    %v4285 = vunpack.c.h.b16 %v4133
    %v4286 = vunpack.c.l.b16 %v4134
    %v4287 = vunpack.c.h.b16 %v4134
    %v4288 = vunpack.c.l.b16 %v4135
    %v4289 = vunpack.c.h.b16 %v4135
    %v4290 = vunpack.c.l.b16 %v4136
    %v4291 = vunpack.c.h.b16 %v4136
    %v4292 = vunpack.c.l.b16 %v4137
    %v4293 = vunpack.c.h.b16 %v4137
    %v4294 = vunpack.c.l.b16 %v4138
    %v4295 = vunpack.c.h.b16 %v4138
    %v4296 = vunpack.c.l.b16 %v4139
    %v4297 = vunpack.c.h.b16 %v4139
    %v4298 = vunpack.c.l.b16 %v4140
    %v4299 = vunpack.c.h.b16 %v4140
    %v4300 = vunpack.c.l.b16 %v4141
    %v4301 = vunpack.c.h.b16 %v4141
    %v4302 = vunpack.c.l.b16 %v4142
    %v4303 = vunpack.c.h.b16 %v4142
    %v4304 = vunpack.c.l.b16 %v4143
    %v4305 = vunpack.c.h.b16 %v4143
    %v4306 = vunpack.c.l.b16 %v4144
    %v4307 = vunpack.c.h.b16 %v4144
    %v4308 = vunpack.c.l.b16 %v4145
    %v4309 = vunpack.c.h.b16 %v4145
    %v4310 = vunpack.c.l.b16 %v4146
    %v4311 = vunpack.c.h.b16 %v4146
    %v4312 = vunpack.c.l.b16 %v4147
    %v4313 = vunpack.c.h.b16 %v4147
    %v4314 = vunpack.c.l.b16 %v4148
    %v4315 = vunpack.c.h.b16 %v4148
    %v4316 = vunpack.c.l.b16 %v4149
    %v4317 = vunpack.c.h.b16 %v4149
    %v4318 = vunpack.c.l.b16 %v4150
    %v4319 = vunpack.c.h.b16 %v4150
    %v4320 = vunpack.c.l.b16 %v4151
    %v4321 = vunpack.c.h.b16 %v4151
    %v4322 = vunpack.c.l.b16 %v4152
    %v4323 = vunpack.c.h.b16 %v4152
    %v4324 = vunpack.c.l.b16 %v4153
    %v4325 = vunpack.c.h.b16 %v4153
    %v4326 = vunpack.c.l.b16 %v4154
    %v4327 = vunpack.c.h.b16 %v4154
    %v4328 = vunpack.c.l.b16 %v4155
    %v4329 = vunpack.c.h.b16 %v4155
    %v4330 = vunpack.c.l.b16 %v4156
    %v4331 = vunpack.c.h.b16 %v4156
    %v4332 = vunpack.c.l.b16 %v4157
    %v4333 = vunpack.c.h.b16 %v4157
    %v4334 = vunpack.c.l.b16 %v4158
    %v4335 = vunpack.c.h.b16 %v4158
    %v4336 = vunpack.c.l.b16 %v4159
    %v4337 = vunpack.c.h.b16 %v4159
    %v4338 = vunpack.c.l.b16 %v4160
    %v4339 = vunpack.c.h.b16 %v4160
    %v4340 = vunpack.c.l.b16 %v4161
    %v4341 = vunpack.c.h.b16 %v4161
    %v4342 = vunpack.c.l.b16 %v4162
    %v4343 = vunpack.c.h.b16 %v4162
    %v4344 = vunpack.c.l.b16 %v4163
    %v4345 = vunpack.c.h.b16 %v4163
    %v4346 = vunpack.c.l.b16 %v4164
    %v4347 = vunpack.c.h.b16 %v4164
    %v4348 = vunpack.c.l.b16 %v4165
    %v4349 = vunpack.c.h.b16 %v4165
    %v4350 = vunpack.c.l.b16 %v4166
    %v4351 = vunpack.c.h.b16 %v4166
    %v4352 = vunpack.c.l.b16 %v4167
    %v4353 = vunpack.c.h.b16 %v4167
    %v4354 = vunpack.c.l.b16 %v4168
    %v4355 = vunpack.c.h.b16 %v4168
    %v4356 = vunpack.c.l.b16 %v4169
    %v4357 = vunpack.c.h.b16 %v4169
    %v4358 = vunpack.c.l.b16 %v4170
    %v4359 = vunpack.c.h.b16 %v4170
    %v4360 = vunpack.c.l.b16 %v4171
    %v4361 = vunpack.c.h.b16 %v4171
    %v4362 = vunpack.c.l.b16 %v4172
    %v4363 = vunpack.c.h.b16 %v4172
    %v4364 = vunpack.c.l.b16 %v4173
    %v4365 = vunpack.c.h.b16 %v4173
    %v4366 = vunpack.c.l.b16 %v4174
    %v4367 = vunpack.c.h.b16 %v4174
    %v4368 = vunpack.c.l.b16 %v4175
    %v4369 = vunpack.c.h.b16 %v4175
    %v4370 = vunpack.c.l.b16 %v4176
    %v4371 = vunpack.c.h.b16 %v4176
    %v4372 = vunpack.c.l.b16 %v4177
    %v4373 = vunpack.c.h.b16 %v4177
    %v4374 = vunpack.c.l.b16 %v4178
    %v4375 = vunpack.c.h.b16 %v4178
    %v4376 = vunpack.c.l.b16 %v4179
    %v4377 = vunpack.c.h.b16 %v4179
    %v4378 = vunpack.c.l.b16 %v4180
    %v4379 = vunpack.c.h.b16 %v4180
    %v4380 = vunpack.c.l.b16 %v4181
    %v4381 = vunpack.c.h.b16 %v4181
    %v4382 = vunpack.c.l.b16 %v4182
    %v4383 = vunpack.c.h.b16 %v4182
    %v4384 = vunpack.c.l.b16 %v4183
    %v4385 = vunpack.c.h.b16 %v4183
    %v4386 = vunpack.c.l.b16 %v4184
    %v4387 = vunpack.c.h.b16 %v4184
    %v4388 = vunpack.c.l.b16 %v4185
    %v4389 = vunpack.c.h.b16 %v4185
    %v4390 = vunpack.c.l.b16 %v4186
    %v4391 = vunpack.c.h.b16 %v4186
    %v4392 = vunpack.c.l.b16 %v4187
    %v4393 = vunpack.c.h.b16 %v4187
    %v4394 = vunpack.c.l.b16 %v4188
    %v4395 = vunpack.c.h.b16 %v4188
    %v4396 = vunpack.c.l.b16 %v4189
    %v4397 = vunpack.c.h.b16 %v4189
    %v4398 = vpack.c.b16 %v4278, %v4270
    %v4399 = vpack.c.b16 %v4279, %v4271
    %v4400 = vpack.c.b16 %v4280, %v4272
    %v4401 = vpack.c.b16 %v4281, %v4273
    %v4402 = vpack.c.b16 %v4282, %v4274
    %v4403 = vpack.c.b16 %v4283, %v4275
    %v4404 = vpack.c.b16 %v4284, %v4276
    %v4405 = vpack.c.b16 %v4285, %v4277
    %v4406 = vpack.c.b16 %v4294, %v4286
    %v4407 = vpack.c.b16 %v4295, %v4287
    %v4408 = vpack.c.b16 %v4296, %v4288
    %v4409 = vpack.c.b16 %v4297, %v4289
    %v4410 = vpack.c.b16 %v4298, %v4290
    %v4411 = vpack.c.b16 %v4299, %v4291
    %v4412 = vpack.c.b16 %v4300, %v4292
    %v4413 = vpack.c.b16 %v4301, %v4293
    %v4414 = vpack.c.b16 %v4310, %v4302
    %v4415 = vpack.c.b16 %v4311, %v4303
    %v4416 = vpack.c.b16 %v4312, %v4304
    %v4417 = vpack.c.b16 %v4313, %v4305
    %v4418 = vpack.c.b16 %v4314, %v4306
    %v4419 = vpack.c.b16 %v4315, %v4307
    %v4420 = vpack.c.b16 %v4316, %v4308
    %v4421 = vpack.c.b16 %v4317, %v4309
    %v4422 = vpack.c.b16 %v4326, %v4318
    %v4423 = vpack.c.b16 %v4327, %v4319
    %v4424 = vpack.c.b16 %v4328, %v4320
    %v4425 = vpack.c.b16 %v4329, %v4321
    %v4426 = vpack.c.b16 %v4330, %v4322
    %v4427 = vpack.c.b16 %v4331, %v4323
    %v4428 = vpack.c.b16 %v4332, %v4324
    %v4429 = vpack.c.b16 %v4333, %v4325
    %v4430 = vpack.c.b16 %v4342, %v4334
    %v4431 = vpack.c.b16 %v4343, %v4335
    %v4432 = vpack.c.b16 %v4344, %v4336
    %v4433 = vpack.c.b16 %v4345, %v4337
    %v4434 = vpack.c.b16 %v4346, %v4338
    %v4435 = vpack.c.b16 %v4347, %v4339
    %v4436 = vpack.c.b16 %v4348, %v4340
    %v4437 = vpack.c.b16 %v4349, %v4341
    %v4438 = vpack.c.b16 %v4358, %v4350
    %v4439 = vpack.c.b16 %v4359, %v4351
    %v4440 = vpack.c.b16 %v4360, %v4352
    %v4441 = vpack.c.b16 %v4361, %v4353
    %v4442 = vpack.c.b16 %v4362, %v4354
    %v4443 = vpack.c.b16 %v4363, %v4355
    %v4444 = vpack.c.b16 %v4364, %v4356
    %v4445 = vpack.c.b16 %v4365, %v4357
    %v4446 = vpack.c.b16 %v4374, %v4366
    %v4447 = vpack.c.b16 %v4375, %v4367
    %v4448 = vpack.c.b16 %v4376, %v4368
    %v4449 = vpack.c.b16 %v4377, %v4369
    %v4450 = vpack.c.b16 %v4378, %v4370
    %v4451 = vpack.c.b16 %v4379, %v4371
    %v4452 = vpack.c.b16 %v4380, %v4372
    %v4453 = vpack.c.b16 %v4381, %v4373
    %v4454 = vpack.c.b16 %v4390, %v4382
    %v4455 = vpack.c.b16 %v4391, %v4383
    %v4456 = vpack.c.b16 %v4392, %v4384
    %v4457 = vpack.c.b16 %v4393, %v4385
    %v4458 = vpack.c.b16 %v4394, %v4386
    %v4459 = vpack.c.b16 %v4395, %v4387
    %v4460 = vpack.c.b16 %v4396, %v4388
    %v4461 = vpack.c.b16 %v4397, %v4389
    %4526 = vmatprep.subr.bf16.mxu0 %v4399
    %4527 = vmatpush1.bf16.msra.mxu0 %v4398
    %4528 = vmatprep.subr.bf16.mxu0 %v4407
    %4529 = vmatpush1.bf16.msra.mxu0 %v4406
    %4530 = vmatprep.subr.bf16.mxu0 %v4415
    %4531 = vmatpush1.bf16.msra.mxu0 %v4414
    %4532 = vmatprep.subr.bf16.mxu0 %v4423
    %4533 = vmatpush1.bf16.msra.mxu0 %v4422
    %4534 = vmatprep.subr.bf16.mxu0 %v4431
    %4535 = vmatpush1.bf16.msra.mxu0 %v4430
    %4536 = vmatprep.subr.bf16.mxu0 %v4439
    %4537 = vmatpush1.bf16.msra.mxu0 %v4438
    %4538 = vmatprep.subr.bf16.mxu0 %v4447
    %4539 = vmatpush1.bf16.msra.mxu0 %v4446
    %4540 = vmatprep.subr.bf16.mxu0 %v4455
    %4541 = vmatpush1.bf16.msra.mxu0 %v4454
    %4542 = vmatprep.subr.bf16.mxu0 0
    %4543 = vmatpush1.bf16.msra.mxu0 0
    %4544 = vmatprep.subr.bf16.mxu0 0
    %4545 = vmatpush1.bf16.msra.mxu0 0
    %4546 = vmatprep.subr.bf16.mxu0 0
    %4547 = vmatpush1.bf16.msra.mxu0 0
    %4548 = vmatprep.subr.bf16.mxu0 0
    %4549 = vmatpush1.bf16.msra.mxu0 0
    %4550 = vmatprep.subr.bf16.mxu0 0
    %4551 = vmatpush1.bf16.msra.mxu0 0
    %4552 = vmatprep.subr.bf16.mxu0 0
    %4553 = vmatpush1.bf16.msra.mxu0 0
    %4554 = vmatprep.subr.bf16.mxu0 0
    %4555 = vmatpush1.bf16.msra.mxu0 0
    %4556 = vmatprep.subr.bf16.mxu0 0
    %4557 = vmatpush1.bf16.msra.mxu0 0
    %4558 = vmatprep.mubr.bf16.mxu0 0
    %4559 = vmatmul.mubr.bf16.gmra.mrb[0].mxu0 %v4204
    %v4560 = vpop.f32.mrb[0].mxu0
    %v4561 = vadd.f32 0.0, %v4560
    %v4562 = vpop.f32.mrb[0].mxu0
    %v4563 = vadd.f32 0.0, %v4562
    %v4564 = vpop.f32.mrb[0].mxu0
    %v4565 = vpop.f32.mrb[0].mxu0
    %4566 = vdwg.mxu0
    %4567 = vmatprep.subr.bf16.mxu0 %v4401
    %4568 = vmatpush1.bf16.msra.mxu0 %v4400
    %4569 = vmatprep.subr.bf16.mxu0 %v4409
    %4570 = vmatpush1.bf16.msra.mxu0 %v4408
    %4571 = vmatprep.subr.bf16.mxu0 %v4417
    %4572 = vmatpush1.bf16.msra.mxu0 %v4416
    %4573 = vmatprep.subr.bf16.mxu0 %v4425
    %4574 = vmatpush1.bf16.msra.mxu0 %v4424
    %4575 = vmatprep.subr.bf16.mxu0 %v4433
    %4576 = vmatpush1.bf16.msra.mxu0 %v4432
    %4577 = vmatprep.subr.bf16.mxu0 %v4441
    %4578 = vmatpush1.bf16.msra.mxu0 %v4440
    %4579 = vmatprep.subr.bf16.mxu0 %v4449
    %4580 = vmatpush1.bf16.msra.mxu0 %v4448
    %4581 = vmatprep.subr.bf16.mxu0 %v4457
    %4582 = vmatpush1.bf16.msra.mxu0 %v4456
    %4583 = vmatprep.subr.bf16.mxu0 0
    %4584 = vmatpush1.bf16.msra.mxu0 0
    %4585 = vmatprep.subr.bf16.mxu0 0
    %4586 = vmatpush1.bf16.msra.mxu0 0
    %4587 = vmatprep.subr.bf16.mxu0 0
    %4588 = vmatpush1.bf16.msra.mxu0 0
    %4589 = vmatprep.subr.bf16.mxu0 0
    %4590 = vmatpush1.bf16.msra.mxu0 0
    %4591 = vmatprep.subr.bf16.mxu0 0
    %4592 = vmatpush1.bf16.msra.mxu0 0
    %4593 = vmatprep.subr.bf16.mxu0 0
    %4594 = vmatpush1.bf16.msra.mxu0 0
    %4595 = vmatprep.subr.bf16.mxu0 0
    %4596 = vmatpush1.bf16.msra.mxu0 0
    %4597 = vmatprep.subr.bf16.mxu0 0
    %4598 = vmatpush1.bf16.msra.mxu0 0
    %4599 = vmatprep.mubr.bf16.mxu0 0
    %4600 = vmatmul.mubr.bf16.gmra.mrb[0].mxu0 %v4204
    %v4601 = vpop.f32.mrb[0].mxu0
    %v4602 = vadd.f32 0.0, %v4601
    %v4603 = vpop.f32.mrb[0].mxu0
    %v4604 = vadd.f32 0.0, %v4603
    %v4605 = vpop.f32.mrb[0].mxu0
    %v4606 = vpop.f32.mrb[0].mxu0
    %4607 = vdwg.mxu0
    %4608 = vmatprep.subr.bf16.mxu0 %v4403
    %4609 = vmatpush1.bf16.msra.mxu0 %v4402
    %4610 = vmatprep.subr.bf16.mxu0 %v4411
    %4611 = vmatpush1.bf16.msra.mxu0 %v4410
    %4612 = vmatprep.subr.bf16.mxu0 %v4419
    %4613 = vmatpush1.bf16.msra.mxu0 %v4418
    %4614 = vmatprep.subr.bf16.mxu0 %v4427
    %4615 = vmatpush1.bf16.msra.mxu0 %v4426
    %4616 = vmatprep.subr.bf16.mxu0 %v4435
    %4617 = vmatpush1.bf16.msra.mxu0 %v4434
    %4618 = vmatprep.subr.bf16.mxu0 %v4443
    %4619 = vmatpush1.bf16.msra.mxu0 %v4442
    %4620 = vmatprep.subr.bf16.mxu0 %v4451
    %4621 = vmatpush1.bf16.msra.mxu0 %v4450
    %4622 = vmatprep.subr.bf16.mxu0 %v4459
    %4623 = vmatpush1.bf16.msra.mxu0 %v4458
    %4624 = vmatprep.subr.bf16.mxu0 0
    %4625 = vmatpush1.bf16.msra.mxu0 0
    %4626 = vmatprep.subr.bf16.mxu0 0
    %4627 = vmatpush1.bf16.msra.mxu0 0
    %4628 = vmatprep.subr.bf16.mxu0 0
    %4629 = vmatpush1.bf16.msra.mxu0 0
    %4630 = vmatprep.subr.bf16.mxu0 0
    %4631 = vmatpush1.bf16.msra.mxu0 0
    %4632 = vmatprep.subr.bf16.mxu0 0
    %4633 = vmatpush1.bf16.msra.mxu0 0
    %4634 = vmatprep.subr.bf16.mxu0 0
    %4635 = vmatpush1.bf16.msra.mxu0 0
    %4636 = vmatprep.subr.bf16.mxu0 0
    %4637 = vmatpush1.bf16.msra.mxu0 0
    %4638 = vmatprep.subr.bf16.mxu0 0
    %4639 = vmatpush1.bf16.msra.mxu0 0
    %4640 = vmatprep.mubr.bf16.mxu0 0
    %4641 = vmatmul.mubr.bf16.gmra.mrb[0].mxu0 %v4204
    %v4642 = vpop.f32.mrb[0].mxu0
    %v4643 = vadd.f32 0.0, %v4642
    %v4644 = vpop.f32.mrb[0].mxu0
    %v4645 = vadd.f32 0.0, %v4644
    %v4646 = vpop.f32.mrb[0].mxu0
    %v4647 = vpop.f32.mrb[0].mxu0
    %4648 = vdwg.mxu0
    %4649 = vmatprep.subr.bf16.mxu0 %v4405
    %4650 = vmatpush1.bf16.msra.mxu0 %v4404
    %4651 = vmatprep.subr.bf16.mxu0 %v4413
    %4652 = vmatpush1.bf16.msra.mxu0 %v4412
    %4653 = vmatprep.subr.bf16.mxu0 %v4421
    %4654 = vmatpush1.bf16.msra.mxu0 %v4420
    %4655 = vmatprep.subr.bf16.mxu0 %v4429
    %4656 = vmatpush1.bf16.msra.mxu0 %v4428
    %4657 = vmatprep.subr.bf16.mxu0 %v4437
    %4658 = vmatpush1.bf16.msra.mxu0 %v4436
    %4659 = vmatprep.subr.bf16.mxu0 %v4445
    %4660 = vmatpush1.bf16.msra.mxu0 %v4444
    %4661 = vmatprep.subr.bf16.mxu0 %v4453
    %4662 = vmatpush1.bf16.msra.mxu0 %v4452
    %4663 = vmatprep.subr.bf16.mxu0 %v4461
    %4664 = vmatpush1.bf16.msra.mxu0 %v4460
    %4665 = vmatprep.subr.bf16.mxu0 0
    %4666 = vmatpush1.bf16.msra.mxu0 0
    %4667 = vmatprep.subr.bf16.mxu0 0
    %4668 = vmatpush1.bf16.msra.mxu0 0
    %4669 = vmatprep.subr.bf16.mxu0 0
    %4670 = vmatpush1.bf16.msra.mxu0 0
    %4671 = vmatprep.subr.bf16.mxu0 0
    %4672 = vmatpush1.bf16.msra.mxu0 0
    %4673 = vmatprep.subr.bf16.mxu0 0
    %4674 = vmatpush1.bf16.msra.mxu0 0
    %4675 = vmatprep.subr.bf16.mxu0 0
    %4676 = vmatpush1.bf16.msra.mxu0 0
    %4677 = vmatprep.subr.bf16.mxu0 0
    %4678 = vmatpush1.bf16.msra.mxu0 0
    %4679 = vmatprep.subr.bf16.mxu0 0
    %4680 = vmatpush1.bf16.msra.mxu0 0
    %4681 = vmatprep.mubr.bf16.mxu0 0
    %4682 = vmatmul.mubr.bf16.gmra.mrb[0].mxu0 %v4204
    %v4683 = vpop.f32.mrb[0].mxu0
    %v4684 = vadd.f32 0.0, %v4683
    %v4685 = vpop.f32.mrb[0].mxu0
    %v4686 = vadd.f32 0.0, %v4685
    %v4687 = vpop.f32.mrb[0].mxu0
    %v4688 = vpop.f32.mrb[0].mxu0
    %4689 = vdwg.mxu0
    %v4690 = vadd.f32 %v4117, %v4561
    %v4691 = vadd.f32 %v4118, %v4563
    %v4692 = vadd.f32 %v4119, %v4602
    %v4693 = vadd.f32 %v4120, %v4604
    %v4694 = vadd.f32 %v4121, %v4643
    %v4695 = vadd.f32 %v4122, %v4645
    %v4696 = vadd.f32 %v4123, %v4684
    %v4697 = vadd.f32 %v4124, %v4686
    %s4698 = scalar_lea.vmem [#allocation9], 3072
    %v4699 = vld [vmem:[%s4698] sm:$0xff]
    %v4700 = vld [vmem:[%s4698 + $0x8] sm:$0xff]
    %v4701 = vld [vmem:[%s4698 + $0x10] sm:$0xff]
    %v4702 = vld [vmem:[%s4698 + $0x18] sm:$0xff]
    %v4703 = vld [vmem:[%s4698 + $0x20] sm:$0xff]
    %v4704 = vld [vmem:[%s4698 + $0x28] sm:$0xff]
    %v4705 = vld [vmem:[%s4698 + $0x30] sm:$0xff]
    %v4706 = vld [vmem:[%s4698 + $0x38] sm:$0xff]
    %v4707 = vld [vmem:[%s4698 + $0x40] sm:$0xff]
    %v4708 = vld [vmem:[%s4698 + $0x48] sm:$0xff]
    %v4709 = vld [vmem:[%s4698 + $0x50] sm:$0xff]
    %v4710 = vld [vmem:[%s4698 + $0x58] sm:$0xff]
    %v4711 = vld [vmem:[%s4698 + $0x60] sm:$0xff]
    %v4712 = vld [vmem:[%s4698 + $0x68] sm:$0xff]
    %v4713 = vld [vmem:[%s4698 + $0x70] sm:$0xff]
    %v4714 = vld [vmem:[%s4698 + $0x78] sm:$0xff]
    %v4715 = vld [vmem:[%s4698 + $0x80] sm:$0xff]
    %v4716 = vld [vmem:[%s4698 + $0x88] sm:$0xff]
    %v4717 = vld [vmem:[%s4698 + $0x90] sm:$0xff]
    %v4718 = vld [vmem:[%s4698 + $0x98] sm:$0xff]
    %v4719 = vld [vmem:[%s4698 + $0xa0] sm:$0xff]
    %v4720 = vld [vmem:[%s4698 + $0xa8] sm:$0xff]
    %v4721 = vld [vmem:[%s4698 + $0xb0] sm:$0xff]
    %v4722 = vld [vmem:[%s4698 + $0xb8] sm:$0xff]
    %v4723 = vld [vmem:[%s4698 + $0xc0] sm:$0xff]
    %v4724 = vld [vmem:[%s4698 + $0xc8] sm:$0xff]
    %v4725 = vld [vmem:[%s4698 + $0xd0] sm:$0xff]
    %v4726 = vld [vmem:[%s4698 + $0xd8] sm:$0xff]
    %v4727 = vld [vmem:[%s4698 + $0xe0] sm:$0xff]
    %v4728 = vld [vmem:[%s4698 + $0xe8] sm:$0xff]
    %v4729 = vld [vmem:[%s4698 + $0xf0] sm:$0xff]
    %v4730 = vld [vmem:[%s4698 + $0xf8] sm:$0xff]
    %v4731 = vld [vmem:[%s4698 + $0x100] sm:$0xff]
    %v4732 = vld [vmem:[%s4698 + $0x108] sm:$0xff]
    %v4733 = vld [vmem:[%s4698 + $0x110] sm:$0xff]
    %v4734 = vld [vmem:[%s4698 + $0x118] sm:$0xff]
    %v4735 = vld [vmem:[%s4698 + $0x120] sm:$0xff]
    %v4736 = vld [vmem:[%s4698 + $0x128] sm:$0xff]
    %v4737 = vld [vmem:[%s4698 + $0x130] sm:$0xff]
    %v4738 = vld [vmem:[%s4698 + $0x138] sm:$0xff]
    %v4739 = vld [vmem:[%s4698 + $0x140] sm:$0xff]
    %v4740 = vld [vmem:[%s4698 + $0x148] sm:$0xff]
    %v4741 = vld [vmem:[%s4698 + $0x150] sm:$0xff]
    %v4742 = vld [vmem:[%s4698 + $0x158] sm:$0xff]
    %v4743 = vld [vmem:[%s4698 + $0x160] sm:$0xff]
    %v4744 = vld [vmem:[%s4698 + $0x168] sm:$0xff]
    %v4745 = vld [vmem:[%s4698 + $0x170] sm:$0xff]
    %v4746 = vld [vmem:[%s4698 + $0x178] sm:$0xff]
    %v4747 = vld [vmem:[%s4698 + $0x180] sm:$0xff]
    %v4748 = vld [vmem:[%s4698 + $0x188] sm:$0xff]
    %v4749 = vld [vmem:[%s4698 + $0x190] sm:$0xff]
    %v4750 = vld [vmem:[%s4698 + $0x198] sm:$0xff]
    %v4751 = vld [vmem:[%s4698 + $0x1a0] sm:$0xff]
    %v4752 = vld [vmem:[%s4698 + $0x1a8] sm:$0xff]
    %v4753 = vld [vmem:[%s4698 + $0x1b0] sm:$0xff]
    %v4754 = vld [vmem:[%s4698 + $0x1b8] sm:$0xff]
    %v4755 = vld [vmem:[%s4698 + $0x1c0] sm:$0xff]
    %v4756 = vld [vmem:[%s4698 + $0x1c8] sm:$0xff]
    %v4757 = vld [vmem:[%s4698 + $0x1d0] sm:$0xff]
    %v4758 = vld [vmem:[%s4698 + $0x1d8] sm:$0xff]
    %v4759 = vld [vmem:[%s4698 + $0x1e0] sm:$0xff]
    %v4760 = vld [vmem:[%s4698 + $0x1e8] sm:$0xff]
    %v4761 = vld [vmem:[%s4698 + $0x1f0] sm:$0xff]
    %v4762 = vld [vmem:[%s4698 + $0x1f8] sm:$0xff]
    %v4763 = vrot.slane %v1391, 6
    %v4764 = vrot.slane %v1392, 5
    %v4765 = vsel %vm1400, %v4764, %v4763
    %v4766 = vrot.slane %v1393, 4
    %v4767 = vsel %vm1403, %v4766, %v4765
    %v4768 = vrot.slane %v1394, 3
    %v4769 = vsel %vm1406, %v4768, %v4767
    %v4770 = vrot.slane %v1395, 2
    %v4771 = vsel %vm1409, %v4770, %v4769
    %v4772 = vrot.slane %v1396, 1
    %v4773 = vsel %vm1412, %v4772, %v4771
    %v4774 = vsel %vm1415, %v1397, %v4773
    %v4775 = vrot.slane %v1398, 7
    %v4776 = vsel %vm1418, %v4775, %v4774
    %v4777 = vpack.c.b16 %v4776, %v4776
    %v4843 = vunpack.c.l.b16 %v4699
    %v4844 = vunpack.c.h.b16 %v4699
    %v4845 = vunpack.c.l.b16 %v4700
    %v4846 = vunpack.c.h.b16 %v4700
    %v4847 = vunpack.c.l.b16 %v4701
    %v4848 = vunpack.c.h.b16 %v4701
    %v4849 = vunpack.c.l.b16 %v4702
    %v4850 = vunpack.c.h.b16 %v4702
    %v4851 = vunpack.c.l.b16 %v4703
    %v4852 = vunpack.c.h.b16 %v4703
    %v4853 = vunpack.c.l.b16 %v4704
    %v4854 = vunpack.c.h.b16 %v4704
    %v4855 = vunpack.c.l.b16 %v4705
    %v4856 = vunpack.c.h.b16 %v4705
    %v4857 = vunpack.c.l.b16 %v4706
    %v4858 = vunpack.c.h.b16 %v4706
    %v4859 = vunpack.c.l.b16 %v4707
    %v4860 = vunpack.c.h.b16 %v4707
    %v4861 = vunpack.c.l.b16 %v4708
    %v4862 = vunpack.c.h.b16 %v4708
    %v4863 = vunpack.c.l.b16 %v4709
    %v4864 = vunpack.c.h.b16 %v4709
    %v4865 = vunpack.c.l.b16 %v4710
    %v4866 = vunpack.c.h.b16 %v4710
    %v4867 = vunpack.c.l.b16 %v4711
    %v4868 = vunpack.c.h.b16 %v4711
    %v4869 = vunpack.c.l.b16 %v4712
    %v4870 = vunpack.c.h.b16 %v4712
    %v4871 = vunpack.c.l.b16 %v4713
    %v4872 = vunpack.c.h.b16 %v4713
    %v4873 = vunpack.c.l.b16 %v4714
    %v4874 = vunpack.c.h.b16 %v4714
    %v4875 = vunpack.c.l.b16 %v4715
    %v4876 = vunpack.c.h.b16 %v4715
    %v4877 = vunpack.c.l.b16 %v4716
    %v4878 = vunpack.c.h.b16 %v4716
    %v4879 = vunpack.c.l.b16 %v4717
    %v4880 = vunpack.c.h.b16 %v4717
    %v4881 = vunpack.c.l.b16 %v4718
    %v4882 = vunpack.c.h.b16 %v4718
    %v4883 = vunpack.c.l.b16 %v4719
    %v4884 = vunpack.c.h.b16 %v4719
    %v4885 = vunpack.c.l.b16 %v4720
    %v4886 = vunpack.c.h.b16 %v4720
    %v4887 = vunpack.c.l.b16 %v4721
    %v4888 = vunpack.c.h.b16 %v4721
    %v4889 = vunpack.c.l.b16 %v4722
    %v4890 = vunpack.c.h.b16 %v4722
    %v4891 = vunpack.c.l.b16 %v4723
    %v4892 = vunpack.c.h.b16 %v4723
    %v4893 = vunpack.c.l.b16 %v4724
    %v4894 = vunpack.c.h.b16 %v4724
    %v4895 = vunpack.c.l.b16 %v4725
    %v4896 = vunpack.c.h.b16 %v4725
    %v4897 = vunpack.c.l.b16 %v4726
    %v4898 = vunpack.c.h.b16 %v4726
    %v4899 = vunpack.c.l.b16 %v4727
    %v4900 = vunpack.c.h.b16 %v4727
    %v4901 = vunpack.c.l.b16 %v4728
    %v4902 = vunpack.c.h.b16 %v4728
    %v4903 = vunpack.c.l.b16 %v4729
    %v4904 = vunpack.c.h.b16 %v4729
    %v4905 = vunpack.c.l.b16 %v4730
    %v4906 = vunpack.c.h.b16 %v4730
    %v4907 = vunpack.c.l.b16 %v4731
    %v4908 = vunpack.c.h.b16 %v4731
    %v4909 = vunpack.c.l.b16 %v4732
    %v4910 = vunpack.c.h.b16 %v4732
    %v4911 = vunpack.c.l.b16 %v4733
    %v4912 = vunpack.c.h.b16 %v4733
    %v4913 = vunpack.c.l.b16 %v4734
    %v4914 = vunpack.c.h.b16 %v4734
    %v4915 = vunpack.c.l.b16 %v4735
    %v4916 = vunpack.c.h.b16 %v4735
    %v4917 = vunpack.c.l.b16 %v4736
    %v4918 = vunpack.c.h.b16 %v4736
    %v4919 = vunpack.c.l.b16 %v4737
    %v4920 = vunpack.c.h.b16 %v4737
    %v4921 = vunpack.c.l.b16 %v4738
    %v4922 = vunpack.c.h.b16 %v4738
    %v4923 = vunpack.c.l.b16 %v4739
    %v4924 = vunpack.c.h.b16 %v4739
    %v4925 = vunpack.c.l.b16 %v4740
    %v4926 = vunpack.c.h.b16 %v4740
    %v4927 = vunpack.c.l.b16 %v4741
    %v4928 = vunpack.c.h.b16 %v4741
    %v4929 = vunpack.c.l.b16 %v4742
    %v4930 = vunpack.c.h.b16 %v4742
    %v4931 = vunpack.c.l.b16 %v4743
    %v4932 = vunpack.c.h.b16 %v4743
    %v4933 = vunpack.c.l.b16 %v4744
    %v4934 = vunpack.c.h.b16 %v4744
    %v4935 = vunpack.c.l.b16 %v4745
    %v4936 = vunpack.c.h.b16 %v4745
    %v4937 = vunpack.c.l.b16 %v4746
    %v4938 = vunpack.c.h.b16 %v4746
    %v4939 = vunpack.c.l.b16 %v4747
    %v4940 = vunpack.c.h.b16 %v4747
    %v4941 = vunpack.c.l.b16 %v4748
    %v4942 = vunpack.c.h.b16 %v4748
    %v4943 = vunpack.c.l.b16 %v4749
    %v4944 = vunpack.c.h.b16 %v4749
    %v4945 = vunpack.c.l.b16 %v4750
    %v4946 = vunpack.c.h.b16 %v4750
    %v4947 = vunpack.c.l.b16 %v4751
    %v4948 = vunpack.c.h.b16 %v4751
    %v4949 = vunpack.c.l.b16 %v4752
    %v4950 = vunpack.c.h.b16 %v4752
    %v4951 = vunpack.c.l.b16 %v4753
    %v4952 = vunpack.c.h.b16 %v4753
    %v4953 = vunpack.c.l.b16 %v4754
    %v4954 = vunpack.c.h.b16 %v4754
    %v4955 = vunpack.c.l.b16 %v4755
    %v4956 = vunpack.c.h.b16 %v4755
    %v4957 = vunpack.c.l.b16 %v4756
    %v4958 = vunpack.c.h.b16 %v4756
    %v4959 = vunpack.c.l.b16 %v4757
    %v4960 = vunpack.c.h.b16 %v4757
    %v4961 = vunpack.c.l.b16 %v4758
    %v4962 = vunpack.c.h.b16 %v4758
    %v4963 = vunpack.c.l.b16 %v4759
    %v4964 = vunpack.c.h.b16 %v4759
    %v4965 = vunpack.c.l.b16 %v4760
    %v4966 = vunpack.c.h.b16 %v4760
    %v4967 = vunpack.c.l.b16 %v4761
    %v4968 = vunpack.c.h.b16 %v4761
    %v4969 = vunpack.c.l.b16 %v4762
    %v4970 = vunpack.c.h.b16 %v4762
    %v4971 = vpack.c.b16 %v4851, %v4843
    %v4972 = vpack.c.b16 %v4852, %v4844
    %v4973 = vpack.c.b16 %v4853, %v4845
    %v4974 = vpack.c.b16 %v4854, %v4846
    %v4975 = vpack.c.b16 %v4855, %v4847
    %v4976 = vpack.c.b16 %v4856, %v4848
    %v4977 = vpack.c.b16 %v4857, %v4849
    %v4978 = vpack.c.b16 %v4858, %v4850
    %v4979 = vpack.c.b16 %v4867, %v4859
    %v4980 = vpack.c.b16 %v4868, %v4860
    %v4981 = vpack.c.b16 %v4869, %v4861
    %v4982 = vpack.c.b16 %v4870, %v4862
    %v4983 = vpack.c.b16 %v4871, %v4863
    %v4984 = vpack.c.b16 %v4872, %v4864
    %v4985 = vpack.c.b16 %v4873, %v4865
    %v4986 = vpack.c.b16 %v4874, %v4866
    %v4987 = vpack.c.b16 %v4883, %v4875
    %v4988 = vpack.c.b16 %v4884, %v4876
    %v4989 = vpack.c.b16 %v4885, %v4877
    %v4990 = vpack.c.b16 %v4886, %v4878
    %v4991 = vpack.c.b16 %v4887, %v4879
    %v4992 = vpack.c.b16 %v4888, %v4880
    %v4993 = vpack.c.b16 %v4889, %v4881
    %v4994 = vpack.c.b16 %v4890, %v4882
    %v4995 = vpack.c.b16 %v4899, %v4891
    %v4996 = vpack.c.b16 %v4900, %v4892
    %v4997 = vpack.c.b16 %v4901, %v4893
    %v4998 = vpack.c.b16 %v4902, %v4894
    %v4999 = vpack.c.b16 %v4903, %v4895
    %v5000 = vpack.c.b16 %v4904, %v4896
    %v5001 = vpack.c.b16 %v4905, %v4897
    %v5002 = vpack.c.b16 %v4906, %v4898
    %v5003 = vpack.c.b16 %v4915, %v4907
    %v5004 = vpack.c.b16 %v4916, %v4908
    %v5005 = vpack.c.b16 %v4917, %v4909
    %v5006 = vpack.c.b16 %v4918, %v4910
    %v5007 = vpack.c.b16 %v4919, %v4911
    %v5008 = vpack.c.b16 %v4920, %v4912
    %v5009 = vpack.c.b16 %v4921, %v4913
    %v5010 = vpack.c.b16 %v4922, %v4914
    %v5011 = vpack.c.b16 %v4931, %v4923
    %v5012 = vpack.c.b16 %v4932, %v4924
    %v5013 = vpack.c.b16 %v4933, %v4925
    %v5014 = vpack.c.b16 %v4934, %v4926
    %v5015 = vpack.c.b16 %v4935, %v4927
    %v5016 = vpack.c.b16 %v4936, %v4928
    %v5017 = vpack.c.b16 %v4937, %v4929
    %v5018 = vpack.c.b16 %v4938, %v4930
    %v5019 = vpack.c.b16 %v4947, %v4939
    %v5020 = vpack.c.b16 %v4948, %v4940
    %v5021 = vpack.c.b16 %v4949, %v4941
    %v5022 = vpack.c.b16 %v4950, %v4942
    %v5023 = vpack.c.b16 %v4951, %v4943
    %v5024 = vpack.c.b16 %v4952, %v4944
    %v5025 = vpack.c.b16 %v4953, %v4945
    %v5026 = vpack.c.b16 %v4954, %v4946
    %v5027 = vpack.c.b16 %v4963, %v4955
    %v5028 = vpack.c.b16 %v4964, %v4956
    %v5029 = vpack.c.b16 %v4965, %v4957
    %v5030 = vpack.c.b16 %v4966, %v4958
    %v5031 = vpack.c.b16 %v4967, %v4959
    %v5032 = vpack.c.b16 %v4968, %v4960
    %v5033 = vpack.c.b16 %v4969, %v4961
    %v5034 = vpack.c.b16 %v4970, %v4962
    %5099 = vmatprep.subr.bf16.mxu0 %v4972
    %5100 = vmatpush1.bf16.msra.mxu0 %v4971
    %5101 = vmatprep.subr.bf16.mxu0 %v4980
    %5102 = vmatpush1.bf16.msra.mxu0 %v4979
    %5103 = vmatprep.subr.bf16.mxu0 %v4988
    %5104 = vmatpush1.bf16.msra.mxu0 %v4987
    %5105 = vmatprep.subr.bf16.mxu0 %v4996
    %5106 = vmatpush1.bf16.msra.mxu0 %v4995
    %5107 = vmatprep.subr.bf16.mxu0 %v5004
    %5108 = vmatpush1.bf16.msra.mxu0 %v5003
    %5109 = vmatprep.subr.bf16.mxu0 %v5012
    %5110 = vmatpush1.bf16.msra.mxu0 %v5011
    %5111 = vmatprep.subr.bf16.mxu0 %v5020
    %5112 = vmatpush1.bf16.msra.mxu0 %v5019
    %5113 = vmatprep.subr.bf16.mxu0 %v5028
    %5114 = vmatpush1.bf16.msra.mxu0 %v5027
    %5115 = vmatprep.subr.bf16.mxu0 0
    %5116 = vmatpush1.bf16.msra.mxu0 0
    %5117 = vmatprep.subr.bf16.mxu0 0
    %5118 = vmatpush1.bf16.msra.mxu0 0
    %5119 = vmatprep.subr.bf16.mxu0 0
    %5120 = vmatpush1.bf16.msra.mxu0 0
    %5121 = vmatprep.subr.bf16.mxu0 0
    %5122 = vmatpush1.bf16.msra.mxu0 0
    %5123 = vmatprep.subr.bf16.mxu0 0
    %5124 = vmatpush1.bf16.msra.mxu0 0
    %5125 = vmatprep.subr.bf16.mxu0 0
    %5126 = vmatpush1.bf16.msra.mxu0 0
    %5127 = vmatprep.subr.bf16.mxu0 0
    %5128 = vmatpush1.bf16.msra.mxu0 0
    %5129 = vmatprep.subr.bf16.mxu0 0
    %5130 = vmatpush1.bf16.msra.mxu0 0
    %5131 = vmatprep.mubr.bf16.mxu0 0
    %5132 = vmatmul.mubr.bf16.gmra.mrb[0].mxu0 %v4777
    %v5133 = vpop.f32.mrb[0].mxu0
    %v5134 = vadd.f32 0.0, %v5133
    %v5135 = vpop.f32.mrb[0].mxu0
    %v5136 = vadd.f32 0.0, %v5135
    %v5137 = vpop.f32.mrb[0].mxu0
    %v5138 = vpop.f32.mrb[0].mxu0
    %5139 = vdwg.mxu0
    %5140 = vmatprep.subr.bf16.mxu0 %v4974
    %5141 = vmatpush1.bf16.msra.mxu0 %v4973
    %5142 = vmatprep.subr.bf16.mxu0 %v4982
    %5143 = vmatpush1.bf16.msra.mxu0 %v4981
    %5144 = vmatprep.subr.bf16.mxu0 %v4990
    %5145 = vmatpush1.bf16.msra.mxu0 %v4989
    %5146 = vmatprep.subr.bf16.mxu0 %v4998
    %5147 = vmatpush1.bf16.msra.mxu0 %v4997
    %5148 = vmatprep.subr.bf16.mxu0 %v5006
    %5149 = vmatpush1.bf16.msra.mxu0 %v5005
    %5150 = vmatprep.subr.bf16.mxu0 %v5014
    %5151 = vmatpush1.bf16.msra.mxu0 %v5013
    %5152 = vmatprep.subr.bf16.mxu0 %v5022
    %5153 = vmatpush1.bf16.msra.mxu0 %v5021
    %5154 = vmatprep.subr.bf16.mxu0 %v5030
    %5155 = vmatpush1.bf16.msra.mxu0 %v5029
    %5156 = vmatprep.subr.bf16.mxu0 0
    %5157 = vmatpush1.bf16.msra.mxu0 0
    %5158 = vmatprep.subr.bf16.mxu0 0
    %5159 = vmatpush1.bf16.msra.mxu0 0
    %5160 = vmatprep.subr.bf16.mxu0 0
    %5161 = vmatpush1.bf16.msra.mxu0 0
    %5162 = vmatprep.subr.bf16.mxu0 0
    %5163 = vmatpush1.bf16.msra.mxu0 0
    %5164 = vmatprep.subr.bf16.mxu0 0
    %5165 = vmatpush1.bf16.msra.mxu0 0
    %5166 = vmatprep.subr.bf16.mxu0 0
    %5167 = vmatpush1.bf16.msra.mxu0 0
    %5168 = vmatprep.subr.bf16.mxu0 0
    %5169 = vmatpush1.bf16.msra.mxu0 0
    %5170 = vmatprep.subr.bf16.mxu0 0
    %5171 = vmatpush1.bf16.msra.mxu0 0
    %5172 = vmatprep.mubr.bf16.mxu0 0
    %5173 = vmatmul.mubr.bf16.gmra.mrb[0].mxu0 %v4777
    %v5174 = vpop.f32.mrb[0].mxu0
    %v5175 = vadd.f32 0.0, %v5174
    %v5176 = vpop.f32.mrb[0].mxu0
    %v5177 = vadd.f32 0.0, %v5176
    %v5178 = vpop.f32.mrb[0].mxu0
    %v5179 = vpop.f32.mrb[0].mxu0
    %5180 = vdwg.mxu0
    %5181 = vmatprep.subr.bf16.mxu0 %v4976
    %5182 = vmatpush1.bf16.msra.mxu0 %v4975
    %5183 = vmatprep.subr.bf16.mxu0 %v4984
    %5184 = vmatpush1.bf16.msra.mxu0 %v4983
    %5185 = vmatprep.subr.bf16.mxu0 %v4992
    %5186 = vmatpush1.bf16.msra.mxu0 %v4991
    %5187 = vmatprep.subr.bf16.mxu0 %v5000
    %5188 = vmatpush1.bf16.msra.mxu0 %v4999
    %5189 = vmatprep.subr.bf16.mxu0 %v5008
    %5190 = vmatpush1.bf16.msra.mxu0 %v5007
    %5191 = vmatprep.subr.bf16.mxu0 %v5016
    %5192 = vmatpush1.bf16.msra.mxu0 %v5015
    %5193 = vmatprep.subr.bf16.mxu0 %v5024
    %5194 = vmatpush1.bf16.msra.mxu0 %v5023
    %5195 = vmatprep.subr.bf16.mxu0 %v5032
    %5196 = vmatpush1.bf16.msra.mxu0 %v5031
    %5197 = vmatprep.subr.bf16.mxu0 0
    %5198 = vmatpush1.bf16.msra.mxu0 0
    %5199 = vmatprep.subr.bf16.mxu0 0
    %5200 = vmatpush1.bf16.msra.mxu0 0
    %5201 = vmatprep.subr.bf16.mxu0 0
    %5202 = vmatpush1.bf16.msra.mxu0 0
    %5203 = vmatprep.subr.bf16.mxu0 0
    %5204 = vmatpush1.bf16.msra.mxu0 0
    %5205 = vmatprep.subr.bf16.mxu0 0
    %5206 = vmatpush1.bf16.msra.mxu0 0
    %5207 = vmatprep.subr.bf16.mxu0 0
    %5208 = vmatpush1.bf16.msra.mxu0 0
    %5209 = vmatprep.subr.bf16.mxu0 0
    %5210 = vmatpush1.bf16.msra.mxu0 0
    %5211 = vmatprep.subr.bf16.mxu0 0
    %5212 = vmatpush1.bf16.msra.mxu0 0
    %5213 = vmatprep.mubr.bf16.mxu0 0
    %5214 = vmatmul.mubr.bf16.gmra.mrb[0].mxu0 %v4777
    %v5215 = vpop.f32.mrb[0].mxu0
    %v5216 = vadd.f32 0.0, %v5215
    %v5217 = vpop.f32.mrb[0].mxu0
    %v5218 = vadd.f32 0.0, %v5217
    %v5219 = vpop.f32.mrb[0].mxu0
    %v5220 = vpop.f32.mrb[0].mxu0
    %5221 = vdwg.mxu0
    %5222 = vmatprep.subr.bf16.mxu0 %v4978
    %5223 = vmatpush1.bf16.msra.mxu0 %v4977
    %5224 = vmatprep.subr.bf16.mxu0 %v4986
    %5225 = vmatpush1.bf16.msra.mxu0 %v4985
    %5226 = vmatprep.subr.bf16.mxu0 %v4994
    %5227 = vmatpush1.bf16.msra.mxu0 %v4993
    %5228 = vmatprep.subr.bf16.mxu0 %v5002
    %5229 = vmatpush1.bf16.msra.mxu0 %v5001
    %5230 = vmatprep.subr.bf16.mxu0 %v5010
    %5231 = vmatpush1.bf16.msra.mxu0 %v5009
    %5232 = vmatprep.subr.bf16.mxu0 %v5018
    %5233 = vmatpush1.bf16.msra.mxu0 %v5017
    %5234 = vmatprep.subr.bf16.mxu0 %v5026
    %5235 = vmatpush1.bf16.msra.mxu0 %v5025
    %5236 = vmatprep.subr.bf16.mxu0 %v5034
    %5237 = vmatpush1.bf16.msra.mxu0 %v5033
    %5238 = vmatprep.subr.bf16.mxu0 0
    %5239 = vmatpush1.bf16.msra.mxu0 0
    %5240 = vmatprep.subr.bf16.mxu0 0
    %5241 = vmatpush1.bf16.msra.mxu0 0
    %5242 = vmatprep.subr.bf16.mxu0 0
    %5243 = vmatpush1.bf16.msra.mxu0 0
    %5244 = vmatprep.subr.bf16.mxu0 0
    %5245 = vmatpush1.bf16.msra.mxu0 0
    %5246 = vmatprep.subr.bf16.mxu0 0
    %5247 = vmatpush1.bf16.msra.mxu0 0
    %5248 = vmatprep.subr.bf16.mxu0 0
    %5249 = vmatpush1.bf16.msra.mxu0 0
    %5250 = vmatprep.subr.bf16.mxu0 0
    %5251 = vmatpush1.bf16.msra.mxu0 0
    %5252 = vmatprep.subr.bf16.mxu0 0
    %5253 = vmatpush1.bf16.msra.mxu0 0
    %5254 = vmatprep.mubr.bf16.mxu0 0
    %5255 = vmatmul.mubr.bf16.gmra.mrb[0].mxu0 %v4777
    %v5256 = vpop.f32.mrb[0].mxu0
    %v5257 = vadd.f32 0.0, %v5256
    %v5258 = vpop.f32.mrb[0].mxu0
    %v5259 = vadd.f32 0.0, %v5258
    %v5260 = vpop.f32.mrb[0].mxu0
    %v5261 = vpop.f32.mrb[0].mxu0
    %5262 = vdwg.mxu0
    %v5263 = vadd.f32 %v4690, %v5134
    %v5264 = vadd.f32 %v4691, %v5136
    %v5265 = vadd.f32 %v4692, %v5175
    %v5266 = vadd.f32 %v4693, %v5177
    %v5267 = vadd.f32 %v4694, %v5216
    %v5268 = vadd.f32 %v4695, %v5218
    %v5269 = vadd.f32 %v4696, %v5257
    %v5270 = vadd.f32 %v4697, %v5259
    %s5271 = scalar_lea.vmem [#allocation9], 3584
    %v5272 = vld [vmem:[%s5271] sm:$0xff]
    %v5273 = vld [vmem:[%s5271 + $0x8] sm:$0xff]
    %v5274 = vld [vmem:[%s5271 + $0x10] sm:$0xff]
    %v5275 = vld [vmem:[%s5271 + $0x18] sm:$0xff]
    %v5276 = vld [vmem:[%s5271 + $0x20] sm:$0xff]
    %v5277 = vld [vmem:[%s5271 + $0x28] sm:$0xff]
    %v5278 = vld [vmem:[%s5271 + $0x30] sm:$0xff]
    %v5279 = vld [vmem:[%s5271 + $0x38] sm:$0xff]
    %v5280 = vld [vmem:[%s5271 + $0x40] sm:$0xff]
    %v5281 = vld [vmem:[%s5271 + $0x48] sm:$0xff]
    %v5282 = vld [vmem:[%s5271 + $0x50] sm:$0xff]
    %v5283 = vld [vmem:[%s5271 + $0x58] sm:$0xff]
    %v5284 = vld [vmem:[%s5271 + $0x60] sm:$0xff]
    %v5285 = vld [vmem:[%s5271 + $0x68] sm:$0xff]
    %v5286 = vld [vmem:[%s5271 + $0x70] sm:$0xff]
    %v5287 = vld [vmem:[%s5271 + $0x78] sm:$0xff]
    %v5288 = vld [vmem:[%s5271 + $0x80] sm:$0xff]
    %v5289 = vld [vmem:[%s5271 + $0x88] sm:$0xff]
    %v5290 = vld [vmem:[%s5271 + $0x90] sm:$0xff]
    %v5291 = vld [vmem:[%s5271 + $0x98] sm:$0xff]
    %v5292 = vld [vmem:[%s5271 + $0xa0] sm:$0xff]
    %v5293 = vld [vmem:[%s5271 + $0xa8] sm:$0xff]
    %v5294 = vld [vmem:[%s5271 + $0xb0] sm:$0xff]
    %v5295 = vld [vmem:[%s5271 + $0xb8] sm:$0xff]
    %v5296 = vld [vmem:[%s5271 + $0xc0] sm:$0xff]
    %v5297 = vld [vmem:[%s5271 + $0xc8] sm:$0xff]
    %v5298 = vld [vmem:[%s5271 + $0xd0] sm:$0xff]
    %v5299 = vld [vmem:[%s5271 + $0xd8] sm:$0xff]
    %v5300 = vld [vmem:[%s5271 + $0xe0] sm:$0xff]
    %v5301 = vld [vmem:[%s5271 + $0xe8] sm:$0xff]
    %v5302 = vld [vmem:[%s5271 + $0xf0] sm:$0xff]
    %v5303 = vld [vmem:[%s5271 + $0xf8] sm:$0xff]
    %v5304 = vld [vmem:[%s5271 + $0x100] sm:$0xff]
    %v5305 = vld [vmem:[%s5271 + $0x108] sm:$0xff]
    %v5306 = vld [vmem:[%s5271 + $0x110] sm:$0xff]
    %v5307 = vld [vmem:[%s5271 + $0x118] sm:$0xff]
    %v5308 = vld [vmem:[%s5271 + $0x120] sm:$0xff]
    %v5309 = vld [vmem:[%s5271 + $0x128] sm:$0xff]
    %v5310 = vld [vmem:[%s5271 + $0x130] sm:$0xff]
    %v5311 = vld [vmem:[%s5271 + $0x138] sm:$0xff]
    %v5312 = vld [vmem:[%s5271 + $0x140] sm:$0xff]
    %v5313 = vld [vmem:[%s5271 + $0x148] sm:$0xff]
    %v5314 = vld [vmem:[%s5271 + $0x150] sm:$0xff]
    %v5315 = vld [vmem:[%s5271 + $0x158] sm:$0xff]
    %v5316 = vld [vmem:[%s5271 + $0x160] sm:$0xff]
    %v5317 = vld [vmem:[%s5271 + $0x168] sm:$0xff]
    %v5318 = vld [vmem:[%s5271 + $0x170] sm:$0xff]
    %v5319 = vld [vmem:[%s5271 + $0x178] sm:$0xff]
    %v5320 = vld [vmem:[%s5271 + $0x180] sm:$0xff]
    %v5321 = vld [vmem:[%s5271 + $0x188] sm:$0xff]
    %v5322 = vld [vmem:[%s5271 + $0x190] sm:$0xff]
    %v5323 = vld [vmem:[%s5271 + $0x198] sm:$0xff]
    %v5324 = vld [vmem:[%s5271 + $0x1a0] sm:$0xff]
    %v5325 = vld [vmem:[%s5271 + $0x1a8] sm:$0xff]
    %v5326 = vld [vmem:[%s5271 + $0x1b0] sm:$0xff]
    %v5327 = vld [vmem:[%s5271 + $0x1b8] sm:$0xff]
    %v5328 = vld [vmem:[%s5271 + $0x1c0] sm:$0xff]
    %v5329 = vld [vmem:[%s5271 + $0x1c8] sm:$0xff]
    %v5330 = vld [vmem:[%s5271 + $0x1d0] sm:$0xff]
    %v5331 = vld [vmem:[%s5271 + $0x1d8] sm:$0xff]
    %v5332 = vld [vmem:[%s5271 + $0x1e0] sm:$0xff]
    %v5333 = vld [vmem:[%s5271 + $0x1e8] sm:$0xff]
    %v5334 = vld [vmem:[%s5271 + $0x1f0] sm:$0xff]
    %v5335 = vld [vmem:[%s5271 + $0x1f8] sm:$0xff]
    %v5336 = vrot.slane %v1391, 7
    %v5337 = vrot.slane %v1392, 6
    %v5338 = vsel %vm1400, %v5337, %v5336
    %v5339 = vrot.slane %v1393, 5
    %v5340 = vsel %vm1403, %v5339, %v5338
    %v5341 = vrot.slane %v1394, 4
    %v5342 = vsel %vm1406, %v5341, %v5340
    %v5343 = vrot.slane %v1395, 3
    %v5344 = vsel %vm1409, %v5343, %v5342
    %v5345 = vrot.slane %v1396, 2
    %v5346 = vsel %vm1412, %v5345, %v5344
    %v5347 = vrot.slane %v1397, 1
    %v5348 = vsel %vm1415, %v5347, %v5346
    %v5349 = vsel %vm1418, %v1398, %v5348
    %v5350 = vpack.c.b16 %v5349, %v5349
    %v5416 = vunpack.c.l.b16 %v5272
    %v5417 = vunpack.c.h.b16 %v5272
    %v5418 = vunpack.c.l.b16 %v5273
    %v5419 = vunpack.c.h.b16 %v5273
    %v5420 = vunpack.c.l.b16 %v5274
    %v5421 = vunpack.c.h.b16 %v5274
    %v5422 = vunpack.c.l.b16 %v5275
    %v5423 = vunpack.c.h.b16 %v5275
    %v5424 = vunpack.c.l.b16 %v5276
    %v5425 = vunpack.c.h.b16 %v5276
    %v5426 = vunpack.c.l.b16 %v5277
    %v5427 = vunpack.c.h.b16 %v5277
    %v5428 = vunpack.c.l.b16 %v5278
    %v5429 = vunpack.c.h.b16 %v5278
    %v5430 = vunpack.c.l.b16 %v5279
    %v5431 = vunpack.c.h.b16 %v5279
    %v5432 = vunpack.c.l.b16 %v5280
    %v5433 = vunpack.c.h.b16 %v5280
    %v5434 = vunpack.c.l.b16 %v5281
    %v5435 = vunpack.c.h.b16 %v5281
    %v5436 = vunpack.c.l.b16 %v5282
    %v5437 = vunpack.c.h.b16 %v5282
    %v5438 = vunpack.c.l.b16 %v5283
    %v5439 = vunpack.c.h.b16 %v5283
    %v5440 = vunpack.c.l.b16 %v5284
    %v5441 = vunpack.c.h.b16 %v5284
    %v5442 = vunpack.c.l.b16 %v5285
    %v5443 = vunpack.c.h.b16 %v5285
    %v5444 = vunpack.c.l.b16 %v5286
    %v5445 = vunpack.c.h.b16 %v5286
    %v5446 = vunpack.c.l.b16 %v5287
    %v5447 = vunpack.c.h.b16 %v5287
    %v5448 = vunpack.c.l.b16 %v5288
    %v5449 = vunpack.c.h.b16 %v5288
    %v5450 = vunpack.c.l.b16 %v5289
    %v5451 = vunpack.c.h.b16 %v5289
    %v5452 = vunpack.c.l.b16 %v5290
    %v5453 = vunpack.c.h.b16 %v5290
    %v5454 = vunpack.c.l.b16 %v5291
    %v5455 = vunpack.c.h.b16 %v5291
    %v5456 = vunpack.c.l.b16 %v5292
    %v5457 = vunpack.c.h.b16 %v5292
    %v5458 = vunpack.c.l.b16 %v5293
    %v5459 = vunpack.c.h.b16 %v5293
    %v5460 = vunpack.c.l.b16 %v5294
    %v5461 = vunpack.c.h.b16 %v5294
    %v5462 = vunpack.c.l.b16 %v5295
    %v5463 = vunpack.c.h.b16 %v5295
    %v5464 = vunpack.c.l.b16 %v5296
    %v5465 = vunpack.c.h.b16 %v5296
    %v5466 = vunpack.c.l.b16 %v5297
    %v5467 = vunpack.c.h.b16 %v5297
    %v5468 = vunpack.c.l.b16 %v5298
    %v5469 = vunpack.c.h.b16 %v5298
    %v5470 = vunpack.c.l.b16 %v5299
    %v5471 = vunpack.c.h.b16 %v5299
    %v5472 = vunpack.c.l.b16 %v5300
    %v5473 = vunpack.c.h.b16 %v5300
    %v5474 = vunpack.c.l.b16 %v5301
    %v5475 = vunpack.c.h.b16 %v5301
    %v5476 = vunpack.c.l.b16 %v5302
    %v5477 = vunpack.c.h.b16 %v5302
    %v5478 = vunpack.c.l.b16 %v5303
    %v5479 = vunpack.c.h.b16 %v5303
    %v5480 = vunpack.c.l.b16 %v5304
    %v5481 = vunpack.c.h.b16 %v5304
    %v5482 = vunpack.c.l.b16 %v5305
    %v5483 = vunpack.c.h.b16 %v5305
    %v5484 = vunpack.c.l.b16 %v5306
    %v5485 = vunpack.c.h.b16 %v5306
    %v5486 = vunpack.c.l.b16 %v5307
    %v5487 = vunpack.c.h.b16 %v5307
    %v5488 = vunpack.c.l.b16 %v5308
    %v5489 = vunpack.c.h.b16 %v5308
    %v5490 = vunpack.c.l.b16 %v5309
    %v5491 = vunpack.c.h.b16 %v5309
    %v5492 = vunpack.c.l.b16 %v5310
    %v5493 = vunpack.c.h.b16 %v5310
    %v5494 = vunpack.c.l.b16 %v5311
    %v5495 = vunpack.c.h.b16 %v5311
    %v5496 = vunpack.c.l.b16 %v5312
    %v5497 = vunpack.c.h.b16 %v5312
    %v5498 = vunpack.c.l.b16 %v5313
    %v5499 = vunpack.c.h.b16 %v5313
    %v5500 = vunpack.c.l.b16 %v5314
    %v5501 = vunpack.c.h.b16 %v5314
    %v5502 = vunpack.c.l.b16 %v5315
    %v5503 = vunpack.c.h.b16 %v5315
    %v5504 = vunpack.c.l.b16 %v5316
    %v5505 = vunpack.c.h.b16 %v5316
    %v5506 = vunpack.c.l.b16 %v5317
    %v5507 = vunpack.c.h.b16 %v5317
    %v5508 = vunpack.c.l.b16 %v5318
    %v5509 = vunpack.c.h.b16 %v5318
    %v5510 = vunpack.c.l.b16 %v5319
    %v5511 = vunpack.c.h.b16 %v5319
    %v5512 = vunpack.c.l.b16 %v5320
    %v5513 = vunpack.c.h.b16 %v5320
    %v5514 = vunpack.c.l.b16 %v5321
    %v5515 = vunpack.c.h.b16 %v5321
    %v5516 = vunpack.c.l.b16 %v5322
    %v5517 = vunpack.c.h.b16 %v5322
    %v5518 = vunpack.c.l.b16 %v5323
    %v5519 = vunpack.c.h.b16 %v5323
    %v5520 = vunpack.c.l.b16 %v5324
    %v5521 = vunpack.c.h.b16 %v5324
    %v5522 = vunpack.c.l.b16 %v5325
    %v5523 = vunpack.c.h.b16 %v5325
    %v5524 = vunpack.c.l.b16 %v5326
    %v5525 = vunpack.c.h.b16 %v5326
    %v5526 = vunpack.c.l.b16 %v5327
    %v5527 = vunpack.c.h.b16 %v5327
    %v5528 = vunpack.c.l.b16 %v5328
    %v5529 = vunpack.c.h.b16 %v5328
    %v5530 = vunpack.c.l.b16 %v5329
    %v5531 = vunpack.c.h.b16 %v5329
    %v5532 = vunpack.c.l.b16 %v5330
    %v5533 = vunpack.c.h.b16 %v5330
    %v5534 = vunpack.c.l.b16 %v5331
    %v5535 = vunpack.c.h.b16 %v5331
    %v5536 = vunpack.c.l.b16 %v5332
    %v5537 = vunpack.c.h.b16 %v5332
    %v5538 = vunpack.c.l.b16 %v5333
    %v5539 = vunpack.c.h.b16 %v5333
    %v5540 = vunpack.c.l.b16 %v5334
    %v5541 = vunpack.c.h.b16 %v5334
    %v5542 = vunpack.c.l.b16 %v5335
    %v5543 = vunpack.c.h.b16 %v5335
    %v5544 = vpack.c.b16 %v5424, %v5416
    %v5545 = vpack.c.b16 %v5425, %v5417
    %v5546 = vpack.c.b16 %v5426, %v5418
    %v5547 = vpack.c.b16 %v5427, %v5419
    %v5548 = vpack.c.b16 %v5428, %v5420
    %v5549 = vpack.c.b16 %v5429, %v5421
    %v5550 = vpack.c.b16 %v5430, %v5422
    %v5551 = vpack.c.b16 %v5431, %v5423
    %v5552 = vpack.c.b16 %v5440, %v5432
    %v5553 = vpack.c.b16 %v5441, %v5433
    %v5554 = vpack.c.b16 %v5442, %v5434
    %v5555 = vpack.c.b16 %v5443, %v5435
    %v5556 = vpack.c.b16 %v5444, %v5436
    %v5557 = vpack.c.b16 %v5445, %v5437
    %v5558 = vpack.c.b16 %v5446, %v5438
    %v5559 = vpack.c.b16 %v5447, %v5439
    %v5560 = vpack.c.b16 %v5456, %v5448
    %v5561 = vpack.c.b16 %v5457, %v5449
    %v5562 = vpack.c.b16 %v5458, %v5450
    %v5563 = vpack.c.b16 %v5459, %v5451
    %v5564 = vpack.c.b16 %v5460, %v5452
    %v5565 = vpack.c.b16 %v5461, %v5453
    %v5566 = vpack.c.b16 %v5462, %v5454
    %v5567 = vpack.c.b16 %v5463, %v5455
    %v5568 = vpack.c.b16 %v5472, %v5464
    %v5569 = vpack.c.b16 %v5473, %v5465
    %v5570 = vpack.c.b16 %v5474, %v5466
    %v5571 = vpack.c.b16 %v5475, %v5467
    %v5572 = vpack.c.b16 %v5476, %v5468
    %v5573 = vpack.c.b16 %v5477, %v5469
    %v5574 = vpack.c.b16 %v5478, %v5470
    %v5575 = vpack.c.b16 %v5479, %v5471
    %v5576 = vpack.c.b16 %v5488, %v5480
    %v5577 = vpack.c.b16 %v5489, %v5481
    %v5578 = vpack.c.b16 %v5490, %v5482
    %v5579 = vpack.c.b16 %v5491, %v5483
    %v5580 = vpack.c.b16 %v5492, %v5484
    %v5581 = vpack.c.b16 %v5493, %v5485
    %v5582 = vpack.c.b16 %v5494, %v5486
    %v5583 = vpack.c.b16 %v5495, %v5487
    %v5584 = vpack.c.b16 %v5504, %v5496
    %v5585 = vpack.c.b16 %v5505, %v5497
    %v5586 = vpack.c.b16 %v5506, %v5498
    %v5587 = vpack.c.b16 %v5507, %v5499
    %v5588 = vpack.c.b16 %v5508, %v5500
    %v5589 = vpack.c.b16 %v5509, %v5501
    %v5590 = vpack.c.b16 %v5510, %v5502
    %v5591 = vpack.c.b16 %v5511, %v5503
    %v5592 = vpack.c.b16 %v5520, %v5512
    %v5593 = vpack.c.b16 %v5521, %v5513
    %v5594 = vpack.c.b16 %v5522, %v5514
    %v5595 = vpack.c.b16 %v5523, %v5515
    %v5596 = vpack.c.b16 %v5524, %v5516
    %v5597 = vpack.c.b16 %v5525, %v5517
    %v5598 = vpack.c.b16 %v5526, %v5518
    %v5599 = vpack.c.b16 %v5527, %v5519
    %v5600 = vpack.c.b16 %v5536, %v5528
    %v5601 = vpack.c.b16 %v5537, %v5529
    %v5602 = vpack.c.b16 %v5538, %v5530
    %v5603 = vpack.c.b16 %v5539, %v5531
    %v5604 = vpack.c.b16 %v5540, %v5532
    %v5605 = vpack.c.b16 %v5541, %v5533
    %v5606 = vpack.c.b16 %v5542, %v5534
    %v5607 = vpack.c.b16 %v5543, %v5535
    %5672 = vmatprep.subr.bf16.mxu0 %v5545
    %5673 = vmatpush1.bf16.msra.mxu0 %v5544
    %5674 = vmatprep.subr.bf16.mxu0 %v5553
    %5675 = vmatpush1.bf16.msra.mxu0 %v5552
    %5676 = vmatprep.subr.bf16.mxu0 %v5561
    %5677 = vmatpush1.bf16.msra.mxu0 %v5560
    %5678 = vmatprep.subr.bf16.mxu0 %v5569
    %5679 = vmatpush1.bf16.msra.mxu0 %v5568
    %5680 = vmatprep.subr.bf16.mxu0 %v5577
    %5681 = vmatpush1.bf16.msra.mxu0 %v5576
    %5682 = vmatprep.subr.bf16.mxu0 %v5585
    %5683 = vmatpush1.bf16.msra.mxu0 %v5584
    %5684 = vmatprep.subr.bf16.mxu0 %v5593
    %5685 = vmatpush1.bf16.msra.mxu0 %v5592
    %5686 = vmatprep.subr.bf16.mxu0 %v5601
    %5687 = vmatpush1.bf16.msra.mxu0 %v5600
    %5688 = vmatprep.subr.bf16.mxu0 0
    %5689 = vmatpush1.bf16.msra.mxu0 0
    %5690 = vmatprep.subr.bf16.mxu0 0
    %5691 = vmatpush1.bf16.msra.mxu0 0
    %5692 = vmatprep.subr.bf16.mxu0 0
    %5693 = vmatpush1.bf16.msra.mxu0 0
    %5694 = vmatprep.subr.bf16.mxu0 0
    %5695 = vmatpush1.bf16.msra.mxu0 0
    %5696 = vmatprep.subr.bf16.mxu0 0
    %5697 = vmatpush1.bf16.msra.mxu0 0
    %5698 = vmatprep.subr.bf16.mxu0 0
    %5699 = vmatpush1.bf16.msra.mxu0 0
    %5700 = vmatprep.subr.bf16.mxu0 0
    %5701 = vmatpush1.bf16.msra.mxu0 0
    %5702 = vmatprep.subr.bf16.mxu0 0
    %5703 = vmatpush1.bf16.msra.mxu0 0
    %5704 = vmatprep.mubr.bf16.mxu0 0
    %5705 = vmatmul.mubr.bf16.gmra.mrb[0].mxu0 %v5350
    %v5706 = vpop.f32.mrb[0].mxu0
    %v5707 = vadd.f32 0.0, %v5706
    %v5708 = vpop.f32.mrb[0].mxu0
    %v5709 = vadd.f32 0.0, %v5708
    %v5710 = vpop.f32.mrb[0].mxu0
    %v5711 = vpop.f32.mrb[0].mxu0
    %5712 = vdwg.mxu0
    %5713 = vmatprep.subr.bf16.mxu0 %v5547
    %5714 = vmatpush1.bf16.msra.mxu0 %v5546
    %5715 = vmatprep.subr.bf16.mxu0 %v5555
    %5716 = vmatpush1.bf16.msra.mxu0 %v5554
    %5717 = vmatprep.subr.bf16.mxu0 %v5563
    %5718 = vmatpush1.bf16.msra.mxu0 %v5562
    %5719 = vmatprep.subr.bf16.mxu0 %v5571
    %5720 = vmatpush1.bf16.msra.mxu0 %v5570
    %5721 = vmatprep.subr.bf16.mxu0 %v5579
    %5722 = vmatpush1.bf16.msra.mxu0 %v5578
    %5723 = vmatprep.subr.bf16.mxu0 %v5587
    %5724 = vmatpush1.bf16.msra.mxu0 %v5586
    %5725 = vmatprep.subr.bf16.mxu0 %v5595
    %5726 = vmatpush1.bf16.msra.mxu0 %v5594
    %5727 = vmatprep.subr.bf16.mxu0 %v5603
    %5728 = vmatpush1.bf16.msra.mxu0 %v5602
    %5729 = vmatprep.subr.bf16.mxu0 0
    %5730 = vmatpush1.bf16.msra.mxu0 0
    %5731 = vmatprep.subr.bf16.mxu0 0
    %5732 = vmatpush1.bf16.msra.mxu0 0
    %5733 = vmatprep.subr.bf16.mxu0 0
    %5734 = vmatpush1.bf16.msra.mxu0 0
    %5735 = vmatprep.subr.bf16.mxu0 0
    %5736 = vmatpush1.bf16.msra.mxu0 0
    %5737 = vmatprep.subr.bf16.mxu0 0
    %5738 = vmatpush1.bf16.msra.mxu0 0
    %5739 = vmatprep.subr.bf16.mxu0 0
    %5740 = vmatpush1.bf16.msra.mxu0 0
    %5741 = vmatprep.subr.bf16.mxu0 0
    %5742 = vmatpush1.bf16.msra.mxu0 0
    %5743 = vmatprep.subr.bf16.mxu0 0
    %5744 = vmatpush1.bf16.msra.mxu0 0
    %5745 = vmatprep.mubr.bf16.mxu0 0
    %5746 = vmatmul.mubr.bf16.gmra.mrb[0].mxu0 %v5350
    %v5747 = vpop.f32.mrb[0].mxu0
    %v5748 = vadd.f32 0.0, %v5747
    %v5749 = vpop.f32.mrb[0].mxu0
    %v5750 = vadd.f32 0.0, %v5749
    %v5751 = vpop.f32.mrb[0].mxu0
    %v5752 = vpop.f32.mrb[0].mxu0
    %5753 = vdwg.mxu0
    %5754 = vmatprep.subr.bf16.mxu0 %v5549
    %5755 = vmatpush1.bf16.msra.mxu0 %v5548
    %5756 = vmatprep.subr.bf16.mxu0 %v5557
    %5757 = vmatpush1.bf16.msra.mxu0 %v5556
    %5758 = vmatprep.subr.bf16.mxu0 %v5565
    %5759 = vmatpush1.bf16.msra.mxu0 %v5564
    %5760 = vmatprep.subr.bf16.mxu0 %v5573
    %5761 = vmatpush1.bf16.msra.mxu0 %v5572
    %5762 = vmatprep.subr.bf16.mxu0 %v5581
    %5763 = vmatpush1.bf16.msra.mxu0 %v5580
    %5764 = vmatprep.subr.bf16.mxu0 %v5589
    %5765 = vmatpush1.bf16.msra.mxu0 %v5588
    %5766 = vmatprep.subr.bf16.mxu0 %v5597
    %5767 = vmatpush1.bf16.msra.mxu0 %v5596
    %5768 = vmatprep.subr.bf16.mxu0 %v5605
    %5769 = vmatpush1.bf16.msra.mxu0 %v5604
    %5770 = vmatprep.subr.bf16.mxu0 0
    %5771 = vmatpush1.bf16.msra.mxu0 0
    %5772 = vmatprep.subr.bf16.mxu0 0
    %5773 = vmatpush1.bf16.msra.mxu0 0
    %5774 = vmatprep.subr.bf16.mxu0 0
    %5775 = vmatpush1.bf16.msra.mxu0 0
    %5776 = vmatprep.subr.bf16.mxu0 0
    %5777 = vmatpush1.bf16.msra.mxu0 0
    %5778 = vmatprep.subr.bf16.mxu0 0
    %5779 = vmatpush1.bf16.msra.mxu0 0
    %5780 = vmatprep.subr.bf16.mxu0 0
    %5781 = vmatpush1.bf16.msra.mxu0 0
    %5782 = vmatprep.subr.bf16.mxu0 0
    %5783 = vmatpush1.bf16.msra.mxu0 0
    %5784 = vmatprep.subr.bf16.mxu0 0
    %5785 = vmatpush1.bf16.msra.mxu0 0
    %5786 = vmatprep.mubr.bf16.mxu0 0
    %5787 = vmatmul.mubr.bf16.gmra.mrb[0].mxu0 %v5350
    %v5788 = vpop.f32.mrb[0].mxu0
    %v5789 = vadd.f32 0.0, %v5788
    %v5790 = vpop.f32.mrb[0].mxu0
    %v5791 = vadd.f32 0.0, %v5790
    %v5792 = vpop.f32.mrb[0].mxu0
    %v5793 = vpop.f32.mrb[0].mxu0
    %5794 = vdwg.mxu0
    %5795 = vmatprep.subr.bf16.mxu0 %v5551
    %5796 = vmatpush1.bf16.msra.mxu0 %v5550
    %5797 = vmatprep.subr.bf16.mxu0 %v5559
    %5798 = vmatpush1.bf16.msra.mxu0 %v5558
    %5799 = vmatprep.subr.bf16.mxu0 %v5567
    %5800 = vmatpush1.bf16.msra.mxu0 %v5566
    %5801 = vmatprep.subr.bf16.mxu0 %v5575
    %5802 = vmatpush1.bf16.msra.mxu0 %v5574
    %5803 = vmatprep.subr.bf16.mxu0 %v5583
    %5804 = vmatpush1.bf16.msra.mxu0 %v5582
    %5805 = vmatprep.subr.bf16.mxu0 %v5591
    %5806 = vmatpush1.bf16.msra.mxu0 %v5590
    %5807 = vmatprep.subr.bf16.mxu0 %v5599
    %5808 = vmatpush1.bf16.msra.mxu0 %v5598
    %5809 = vmatprep.subr.bf16.mxu0 %v5607
    %5810 = vmatpush1.bf16.msra.mxu0 %v5606
    %5811 = vmatprep.subr.bf16.mxu0 0
    %5812 = vmatpush1.bf16.msra.mxu0 0
    %5813 = vmatprep.subr.bf16.mxu0 0
    %5814 = vmatpush1.bf16.msra.mxu0 0
    %5815 = vmatprep.subr.bf16.mxu0 0
    %5816 = vmatpush1.bf16.msra.mxu0 0
    %5817 = vmatprep.subr.bf16.mxu0 0
    %5818 = vmatpush1.bf16.msra.mxu0 0
    %5819 = vmatprep.subr.bf16.mxu0 0
    %5820 = vmatpush1.bf16.msra.mxu0 0
    %5821 = vmatprep.subr.bf16.mxu0 0
    %5822 = vmatpush1.bf16.msra.mxu0 0
    %5823 = vmatprep.subr.bf16.mxu0 0
    %5824 = vmatpush1.bf16.msra.mxu0 0
    %5825 = vmatprep.subr.bf16.mxu0 0
    %5826 = vmatpush1.bf16.msra.mxu0 0
    %5827 = vmatprep.mubr.bf16.mxu0 0
    %5828 = vmatmul.mubr.bf16.gmra.mrb[0].mxu0 %v5350
    %v5829 = vpop.f32.mrb[0].mxu0
    %v5830 = vadd.f32 0.0, %v5829
    %v5831 = vpop.f32.mrb[0].mxu0
    %v5832 = vadd.f32 0.0, %v5831
    %v5833 = vpop.f32.mrb[0].mxu0
    %v5834 = vpop.f32.mrb[0].mxu0
    %5835 = vdwg.mxu0
    %v5836 = vadd.f32 %v5263, %v5707
    %v5837 = vadd.f32 %v5264, %v5709
    %v5838 = vadd.f32 %v5265, %v5748
    %v5839 = vadd.f32 %v5266, %v5750
    %v5840 = vadd.f32 %v5267, %v5789
    %v5841 = vadd.f32 %v5268, %v5791
    %v5842 = vadd.f32 %v5269, %v5830
    %v5843 = vadd.f32 %v5270, %v5832
    %v5844 = vld [vmem:[#allocation10] sm:$0xff]
    %v5846 = vlaneseq
    %v5847 = vshrl.u32 %v5846, 7
    %v5848 = vsub.s32 0, %v5847
    %v5849 = vrot.slane %v5844, %v5848
    %v5850 = vlaneseq
    %v5851 = vshrl.u32 %v5850, 7
    %v5852 = vsub.s32 1, %v5851
    %v5853 = vrot.slane %v5844, %v5852
    %v5854 = vlaneseq
    %v5855 = vshrl.u32 %v5854, 7
    %v5856 = vsub.s32 2, %v5855
    %v5857 = vrot.slane %v5844, %v5856
    %v5858 = vlaneseq
    %v5859 = vshrl.u32 %v5858, 7
    %v5860 = vsub.s32 3, %v5859
    %v5861 = vrot.slane %v5844, %v5860
    %v5862 = vlaneseq
    %v5863 = vshrl.u32 %v5862, 7
    %v5864 = vsub.s32 4, %v5863
    %v5865 = vrot.slane %v5844, %v5864
    %v5866 = vlaneseq
    %v5867 = vshrl.u32 %v5866, 7
    %v5868 = vsub.s32 5, %v5867
    %v5869 = vrot.slane %v5844, %v5868
    %v5870 = vlaneseq
    %v5871 = vshrl.u32 %v5870, 7
    %v5872 = vsub.s32 6, %v5871
    %v5873 = vrot.slane %v5844, %v5872
    %v5874 = vlaneseq
    %v5875 = vshrl.u32 %v5874, 7
    %v5876 = vsub.s32 7, %v5875
    %v5877 = vrot.slane %v5844, %v5876
    %v5886 = vadd.f32 %v5836, %v5849
    %v5887 = vadd.f32 %v5837, %v5853
    %v5888 = vadd.f32 %v5838, %v5857
    %v5889 = vadd.f32 %v5839, %v5861
    %v5890 = vadd.f32 %v5840, %v5865
    %v5891 = vadd.f32 %v5841, %v5869
    %v5892 = vadd.f32 %v5842, %v5873
    %v5893 = vadd.f32 %v5843, %v5877
    %v5894 = vmax.f32 %v5886, 0.0
    %v5895 = vmax.f32 %v5887, 0.0
    %v5896 = vmax.f32 %v5888, 0.0
    %v5897 = vmax.f32 %v5889, 0.0
    %v5898 = vmax.f32 %v5890, 0.0
    %v5899 = vmax.f32 %v5891, 0.0
    %v5900 = vmax.f32 %v5892, 0.0
    %v5901 = vmax.f32 %v5893, 0.0
    %v5902 = vpack.c.bf16 %v5894, %v5894
    %v5903 = vpack.c.bf16 %v5895, %v5895
    %v5904 = vpack.c.bf16 %v5896, %v5896
    %v5905 = vpack.c.bf16 %v5897, %v5897
    %v5906 = vpack.c.bf16 %v5898, %v5898
    %v5907 = vpack.c.bf16 %v5899, %v5899
    %v5908 = vpack.c.bf16 %v5900, %v5900
    %v5909 = vpack.c.bf16 %v5901, %v5901
    %v5910 = vld [vmem:[#allocation12] sm:$0xf]
    %v5911 = vld [vmem:[#allocation12 + $0x4] sm:$0xf]
    %v5912 = vld [vmem:[#allocation12 + $0x8] sm:$0xf]
    %v5913 = vld [vmem:[#allocation12 + $0xc] sm:$0xf]
    %v5914 = vld [vmem:[#allocation12 + $0x10] sm:$0xf]
    %v5915 = vld [vmem:[#allocation12 + $0x14] sm:$0xf]
    %v5916 = vld [vmem:[#allocation12 + $0x18] sm:$0xf]
    %v5917 = vld [vmem:[#allocation12 + $0x1c] sm:$0xf]
    %v5918 = vld [vmem:[#allocation12 + $0x20] sm:$0xf]
    %v5919 = vld [vmem:[#allocation12 + $0x24] sm:$0xf]
    %v5920 = vld [vmem:[#allocation12 + $0x28] sm:$0xf]
    %v5921 = vld [vmem:[#allocation12 + $0x2c] sm:$0xf]
    %v5922 = vld [vmem:[#allocation12 + $0x30] sm:$0xf]
    %v5923 = vld [vmem:[#allocation12 + $0x34] sm:$0xf]
    %v5924 = vld [vmem:[#allocation12 + $0x38] sm:$0xf]
    %v5925 = vld [vmem:[#allocation12 + $0x3c] sm:$0xf]
    %v5926 = vld [vmem:[#allocation12 + $0x40] sm:$0xf]
    %v5927 = vld [vmem:[#allocation12 + $0x44] sm:$0xf]
    %v5928 = vld [vmem:[#allocation12 + $0x48] sm:$0xf]
    %v5929 = vld [vmem:[#allocation12 + $0x4c] sm:$0xf]
    %v5930 = vld [vmem:[#allocation12 + $0x50] sm:$0xf]
    %v5931 = vld [vmem:[#allocation12 + $0x54] sm:$0xf]
    %v5932 = vld [vmem:[#allocation12 + $0x58] sm:$0xf]
    %v5933 = vld [vmem:[#allocation12 + $0x5c] sm:$0xf]
    %v5934 = vld [vmem:[#allocation12 + $0x60] sm:$0xf]
    %v5935 = vld [vmem:[#allocation12 + $0x64] sm:$0xf]
    %v5936 = vld [vmem:[#allocation12 + $0x68] sm:$0xf]
    %v5937 = vld [vmem:[#allocation12 + $0x6c] sm:$0xf]
    %v5938 = vld [vmem:[#allocation12 + $0x70] sm:$0xf]
    %v5939 = vld [vmem:[#allocation12 + $0x74] sm:$0xf]
    %v5940 = vld [vmem:[#allocation12 + $0x78] sm:$0xf]
    %v5941 = vld [vmem:[#allocation12 + $0x7c] sm:$0xf]
    %v5942 = vld [vmem:[#allocation12 + $0x80] sm:$0xf]
    %v5943 = vld [vmem:[#allocation12 + $0x84] sm:$0xf]
    %v5944 = vld [vmem:[#allocation12 + $0x88] sm:$0xf]
    %v5945 = vld [vmem:[#allocation12 + $0x8c] sm:$0xf]
    %v5946 = vld [vmem:[#allocation12 + $0x90] sm:$0xf]
    %v5947 = vld [vmem:[#allocation12 + $0x94] sm:$0xf]
    %v5948 = vld [vmem:[#allocation12 + $0x98] sm:$0xf]
    %v5949 = vld [vmem:[#allocation12 + $0x9c] sm:$0xf]
    %v5950 = vld [vmem:[#allocation12 + $0xa0] sm:$0xf]
    %v5951 = vld [vmem:[#allocation12 + $0xa4] sm:$0xf]
    %v5952 = vld [vmem:[#allocation12 + $0xa8] sm:$0xf]
    %v5953 = vld [vmem:[#allocation12 + $0xac] sm:$0xf]
    %v5954 = vld [vmem:[#allocation12 + $0xb0] sm:$0xf]
    %v5955 = vld [vmem:[#allocation12 + $0xb4] sm:$0xf]
    %v5956 = vld [vmem:[#allocation12 + $0xb8] sm:$0xf]
    %v5957 = vld [vmem:[#allocation12 + $0xbc] sm:$0xf]
    %v5958 = vld [vmem:[#allocation12 + $0xc0] sm:$0xf]
    %v5959 = vld [vmem:[#allocation12 + $0xc4] sm:$0xf]
    %v5960 = vld [vmem:[#allocation12 + $0xc8] sm:$0xf]
    %v5961 = vld [vmem:[#allocation12 + $0xcc] sm:$0xf]
    %v5962 = vld [vmem:[#allocation12 + $0xd0] sm:$0xf]
    %v5963 = vld [vmem:[#allocation12 + $0xd4] sm:$0xf]
    %v5964 = vld [vmem:[#allocation12 + $0xd8] sm:$0xf]
    %v5965 = vld [vmem:[#allocation12 + $0xdc] sm:$0xf]
    %v5966 = vld [vmem:[#allocation12 + $0xe0] sm:$0xf]
    %v5967 = vld [vmem:[#allocation12 + $0xe4] sm:$0xf]
    %v5968 = vld [vmem:[#allocation12 + $0xe8] sm:$0xf]
    %v5969 = vld [vmem:[#allocation12 + $0xec] sm:$0xf]
    %v5970 = vld [vmem:[#allocation12 + $0xf0] sm:$0xf]
    %v5971 = vld [vmem:[#allocation12 + $0xf4] sm:$0xf]
    %v5972 = vld [vmem:[#allocation12 + $0xf8] sm:$0xf]
    %v5973 = vld [vmem:[#allocation12 + $0xfc] sm:$0xf]
    %v5974 = vld [vmem:[#allocation12 + $0x100] sm:$0xf]
    %v5975 = vld [vmem:[#allocation12 + $0x104] sm:$0xf]
    %v5976 = vld [vmem:[#allocation12 + $0x108] sm:$0xf]
    %v5977 = vld [vmem:[#allocation12 + $0x10c] sm:$0xf]
    %v5978 = vld [vmem:[#allocation12 + $0x110] sm:$0xf]
    %v5979 = vld [vmem:[#allocation12 + $0x114] sm:$0xf]
    %v5980 = vld [vmem:[#allocation12 + $0x118] sm:$0xf]
    %v5981 = vld [vmem:[#allocation12 + $0x11c] sm:$0xf]
    %v5982 = vld [vmem:[#allocation12 + $0x120] sm:$0xf]
    %v5983 = vld [vmem:[#allocation12 + $0x124] sm:$0xf]
    %v5984 = vld [vmem:[#allocation12 + $0x128] sm:$0xf]
    %v5985 = vld [vmem:[#allocation12 + $0x12c] sm:$0xf]
    %v5986 = vld [vmem:[#allocation12 + $0x130] sm:$0xf]
    %v5987 = vld [vmem:[#allocation12 + $0x134] sm:$0xf]
    %v5988 = vld [vmem:[#allocation12 + $0x138] sm:$0xf]
    %v5989 = vld [vmem:[#allocation12 + $0x13c] sm:$0xf]
    %v5990 = vld [vmem:[#allocation12 + $0x140] sm:$0xf]
    %v5991 = vld [vmem:[#allocation12 + $0x144] sm:$0xf]
    %v5992 = vld [vmem:[#allocation12 + $0x148] sm:$0xf]
    %v5993 = vld [vmem:[#allocation12 + $0x14c] sm:$0xf]
    %v5994 = vld [vmem:[#allocation12 + $0x150] sm:$0xf]
    %v5995 = vld [vmem:[#allocation12 + $0x154] sm:$0xf]
    %v5996 = vld [vmem:[#allocation12 + $0x158] sm:$0xf]
    %v5997 = vld [vmem:[#allocation12 + $0x15c] sm:$0xf]
    %v5998 = vld [vmem:[#allocation12 + $0x160] sm:$0xf]
    %v5999 = vld [vmem:[#allocation12 + $0x164] sm:$0xf]
    %v6000 = vld [vmem:[#allocation12 + $0x168] sm:$0xf]
    %v6001 = vld [vmem:[#allocation12 + $0x16c] sm:$0xf]
    %v6002 = vld [vmem:[#allocation12 + $0x170] sm:$0xf]
    %v6003 = vld [vmem:[#allocation12 + $0x174] sm:$0xf]
    %v6004 = vld [vmem:[#allocation12 + $0x178] sm:$0xf]
    %v6005 = vld [vmem:[#allocation12 + $0x17c] sm:$0xf]
    %v6006 = vld [vmem:[#allocation12 + $0x180] sm:$0xf]
    %v6007 = vld [vmem:[#allocation12 + $0x184] sm:$0xf]
    %v6008 = vld [vmem:[#allocation12 + $0x188] sm:$0xf]
    %v6009 = vld [vmem:[#allocation12 + $0x18c] sm:$0xf]
    %v6010 = vld [vmem:[#allocation12 + $0x190] sm:$0xf]
    %v6011 = vld [vmem:[#allocation12 + $0x194] sm:$0xf]
    %v6012 = vld [vmem:[#allocation12 + $0x198] sm:$0xf]
    %v6013 = vld [vmem:[#allocation12 + $0x19c] sm:$0xf]
    %v6014 = vld [vmem:[#allocation12 + $0x1a0] sm:$0xf]
    %v6015 = vld [vmem:[#allocation12 + $0x1a4] sm:$0xf]
    %v6016 = vld [vmem:[#allocation12 + $0x1a8] sm:$0xf]
    %v6017 = vld [vmem:[#allocation12 + $0x1ac] sm:$0xf]
    %v6018 = vld [vmem:[#allocation12 + $0x1b0] sm:$0xf]
    %v6019 = vld [vmem:[#allocation12 + $0x1b4] sm:$0xf]
    %v6020 = vld [vmem:[#allocation12 + $0x1b8] sm:$0xf]
    %v6021 = vld [vmem:[#allocation12 + $0x1bc] sm:$0xf]
    %v6022 = vld [vmem:[#allocation12 + $0x1c0] sm:$0xf]
    %v6023 = vld [vmem:[#allocation12 + $0x1c4] sm:$0xf]
    %v6024 = vld [vmem:[#allocation12 + $0x1c8] sm:$0xf]
    %v6025 = vld [vmem:[#allocation12 + $0x1cc] sm:$0xf]
    %v6026 = vld [vmem:[#allocation12 + $0x1d0] sm:$0xf]
    %v6027 = vld [vmem:[#allocation12 + $0x1d4] sm:$0xf]
    %v6028 = vld [vmem:[#allocation12 + $0x1d8] sm:$0xf]
    %v6029 = vld [vmem:[#allocation12 + $0x1dc] sm:$0xf]
    %v6030 = vld [vmem:[#allocation12 + $0x1e0] sm:$0xf]
    %v6031 = vld [vmem:[#allocation12 + $0x1e4] sm:$0xf]
    %v6032 = vld [vmem:[#allocation12 + $0x1e8] sm:$0xf]
    %v6033 = vld [vmem:[#allocation12 + $0x1ec] sm:$0xf]
    %v6034 = vld [vmem:[#allocation12 + $0x1f0] sm:$0xf]
    %v6035 = vld [vmem:[#allocation12 + $0x1f4] sm:$0xf]
    %v6036 = vld [vmem:[#allocation12 + $0x1f8] sm:$0xf]
    %v6037 = vld [vmem:[#allocation12 + $0x1fc] sm:$0xf]
    %v6038 = vld [vmem:[#allocation13] sm:$0x1]
    %v6040 = vlaneseq
    %v6041 = vshrl.u32 %v6040, 7
    %v6042 = vsub.s32 0, %v6041
    %v6043 = vrot.slane %v6038, %v6042
    %v6173 = vunpack.c.l.b16 %v5910
    %v6174 = vunpack.c.l.b16 %v5911
    %v6175 = vunpack.c.l.b16 %v5912
    %v6176 = vunpack.c.l.b16 %v5913
    %v6177 = vunpack.c.l.b16 %v5914
    %v6178 = vunpack.c.l.b16 %v5915
    %v6179 = vunpack.c.l.b16 %v5916
    %v6180 = vunpack.c.l.b16 %v5917
    %v6181 = vunpack.c.l.b16 %v5918
    %v6182 = vunpack.c.l.b16 %v5919
    %v6183 = vunpack.c.l.b16 %v5920
    %v6184 = vunpack.c.l.b16 %v5921
    %v6185 = vunpack.c.l.b16 %v5922
    %v6186 = vunpack.c.l.b16 %v5923
    %v6187 = vunpack.c.l.b16 %v5924
    %v6188 = vunpack.c.l.b16 %v5925
    %v6189 = vunpack.c.l.b16 %v5926
    %v6190 = vunpack.c.l.b16 %v5927
    %v6191 = vunpack.c.l.b16 %v5928
    %v6192 = vunpack.c.l.b16 %v5929
    %v6193 = vunpack.c.l.b16 %v5930
    %v6194 = vunpack.c.l.b16 %v5931
    %v6195 = vunpack.c.l.b16 %v5932
    %v6196 = vunpack.c.l.b16 %v5933
    %v6197 = vunpack.c.l.b16 %v5934
    %v6198 = vunpack.c.l.b16 %v5935
    %v6199 = vunpack.c.l.b16 %v5936
    %v6200 = vunpack.c.l.b16 %v5937
    %v6201 = vunpack.c.l.b16 %v5938
    %v6202 = vunpack.c.l.b16 %v5939
    %v6203 = vunpack.c.l.b16 %v5940
    %v6204 = vunpack.c.l.b16 %v5941
    %v6205 = vunpack.c.l.b16 %v5942
    %v6206 = vunpack.c.l.b16 %v5943
    %v6207 = vunpack.c.l.b16 %v5944
    %v6208 = vunpack.c.l.b16 %v5945
    %v6209 = vunpack.c.l.b16 %v5946
    %v6210 = vunpack.c.l.b16 %v5947
    %v6211 = vunpack.c.l.b16 %v5948
    %v6212 = vunpack.c.l.b16 %v5949
    %v6213 = vunpack.c.l.b16 %v5950
    %v6214 = vunpack.c.l.b16 %v5951
    %v6215 = vunpack.c.l.b16 %v5952
    %v6216 = vunpack.c.l.b16 %v5953
    %v6217 = vunpack.c.l.b16 %v5954
    %v6218 = vunpack.c.l.b16 %v5955
    %v6219 = vunpack.c.l.b16 %v5956
    %v6220 = vunpack.c.l.b16 %v5957
    %v6221 = vunpack.c.l.b16 %v5958
    %v6222 = vunpack.c.l.b16 %v5959
    %v6223 = vunpack.c.l.b16 %v5960
    %v6224 = vunpack.c.l.b16 %v5961
    %v6225 = vunpack.c.l.b16 %v5962
    %v6226 = vunpack.c.l.b16 %v5963
    %v6227 = vunpack.c.l.b16 %v5964
    %v6228 = vunpack.c.l.b16 %v5965
    %v6229 = vunpack.c.l.b16 %v5966
    %v6230 = vunpack.c.l.b16 %v5967
    %v6231 = vunpack.c.l.b16 %v5968
    %v6232 = vunpack.c.l.b16 %v5969
    %v6233 = vunpack.c.l.b16 %v5970
    %v6234 = vunpack.c.l.b16 %v5971
    %v6235 = vunpack.c.l.b16 %v5972
    %v6236 = vunpack.c.l.b16 %v5973
    %v6237 = vunpack.c.l.b16 %v5974
    %v6238 = vunpack.c.l.b16 %v5975
    %v6239 = vunpack.c.l.b16 %v5976
    %v6240 = vunpack.c.l.b16 %v5977
    %v6241 = vunpack.c.l.b16 %v5978
    %v6242 = vunpack.c.l.b16 %v5979
    %v6243 = vunpack.c.l.b16 %v5980
    %v6244 = vunpack.c.l.b16 %v5981
    %v6245 = vunpack.c.l.b16 %v5982
    %v6246 = vunpack.c.l.b16 %v5983
    %v6247 = vunpack.c.l.b16 %v5984
    %v6248 = vunpack.c.l.b16 %v5985
    %v6249 = vunpack.c.l.b16 %v5986
    %v6250 = vunpack.c.l.b16 %v5987
    %v6251 = vunpack.c.l.b16 %v5988
    %v6252 = vunpack.c.l.b16 %v5989
    %v6253 = vunpack.c.l.b16 %v5990
    %v6254 = vunpack.c.l.b16 %v5991
    %v6255 = vunpack.c.l.b16 %v5992
    %v6256 = vunpack.c.l.b16 %v5993
    %v6257 = vunpack.c.l.b16 %v5994
    %v6258 = vunpack.c.l.b16 %v5995
    %v6259 = vunpack.c.l.b16 %v5996
    %v6260 = vunpack.c.l.b16 %v5997
    %v6261 = vunpack.c.l.b16 %v5998
    %v6262 = vunpack.c.l.b16 %v5999
    %v6263 = vunpack.c.l.b16 %v6000
    %v6264 = vunpack.c.l.b16 %v6001
    %v6265 = vunpack.c.l.b16 %v6002
    %v6266 = vunpack.c.l.b16 %v6003
    %v6267 = vunpack.c.l.b16 %v6004
    %v6268 = vunpack.c.l.b16 %v6005
    %v6269 = vunpack.c.l.b16 %v6006
    %v6270 = vunpack.c.l.b16 %v6007
    %v6271 = vunpack.c.l.b16 %v6008
    %v6272 = vunpack.c.l.b16 %v6009
    %v6273 = vunpack.c.l.b16 %v6010
    %v6274 = vunpack.c.l.b16 %v6011
    %v6275 = vunpack.c.l.b16 %v6012
    %v6276 = vunpack.c.l.b16 %v6013
    %v6277 = vunpack.c.l.b16 %v6014
    %v6278 = vunpack.c.l.b16 %v6015
    %v6279 = vunpack.c.l.b16 %v6016
    %v6280 = vunpack.c.l.b16 %v6017
    %v6281 = vunpack.c.l.b16 %v6018
    %v6282 = vunpack.c.l.b16 %v6019
    %v6283 = vunpack.c.l.b16 %v6020
    %v6284 = vunpack.c.l.b16 %v6021
    %v6285 = vunpack.c.l.b16 %v6022
    %v6286 = vunpack.c.l.b16 %v6023
    %v6287 = vunpack.c.l.b16 %v6024
    %v6288 = vunpack.c.l.b16 %v6025
    %v6289 = vunpack.c.l.b16 %v6026
    %v6290 = vunpack.c.l.b16 %v6027
    %v6291 = vunpack.c.l.b16 %v6028
    %v6292 = vunpack.c.l.b16 %v6029
    %v6293 = vunpack.c.l.b16 %v6030
    %v6294 = vunpack.c.l.b16 %v6031
    %v6295 = vunpack.c.l.b16 %v6032
    %v6296 = vunpack.c.l.b16 %v6033
    %v6297 = vunpack.c.l.b16 %v6034
    %v6298 = vunpack.c.l.b16 %v6035
    %v6299 = vunpack.c.l.b16 %v6036
    %v6300 = vunpack.c.l.b16 %v6037
    %v6301 = vpack.c.b16 %v6174, %v6173
    %v6302 = vpack.c.b16 %v6176, %v6175
    %v6303 = vpack.c.b16 %v6178, %v6177
    %v6304 = vpack.c.b16 %v6180, %v6179
    %v6305 = vpack.c.b16 %v6182, %v6181
    %v6306 = vpack.c.b16 %v6184, %v6183
    %v6307 = vpack.c.b16 %v6186, %v6185
    %v6308 = vpack.c.b16 %v6188, %v6187
    %v6309 = vpack.c.b16 %v6190, %v6189
    %v6310 = vpack.c.b16 %v6192, %v6191
    %v6311 = vpack.c.b16 %v6194, %v6193
    %v6312 = vpack.c.b16 %v6196, %v6195
    %v6313 = vpack.c.b16 %v6198, %v6197
    %v6314 = vpack.c.b16 %v6200, %v6199
    %v6315 = vpack.c.b16 %v6202, %v6201
    %v6316 = vpack.c.b16 %v6204, %v6203
    %v6317 = vpack.c.b16 %v6206, %v6205
    %v6318 = vpack.c.b16 %v6208, %v6207
    %v6319 = vpack.c.b16 %v6210, %v6209
    %v6320 = vpack.c.b16 %v6212, %v6211
    %v6321 = vpack.c.b16 %v6214, %v6213
    %v6322 = vpack.c.b16 %v6216, %v6215
    %v6323 = vpack.c.b16 %v6218, %v6217
    %v6324 = vpack.c.b16 %v6220, %v6219
    %v6325 = vpack.c.b16 %v6222, %v6221
    %v6326 = vpack.c.b16 %v6224, %v6223
    %v6327 = vpack.c.b16 %v6226, %v6225
    %v6328 = vpack.c.b16 %v6228, %v6227
    %v6329 = vpack.c.b16 %v6230, %v6229
    %v6330 = vpack.c.b16 %v6232, %v6231
    %v6331 = vpack.c.b16 %v6234, %v6233
    %v6332 = vpack.c.b16 %v6236, %v6235
    %v6333 = vpack.c.b16 %v6238, %v6237
    %v6334 = vpack.c.b16 %v6240, %v6239
    %v6335 = vpack.c.b16 %v6242, %v6241
    %v6336 = vpack.c.b16 %v6244, %v6243
    %v6337 = vpack.c.b16 %v6246, %v6245
    %v6338 = vpack.c.b16 %v6248, %v6247
    %v6339 = vpack.c.b16 %v6250, %v6249
    %v6340 = vpack.c.b16 %v6252, %v6251
    %v6341 = vpack.c.b16 %v6254, %v6253
    %v6342 = vpack.c.b16 %v6256, %v6255
    %v6343 = vpack.c.b16 %v6258, %v6257
    %v6344 = vpack.c.b16 %v6260, %v6259
    %v6345 = vpack.c.b16 %v6262, %v6261
    %v6346 = vpack.c.b16 %v6264, %v6263
    %v6347 = vpack.c.b16 %v6266, %v6265
    %v6348 = vpack.c.b16 %v6268, %v6267
    %v6349 = vpack.c.b16 %v6270, %v6269
    %v6350 = vpack.c.b16 %v6272, %v6271
    %v6351 = vpack.c.b16 %v6274, %v6273
    %v6352 = vpack.c.b16 %v6276, %v6275
    %v6353 = vpack.c.b16 %v6278, %v6277
    %v6354 = vpack.c.b16 %v6280, %v6279
    %v6355 = vpack.c.b16 %v6282, %v6281
    %v6356 = vpack.c.b16 %v6284, %v6283
    %v6357 = vpack.c.b16 %v6286, %v6285
    %v6358 = vpack.c.b16 %v6288, %v6287
    %v6359 = vpack.c.b16 %v6290, %v6289
    %v6360 = vpack.c.b16 %v6292, %v6291
    %v6361 = vpack.c.b16 %v6294, %v6293
    %v6362 = vpack.c.b16 %v6296, %v6295
    %v6363 = vpack.c.b16 %v6298, %v6297
    %v6364 = vpack.c.b16 %v6300, %v6299
    %6429 = vmatprep.subr.bf16.mxu0 0
    %6430 = vmatpush1.bf16.msra.mxu0 %v6301
    %6431 = vmatprep.subr.bf16.mxu0 0
    %6432 = vmatpush1.bf16.msra.mxu0 %v6302
    %6433 = vmatprep.subr.bf16.mxu0 0
    %6434 = vmatpush1.bf16.msra.mxu0 %v6303
    %6435 = vmatprep.subr.bf16.mxu0 0
    %6436 = vmatpush1.bf16.msra.mxu0 %v6304
    %6437 = vmatprep.subr.bf16.mxu0 0
    %6438 = vmatpush1.bf16.msra.mxu0 %v6305
    %6439 = vmatprep.subr.bf16.mxu0 0
    %6440 = vmatpush1.bf16.msra.mxu0 %v6306
    %6441 = vmatprep.subr.bf16.mxu0 0
    %6442 = vmatpush1.bf16.msra.mxu0 %v6307
    %6443 = vmatprep.subr.bf16.mxu0 0
    %6444 = vmatpush1.bf16.msra.mxu0 %v6308
    %6445 = vmatprep.subr.bf16.mxu0 0
    %6446 = vmatpush1.bf16.msra.mxu0 %v6309
    %6447 = vmatprep.subr.bf16.mxu0 0
    %6448 = vmatpush1.bf16.msra.mxu0 %v6310
    %6449 = vmatprep.subr.bf16.mxu0 0
    %6450 = vmatpush1.bf16.msra.mxu0 %v6311
    %6451 = vmatprep.subr.bf16.mxu0 0
    %6452 = vmatpush1.bf16.msra.mxu0 %v6312
    %6453 = vmatprep.subr.bf16.mxu0 0
    %6454 = vmatpush1.bf16.msra.mxu0 %v6313
    %6455 = vmatprep.subr.bf16.mxu0 0
    %6456 = vmatpush1.bf16.msra.mxu0 %v6314
    %6457 = vmatprep.subr.bf16.mxu0 0
    %6458 = vmatpush1.bf16.msra.mxu0 %v6315
    %6459 = vmatprep.subr.bf16.mxu0 0
    %6460 = vmatpush1.bf16.msra.mxu0 %v6316
    %6461 = vmatprep.mubr.bf16.mxu0 %v5903
    %6462 = vmatmul.mubr.bf16.gmra.mrb[0].mxu0 %v5902
    %v6463 = vpop.f32.mrb[0].mxu0
    %v6464 = vadd.f32 %v6043, %v6463
    %v6465 = vpop.f32.mrb[0].mxu0
    %v6466 = vpop.f32.mrb[0].mxu0
    %v6467 = vpop.f32.mrb[0].mxu0
    %6468 = vdwg.mxu0
    %6469 = vmatprep.subr.bf16.mxu0 0
    %6470 = vmatpush1.bf16.msra.mxu0 %v6317
    %6471 = vmatprep.subr.bf16.mxu0 0
    %6472 = vmatpush1.bf16.msra.mxu0 %v6318
    %6473 = vmatprep.subr.bf16.mxu0 0
    %6474 = vmatpush1.bf16.msra.mxu0 %v6319
    %6475 = vmatprep.subr.bf16.mxu0 0
    %6476 = vmatpush1.bf16.msra.mxu0 %v6320
    %6477 = vmatprep.subr.bf16.mxu0 0
    %6478 = vmatpush1.bf16.msra.mxu0 %v6321
    %6479 = vmatprep.subr.bf16.mxu0 0
    %6480 = vmatpush1.bf16.msra.mxu0 %v6322
    %6481 = vmatprep.subr.bf16.mxu0 0
    %6482 = vmatpush1.bf16.msra.mxu0 %v6323
    %6483 = vmatprep.subr.bf16.mxu0 0
    %6484 = vmatpush1.bf16.msra.mxu0 %v6324
    %6485 = vmatprep.subr.bf16.mxu0 0
    %6486 = vmatpush1.bf16.msra.mxu0 %v6325
    %6487 = vmatprep.subr.bf16.mxu0 0
    %6488 = vmatpush1.bf16.msra.mxu0 %v6326
    %6489 = vmatprep.subr.bf16.mxu0 0
    %6490 = vmatpush1.bf16.msra.mxu0 %v6327
    %6491 = vmatprep.subr.bf16.mxu0 0
    %6492 = vmatpush1.bf16.msra.mxu0 %v6328
    %6493 = vmatprep.subr.bf16.mxu0 0
    %6494 = vmatpush1.bf16.msra.mxu0 %v6329
    %6495 = vmatprep.subr.bf16.mxu0 0
    %6496 = vmatpush1.bf16.msra.mxu0 %v6330
    %6497 = vmatprep.subr.bf16.mxu0 0
    %6498 = vmatpush1.bf16.msra.mxu0 %v6331
    %6499 = vmatprep.subr.bf16.mxu0 0
    %6500 = vmatpush1.bf16.msra.mxu0 %v6332
    %6501 = vmatprep.mubr.bf16.mxu0 %v5905
    %6502 = vmatmul.mubr.bf16.gmra.mrb[0].mxu0 %v5904
    %v6503 = vpop.f32.mrb[0].mxu0
    %v6504 = vadd.f32 %v6464, %v6503
    %v6505 = vpop.f32.mrb[0].mxu0
    %v6506 = vpop.f32.mrb[0].mxu0
    %v6507 = vpop.f32.mrb[0].mxu0
    %6508 = vdwg.mxu0
    %6509 = vmatprep.subr.bf16.mxu0 0
    %6510 = vmatpush1.bf16.msra.mxu0 %v6333
    %6511 = vmatprep.subr.bf16.mxu0 0
    %6512 = vmatpush1.bf16.msra.mxu0 %v6334
    %6513 = vmatprep.subr.bf16.mxu0 0
    %6514 = vmatpush1.bf16.msra.mxu0 %v6335
    %6515 = vmatprep.subr.bf16.mxu0 0
    %6516 = vmatpush1.bf16.msra.mxu0 %v6336
    %6517 = vmatprep.subr.bf16.mxu0 0
    %6518 = vmatpush1.bf16.msra.mxu0 %v6337
    %6519 = vmatprep.subr.bf16.mxu0 0
    %6520 = vmatpush1.bf16.msra.mxu0 %v6338
    %6521 = vmatprep.subr.bf16.mxu0 0
    %6522 = vmatpush1.bf16.msra.mxu0 %v6339
    %6523 = vmatprep.subr.bf16.mxu0 0
    %6524 = vmatpush1.bf16.msra.mxu0 %v6340
    %6525 = vmatprep.subr.bf16.mxu0 0
    %6526 = vmatpush1.bf16.msra.mxu0 %v6341
    %6527 = vmatprep.subr.bf16.mxu0 0
    %6528 = vmatpush1.bf16.msra.mxu0 %v6342
    %6529 = vmatprep.subr.bf16.mxu0 0
    %6530 = vmatpush1.bf16.msra.mxu0 %v6343
    %6531 = vmatprep.subr.bf16.mxu0 0
    %6532 = vmatpush1.bf16.msra.mxu0 %v6344
    %6533 = vmatprep.subr.bf16.mxu0 0
    %6534 = vmatpush1.bf16.msra.mxu0 %v6345
    %6535 = vmatprep.subr.bf16.mxu0 0
    %6536 = vmatpush1.bf16.msra.mxu0 %v6346
    %6537 = vmatprep.subr.bf16.mxu0 0
    %6538 = vmatpush1.bf16.msra.mxu0 %v6347
    %6539 = vmatprep.subr.bf16.mxu0 0
    %6540 = vmatpush1.bf16.msra.mxu0 %v6348
    %6541 = vmatprep.mubr.bf16.mxu0 %v5907
    %6542 = vmatmul.mubr.bf16.gmra.mrb[0].mxu0 %v5906
    %v6543 = vpop.f32.mrb[0].mxu0
    %v6544 = vadd.f32 %v6504, %v6543
    %v6545 = vpop.f32.mrb[0].mxu0
    %v6546 = vpop.f32.mrb[0].mxu0
    %v6547 = vpop.f32.mrb[0].mxu0
    %6548 = vdwg.mxu0
    %6549 = vmatprep.subr.bf16.mxu0 0
    %6550 = vmatpush1.bf16.msra.mxu0 %v6349
    %6551 = vmatprep.subr.bf16.mxu0 0
    %6552 = vmatpush1.bf16.msra.mxu0 %v6350
    %6553 = vmatprep.subr.bf16.mxu0 0
    %6554 = vmatpush1.bf16.msra.mxu0 %v6351
    %6555 = vmatprep.subr.bf16.mxu0 0
    %6556 = vmatpush1.bf16.msra.mxu0 %v6352
    %6557 = vmatprep.subr.bf16.mxu0 0
    %6558 = vmatpush1.bf16.msra.mxu0 %v6353
    %6559 = vmatprep.subr.bf16.mxu0 0
    %6560 = vmatpush1.bf16.msra.mxu0 %v6354
    %6561 = vmatprep.subr.bf16.mxu0 0
    %6562 = vmatpush1.bf16.msra.mxu0 %v6355
    %6563 = vmatprep.subr.bf16.mxu0 0
    %6564 = vmatpush1.bf16.msra.mxu0 %v6356
    %6565 = vmatprep.subr.bf16.mxu0 0
    %6566 = vmatpush1.bf16.msra.mxu0 %v6357
    %6567 = vmatprep.subr.bf16.mxu0 0
    %6568 = vmatpush1.bf16.msra.mxu0 %v6358
    %6569 = vmatprep.subr.bf16.mxu0 0
    %6570 = vmatpush1.bf16.msra.mxu0 %v6359
    %6571 = vmatprep.subr.bf16.mxu0 0
    %6572 = vmatpush1.bf16.msra.mxu0 %v6360
    %6573 = vmatprep.subr.bf16.mxu0 0
    %6574 = vmatpush1.bf16.msra.mxu0 %v6361
    %6575 = vmatprep.subr.bf16.mxu0 0
    %6576 = vmatpush1.bf16.msra.mxu0 %v6362
    %6577 = vmatprep.subr.bf16.mxu0 0
    %6578 = vmatpush1.bf16.msra.mxu0 %v6363
    %6579 = vmatprep.subr.bf16.mxu0 0
    %6580 = vmatpush1.bf16.msra.mxu0 %v6364
    %6581 = vmatprep.mubr.bf16.mxu0 %v5909
    %6582 = vmatmul.mubr.bf16.gmra.mrb[0].mxu0 %v5908
    %v6583 = vpop.f32.mrb[0].mxu0
    %v6584 = vadd.f32 %v6544, %v6583
    %v6585 = vpop.f32.mrb[0].mxu0
    %v6586 = vpop.f32.mrb[0].mxu0
    %v6587 = vpop.f32.mrb[0].mxu0
    %6588 = vdwg.mxu0
    %v6589 = vlaneseq
    %v6590 = vand.u32 %v6589, 127
    %vm6591 = vcmp.ge.s32.totalorder %v6590, 1
    %vm6592 = vcmp.le.s32.totalorder %v6590, 6
    %vm6593 = vmand %vm6591, %vm6592
    %v6594 = vsel %vm6593, %v6584, 0.0
    %6595 = vadd.xlane.f32.xlu0 %v6594
    %v6596 = vpop.xlane.xlu0 %6595
    %v6597 = vmul.f32 %v6596, 0.16666667
    %v6598 = vsub.f32 %v6584, %v6597
    %6600 = vset.pattern.permute.xlu0 0
    %6601 = vperm.xlu0 %6600, %v6598
    %v6602 = vpop.permute.xlu0 %6601
    %v6604 = vadd.f32 %v6584, %v6602
    %6605 = vst [vmem:[%s9] sm:$0xff] %v6604
    // Predicated region
    $region70: #{dqn_forward.1} parent=1 // pred_check
      _
    $region71: #{dqn_forward.1} parent=1 // pred_check_branch
      %6607 = sbr.rel (0) target = $region73
    $region72: #{dqn_forward.1} parent=1 // pred_region
      _
    $region73: #{dqn_forward.1} parent=1 // pred_fallthru
      _
    // Predicated region
    $region74: #{dqn_forward.1} parent=1 // pred_check
      _
    $region75: #{dqn_forward.1} parent=1 // pred_check_branch
      %6609 = sbr.rel (0) target = $region77
    $region76: #{dqn_forward.1} parent=1 // pred_region
      _
    $region77: #{dqn_forward.1} parent=1 // pred_fallthru
      _
    %6610 = vsyncpa [#allocation3], 1
    %6611 = vsyncpa [#allocation5], 1
    %6612 = vsyncpa [#allocation8], 1
    %6613 = vsyncpa [#allocation11], 1
    %6614 = vsyncpa [#allocation14], 1

</llo_original>
